<compile_context>
chip_gen: v7x
topology: tpu7x:2x2x1
jax: 0.10.0
libtpu: 0.0.40
codegen_flags: <defaults>
</compile_context>

<pallas_src>
import functools

import numpy as np

import jax
import jax.numpy as jnp
from jax.experimental import pallas as pl
from jax.experimental.pallas import tpu as pltpu

EPS = 1e-5  # PyTorch BatchNorm2d default eps


def _ceil_to(v, m):
    return -(-v // m) * m


# ----------------------------------------------------------------------------
# Host-side one-time weight packing / layout helpers (plain numpy, run once in
# pack_params, never on traced values).
# ----------------------------------------------------------------------------
def _conv_band_matrix(w_conv, Wp, Wo, XL):
    """Stacked band matrix for the single fused conv matmul.

    Row index = kh*XL + w*Cin + ci  (w = j + kw is the padded input column),
    column    = j*Cout + co, entry  = w_conv[kh, kw, ci, co].
    Rows [Wp*Cin, XL) of each kh block are zero (input lane padding)."""
    KH, KW, Cin, Cout = w_conv.shape
    w_np = np.asarray(w_conv, dtype=np.float32)
    B = np.zeros((KH, XL, Wo * Cout), np.float32)
    for kh in range(KH):
        for kw in range(KW):
            for j in range(Wo):
                B[kh, (j + kw) * Cin:(j + kw + 1) * Cin,
                  j * Cout:(j + 1) * Cout] = w_np[kh, kw]
    return B.reshape(KH * XL, Wo * Cout)


def _sg_band_matrix(w_sg, Wo, SGL):
    """Stacked band matrix for the SpatialGate 7x7 conv(2->1, pad=3).

    Attention-row lane layout (width SGL=128): avg plane (width Wo+6) at lanes
    [0, Wo+6) with valid columns at [3, 3+Wo); max plane at [Wo+6, 2*(Wo+6));
    zeros elsewhere.  Channel 0 of w_sg is the avg plane, channel 1 the max."""
    KH, KW, _ = w_sg.shape  # (7, 7, 2)
    Wp6 = Wo + 6
    w_np = np.asarray(w_sg, dtype=np.float32)
    S = np.zeros((KH, SGL, Wo), np.float32)
    for kh in range(KH):
        for kw in range(KW):
            for j in range(Wo):
                S[kh, j + kw, j] = w_np[kh, kw, 0]
                S[kh, Wp6 + j + kw, j] = w_np[kh, kw, 1]
    return S.reshape(KH * SGL, Wo)


def _layout_helpers(Wo, Cout, SGL):
    """0/1 helper matrices for channel folds / broadcasts / plane placement in
    the lane-dense layout where lane p = j*Cout + c."""
    L = Wo * Cout
    Wp6 = Wo + 6
    fold = np.zeros((L, Cout), np.float32)       # sum over j, keep c
    cbcast = np.zeros((Cout, L), np.float32)     # per-channel value -> lanes
    pbcast = np.zeros((Wo, L), np.float32)       # per-pixel value   -> lanes
    avg_place = np.zeros((L, SGL), np.float32)   # channel mean -> avg plane lane 3+j
    max_place = np.zeros((L, SGL), np.float32)   # group-end lane -> max plane lane Wp6+3+j
    for j in range(Wo):
        for c in range(Cout):
            p = j * Cout + c
            fold[p, c] = 1.0
            cbcast[c, p] = 1.0
            pbcast[j, p] = 1.0
            avg_place[p, 3 + j] = 1.0 / Cout
        max_place[j * Cout + Cout - 1, Wp6 + 3 + j] = 1.0
    return fold, cbcast, pbcast, avg_place, max_place


def pack_params(params, *, H, W, kernel_size, padding):
    """One-time packing of all weight-derived matrices (call outside jit)."""
    KH, KW, Cin, Cout = params["w_conv"].shape
    assert (KH, KW) == (kernel_size, kernel_size)
    Hp, Wp = H + 2 * padding, W + 2 * padding
    Wo = Wp - kernel_size + 1
    XL = _ceil_to(Wp * Cin, 128)
    SGL = _ceil_to(2 * (Wo + 6), 128)
    fold, cbcast, pbcast, avgp, maxp = _layout_helpers(Wo, Cout, SGL)
    # TODO(synk): at real resolutions store these exact-in-bf16 0/1 helpers (and the
    # sg band) in bf16 to halve their VMEM/DMA footprint (matters on v7x's 64 MiB).
    return {
        "wband": jnp.asarray(_conv_band_matrix(params["w_conv"], Wp, Wo, XL),
                             jnp.bfloat16),
        "sgband": jnp.asarray(_sg_band_matrix(params["w_sg"], Wo, SGL), jnp.float32),
        "fold": jnp.asarray(fold, jnp.float32),
        "cbcast": jnp.asarray(cbcast, jnp.float32),
        "pbcast": jnp.asarray(pbcast, jnp.float32),
        "avgp": jnp.asarray(avgp, jnp.float32),
        "maxp": jnp.asarray(maxp, jnp.float32),
    }


# ----------------------------------------------------------------------------
# Fused Pallas kernel.
# ----------------------------------------------------------------------------
def _conv_se_sattn_kernel(
    x_ref,        # (N, Hp, XL)              bf16  VMEM (Wp*Cin lane-padded to XL)
    wband_ref,    # (KH*XL, Wo*Cout)         bf16  VMEM
    bn1g_ref,     # (1, Cout)                f32   VMEM
    bn1b_ref,     # (1, Cout)                f32   VMEM
    wfc1_ref,     # (Cout, Cred)             f32   VMEM
    wfc2_ref,     # (Cred, Cout)             f32   VMEM
    sgband_ref,   # (7*SGL, Wo)              f32   VMEM
    fold_ref,     # (Wo*Cout, Cout)          f32   VMEM
    cbcast_ref,   # (Cout, Wo*Cout)          f32   VMEM
    pbcast_ref,   # (Wo, Wo*Cout)            f32   VMEM
    avgp_ref,     # (Wo*Cout, SGL)           f32   VMEM
    maxp_ref,     # (Wo*Cout, SGL)           f32   VMEM
    bn2g_ref,     # (1, 1)                   f32   SMEM
    bn2b_ref,     # (1, 1)                   f32   SMEM
    out_ref,      # (N*Ho, Wo*Cout)          f32   VMEM (lane-dense output)
    attp_ref,     # (N, Ho+6, SGL)           f32   VMEM scratch
    *, KH, Ho, Wo, Cout, SGL,
):
    N = x_ref.shape[0]
    XL = x_ref.shape[2]
    L = Wo * Cout
    R = N * Ho
    inv_cnt = 1.0 / float(N * Ho * Wo)

    # ---- Conv2d (stride=1): ONE fused banded MXU matmul ---------------------
    # K slab = concat of KH lane-aligned H-shifted slices (aligned vreg concat).
    # Conv bias omitted: exactly cancelled by the training-mode BN below.
    slab = jnp.concatenate(
        [x_ref[:, kh:kh + Ho, :].reshape(R, XL) for kh in range(KH)], axis=-1)
    acc = jnp.dot(slab, wband_ref[...], preferred_element_type=jnp.float32)  # (R, L)

    # ---- BatchNorm2d(Cout): batch stats folded into one affine pass ---------
    rsum = jnp.sum(acc, axis=0, keepdims=True)                      # (1, L)
    rsq = jnp.sum(acc * acc, axis=0, keepdims=True)                 # (1, L)
    ch_sum = jnp.dot(rsum, fold_ref[...], preferred_element_type=jnp.float32)
    ch_sq = jnp.dot(rsq, fold_ref[...], preferred_element_type=jnp.float32)
    mean = ch_sum * inv_cnt                                         # (1, Cout)
    var = jnp.maximum(ch_sq * inv_cnt - mean * mean, 0.0)           # clamp f32 cancel
    scale = bn1g_ref[...] * jax.lax.rsqrt(var + EPS)                # (1, Cout)
    shift = bn1b_ref[...] - mean * scale
    scale_l = jnp.dot(scale, cbcast_ref[...], preferred_element_type=jnp.float32)
    shift_l = jnp.dot(shift, cbcast_ref[...], preferred_element_type=jnp.float32)

    # ---- BN affine + ReLU in one lane-dense pass -----------------------------
    y = jnp.maximum(acc * scale_l + shift_l, 0.0)                   # (R, L)

    # ---- SE block -------------------------------------------------------------
    psum = jnp.sum(y.reshape(N, Ho, L), axis=1)                     # (N, L)
    pooled = jnp.dot(psum, fold_ref[...],
                     preferred_element_type=jnp.float32) * (1.0 / float(Ho * Wo))
    h = jnp.maximum(jnp.dot(pooled, wfc1_ref[...],
                            preferred_element_type=jnp.float32), 0.0)
    s = jax.nn.sigmoid(jnp.dot(h, wfc2_ref[...],
                               preferred_element_type=jnp.float32))  # (N, Cout)
    s_l = jnp.dot(s, cbcast_ref[...], preferred_element_type=jnp.float32)  # (N, L)
    y = (y.reshape(N, Ho, L) * s_l[:, None, :]).reshape(R, L)

    # ---- SpatialGate ----------------------------------------------------------
    # Channel-max via a roll+max tree.  pltpu.roll follows jnp.roll semantics
    # (positive shift moves data toward higher lanes), so after cumulative shifts
    # totalling Cout-1 the group-end lane j*Cout + Cout - 1 holds the max over
    # lanes [j*Cout, j*Cout + Cout) == pixel j's channel max (no wraparound for
    # those lanes since the window start is >= 0).
    ymax = y
    cover = 1
    while cover < Cout:
        step = min(cover, Cout - cover)
        ymax = jnp.maximum(ymax, pltpu.roll(ymax, shift=step, axis=1))
        cover += step

    # [avg | max] attention planes (lane width SGL, horizontal pad baked into the
    # placement matrices): channel mean and max-lane selection are two matmuls.
    att_rows = (jnp.dot(y, avgp_ref[...], preferred_element_type=jnp.float32)
                + jnp.dot(ymax, maxp_ref[...], preferred_element_type=jnp.float32))

    attp_ref[:, 0:3, :] = jnp.zeros((N, 3, SGL), jnp.float32)            # top H pad
    attp_ref[:, Ho + 3:Ho + 6, :] = jnp.zeros((N, 3, SGL), jnp.float32)  # bottom H pad
    attp_ref[:, 3:3 + Ho, :] = att_rows.reshape(N, Ho, SGL)              # full-lane store

    # 7x7 conv(2->1, pad=3) as ONE matmul over a lane-aligned 7*SGL slab.
    # Bias omitted (cancelled by the training-mode BN below).
    sg_slab = jnp.concatenate(
        [attp_ref[:, kh:kh + Ho, :].reshape(R, SGL) for kh in range(7)], axis=-1)
    sg = jnp.dot(sg_slab, sgband_ref[...], preferred_element_type=jnp.float32)  # (R, Wo)

    # BatchNorm2d(1): batch stats folded to a scalar affine; then sigmoid gate.
    m2 = jnp.sum(sg) * inv_cnt
    v2 = jnp.maximum(jnp.sum(sg * sg) * inv_cnt - m2 * m2, 0.0)
    sc2 = bn2g_ref[0, 0] * jax.lax.rsqrt(v2 + EPS)
    sh2 = bn2b_ref[0, 0] - m2 * sc2
    gate = jax.nn.sigmoid(sg * sc2 + sh2)                            # (R, Wo)

    gate_l = jnp.dot(gate, pbcast_ref[...],
                     preferred_element_type=jnp.float32)             # (R, L)
    out_ref[...] = y * gate_l                                        # lane-dense store


# ----------------------------------------------------------------------------
# Parameters & wrapper.
# ----------------------------------------------------------------------------
def init_params(key, in_channels, out_channels, kernel_size, reduction=16):
    """Synthetic params (Linear weights stored pre-transposed as (in, out);
    conv weights as (KH, KW, Cin, Cout)).  b_conv / b_sg are kept for interface
    parity; they are mathematically cancelled by the training-mode BatchNorms."""
    cred = max(out_channels // reduction, 1)
    ks = jax.random.split(key, 8)
    return {
        "w_conv": 0.1 * jax.random.normal(
            ks[0], (kernel_size, kernel_size, in_channels, out_channels), jnp.float32),
        "b_conv": 0.1 * jax.random.normal(ks[1], (1, out_channels), jnp.float32),
        "bn1_g": 1.0 + 0.1 * jax.random.normal(ks[2], (1, out_channels), jnp.float32),
        "bn1_b": 0.1 * jax.random.normal(ks[3], (1, out_channels), jnp.float32),
        "w_fc1": 0.2 * jax.random.normal(ks[4], (out_channels, cred), jnp.float32),
        "w_fc2": 0.2 * jax.random.normal(ks[5], (cred, out_channels), jnp.float32),
        "w_sg": 0.1 * jax.random.normal(ks[6], (7, 7, 2), jnp.float32),
        "b_sg": jnp.full((1, 1), 0.05, jnp.float32),
        "bn2_g": jnp.full((1, 1), 1.0, jnp.float32),
        "bn2_b": jnp.full((1, 1), 0.0, jnp.float32),
    }


def conv_block_with_se_atten(x_nchw, params, packed, *, kernel_size, padding, stride):
    # TODO(synk): stride > 1 and a tiled (row-tile x width-tile) grid with two-pass
    # BN stats + halo-aware index_maps are not implemented — required for real
    # SinGAN resolutions (O(W^2) band matrix + grid-less single shot would blow
    # VMEM on v7x and gives no DMA/compute overlap); at the demo size one fused
    # invocation is both lowest-overhead and VMEM-safe.
    assert stride == 1, "fused kernel implements stride=1 only"
    x = jnp.transpose(x_nchw, (0, 2, 3, 1)).astype(jnp.float32)  # NCHW -> NHWC
    N, H, W, Cin = x.shape
    KH, KW, _, Cout = params["w_conv"].shape
    assert (KH, KW) == (kernel_size, kernel_size)
    Hp, Wp = H + 2 * padding, W + 2 * padding
    Ho = Hp - kernel_size + 1
    Wo = Wp - kernel_size + 1
    L = Wo * Cout
    XL = _ceil_to(Wp * Cin, 128)
    SGL = _ceil_to(2 * (Wo + 6), 128)
    assert packed["wband"].shape == (KH * XL, L)

    # Padded input, channels flattened onto lanes, lane-padded to XL, bf16 for
    # the MXU.  TODO(synk): fold this pad/cast into the kernel (halo-aware
    # index_map) once the tiled grid exists, to avoid the extra HBM pass.
    x_pad = jnp.pad(x, ((0, 0), (padding, padding), (padding, padding), (0, 0)))
    x_pad = x_pad.reshape(N, Hp, Wp * Cin)
    x_pad = jnp.pad(x_pad, ((0, 0), (0, 0), (0, XL - Wp * Cin))).astype(jnp.bfloat16)

    kernel = functools.partial(_conv_se_sattn_kernel,
                               KH=kernel_size, Ho=Ho, Wo=Wo, Cout=Cout, SGL=SGL)

    vmem = pl.BlockSpec(memory_space=pltpu.MemorySpace.VMEM)
    smem = pl.BlockSpec(memory_space=pltpu.MemorySpace.SMEM)

    out2d = pl.pallas_call(
        kernel,
        out_shape=jax.ShapeDtypeStruct((N * Ho, L), jnp.float32),
        in_specs=[vmem] * 12 + [smem] * 2,
        out_specs=vmem,
        scratch_shapes=[pltpu.VMEM((N, Ho + 6, SGL), jnp.float32)],
        compiler_params=pltpu.CompilerParams(vmem_limit_bytes=32 * 1024 * 1024),
    )(
        x_pad, packed["wband"],
        params["bn1_g"], params["bn1_b"],
        params["w_fc1"], params["w_fc2"],
        packed["sgband"], packed["fold"], packed["cbcast"], packed["pbcast"],
        packed["avgp"], packed["maxp"],
        params["bn2_g"], params["bn2_b"],
    )
    out = out2d.reshape(N, Ho, Wo, Cout)
    return jnp.transpose(out, (0, 3, 1, 2))  # NHWC -> NCHW


# ----------------------------------------------------------------------------
# Pure-JAX reference (full PyTorch semantics, incl. the cancelled biases).
# ----------------------------------------------------------------------------
def _reference_forward(x_nchw, params, *, kernel_size, padding, stride):
    x = jnp.transpose(x_nchw, (0, 2, 3, 1)).astype(jnp.float32)
    y = jax.lax.conv_general_dilated(
        x, params["w_conv"], (stride, stride),
        [(padding, padding), (padding, padding)],
        dimension_numbers=("NHWC", "HWIO", "NHWC"))
    y = y + params["b_conv"].reshape(1, 1, 1, -1)
    mean = jnp.mean(y, axis=(0, 1, 2), keepdims=True)
    var = jnp.mean((y - mean) ** 2, axis=(0, 1, 2), keepdims=True)
    y = (y - mean) * jax.lax.rsqrt(var + EPS)
    y = y * params["bn1_g"].reshape(1, 1, 1, -1) + params["bn1_b"].reshape(1, 1, 1, -1)
    y = jnp.maximum(y, 0.0)
    pooled = jnp.mean(y, axis=(1, 2))
    h = jnp.maximum(pooled @ params["w_fc1"], 0.0)
    s = jax.nn.sigmoid(h @ params["w_fc2"])
    y = y * s[:, None, None, :]
    att = jnp.concatenate([jnp.mean(y, axis=-1, keepdims=True),
                           jnp.max(y, axis=-1, keepdims=True)], axis=-1)
    a = jax.lax.conv_general_dilated(
        att, params["w_sg"][:, :, :, None], (1, 1), [(3, 3), (3, 3)],
        dimension_numbers=("NHWC", "HWIO", "NHWC"))
    a = a + params["b_sg"][0, 0]
    m2 = jnp.mean(a)
    v2 = jnp.mean((a - m2) ** 2)
    a = (a - m2) * jax.lax.rsqrt(v2 + EPS) * params["bn2_g"][0, 0] + params["bn2_b"][0, 0]
    a = jax.nn.sigmoid(a)
    return jnp.transpose(y * a, (0, 3, 1, 2))


if __name__ == "__main__":
    in_channels, out_channels = 4, 32
    kernel_size, padding, stride, reduction = 3, 1, 1, 16

    key = jax.random.PRNGKey(0)
    kx, kp = jax.random.split(key)
    x = jax.random.normal(kx, (2, in_channels, 16, 16), jnp.float32)  # NCHW
    params = init_params(kp, in_channels, out_channels, kernel_size, reduction)

    # One-time host-side packing (numpy over concrete weights; outside jit).
    packed = pack_params(params, H=16, W=16, kernel_size=kernel_size, padding=padding)

    # The forward wrapper is purely jnp + pallas_call, hence jittable.
    fwd = jax.jit(functools.partial(conv_block_with_se_atten,
                                    kernel_size=kernel_size, padding=padding,
                                    stride=stride))
    out = jax.block_until_ready(fwd(x, params, packed))
    assert out.shape == (2, out_channels, 16, 16), out.shape
    assert bool(jnp.all(jnp.isfinite(out)))

    ref = _reference_forward(x, params, kernel_size=kernel_size,
                             padding=padding, stride=stride)
    err = float(jnp.max(jnp.abs(out - ref)))
    assert err < 5e-2, f"max abs error vs reference: {err}"

    print("KERNEL_OK")
</pallas_src>

<mosaic_0001>
module attributes {stable_mosaic.version = 11 : i64} {
  func.func @_conv_se_sattn_kernel(%arg0: memref<2x18x128xbf16, #tpu.memory_space<vmem>>, %arg1: memref<384x512xbf16, #tpu.memory_space<vmem>>, %arg2: memref<1x32xf32, #tpu.memory_space<vmem>>, %arg3: memref<1x32xf32, #tpu.memory_space<vmem>>, %arg4: memref<32x2xf32, #tpu.memory_space<vmem>>, %arg5: memref<2x32xf32, #tpu.memory_space<vmem>>, %arg6: memref<896x16xf32, #tpu.memory_space<vmem>>, %arg7: memref<512x32xf32, #tpu.memory_space<vmem>>, %arg8: memref<32x512xf32, #tpu.memory_space<vmem>>, %arg9: memref<16x512xf32, #tpu.memory_space<vmem>>, %arg10: memref<512x128xf32, #tpu.memory_space<vmem>>, %arg11: memref<512x128xf32, #tpu.memory_space<vmem>>, %arg12: memref<1x1xf32, #tpu.memory_space<smem>>, %arg13: memref<1x1xf32, #tpu.memory_space<smem>>, %arg14: memref<32x512xf32, #tpu.memory_space<vmem>>, %arg15: memref<2x22x128xf32, #tpu.memory_space<vmem>>) attributes {dimension_semantics = [], scalar_prefetch = 0 : i64, scratch_operands = 1 : i64, tpu.core_type = #tpu.core_type<tc>} {
    %c0 = arith.constant 0 : index
    %c0_0 = arith.constant 0 : index
    %c0_1 = arith.constant 0 : index
    %0 = vector.load %arg0[%c0, %c0_0, %c0_1] : memref<2x18x128xbf16, #tpu.memory_space<vmem>>, vector<2x16x128xbf16>
    %1 = vector.shape_cast %0 : vector<2x16x128xbf16> to vector<32x128xbf16>
    %c0_2 = arith.constant 0 : index
    %c1 = arith.constant 1 : index
    %c0_3 = arith.constant 0 : index
    %2 = vector.load %arg0[%c0_2, %c1, %c0_3] : memref<2x18x128xbf16, #tpu.memory_space<vmem>>, vector<2x16x128xbf16>
    %3 = vector.shape_cast %2 : vector<2x16x128xbf16> to vector<32x128xbf16>
    %c0_4 = arith.constant 0 : index
    %c2 = arith.constant 2 : index
    %c0_5 = arith.constant 0 : index
    %4 = vector.load %arg0[%c0_4, %c2, %c0_5] : memref<2x18x128xbf16, #tpu.memory_space<vmem>>, vector<2x16x128xbf16>
    %5 = vector.shape_cast %4 : vector<2x16x128xbf16> to vector<32x128xbf16>
    %6 = tpu.concatenate %1, %3, %5 in 1 : vector<32x128xbf16>, vector<32x128xbf16>, vector<32x128xbf16> -> vector<32x384xbf16>
    %c0_6 = arith.constant 0 : index
    %c0_7 = arith.constant 0 : index
    %7 = vector.load %arg1[%c0_6, %c0_7] : memref<384x512xbf16, #tpu.memory_space<vmem>>, vector<384x512xbf16>
    %cst = arith.constant dense<0.000000e+00> : vector<32x512xf32>
    %8 = tpu.matmul %6, %7, %cst {dimension_numbers = #tpu.dot_dimension_numbers<[1], [0], [0], [1], [0, 0, 1, 1], [], []>} : vector<32x384xbf16>, vector<384x512xbf16>, vector<32x512xf32> -> vector<32x512xf32>
    %cst_8 = arith.constant dense<0.000000e+00> : vector<512xf32>
    %9 = vector.multi_reduction <add>, %8, %cst_8 [0] : vector<32x512xf32> to vector<512xf32>
    %10 = vector.shape_cast %9 : vector<512xf32> to vector<1x512xf32>
    %11 = arith.mulf %8, %8 : vector<32x512xf32>
    %cst_9 = arith.constant dense<0.000000e+00> : vector<512xf32>
    %12 = vector.multi_reduction <add>, %11, %cst_9 [0] : vector<32x512xf32> to vector<512xf32>
    %13 = vector.shape_cast %12 : vector<512xf32> to vector<1x512xf32>
    %c0_10 = arith.constant 0 : index
    %c0_11 = arith.constant 0 : index
    %14 = vector.load %arg7[%c0_10, %c0_11] : memref<512x32xf32, #tpu.memory_space<vmem>>, vector<512x32xf32>
    %cst_12 = arith.constant dense<0.000000e+00> : vector<1x32xf32>
    %15 = tpu.matmul %10, %14, %cst_12 {dimension_numbers = #tpu.dot_dimension_numbers<[1], [0], [0], [1], [0, 0, 1, 1], [], []>} : vector<1x512xf32>, vector<512x32xf32>, vector<1x32xf32> -> vector<1x32xf32>
    %c0_13 = arith.constant 0 : index
    %c0_14 = arith.constant 0 : index
    %16 = vector.load %arg7[%c0_13, %c0_14] : memref<512x32xf32, #tpu.memory_space<vmem>>, vector<512x32xf32>
    %cst_15 = arith.constant dense<0.000000e+00> : vector<1x32xf32>
    %17 = tpu.matmul %13, %16, %cst_15 {dimension_numbers = #tpu.dot_dimension_numbers<[1], [0], [0], [1], [0, 0, 1, 1], [], []>} : vector<1x512xf32>, vector<512x32xf32>, vector<1x32xf32> -> vector<1x32xf32>
    %cst_16 = arith.constant 0.001953125 : f32
    %18 = vector.broadcast %cst_16 : f32 to vector<1x32xf32>
    %19 = arith.mulf %15, %18 : vector<1x32xf32>
    %cst_17 = arith.constant 0.001953125 : f32
    %20 = vector.broadcast %cst_17 : f32 to vector<1x32xf32>
    %21 = arith.mulf %17, %20 : vector<1x32xf32>
    %22 = arith.mulf %19, %19 : vector<1x32xf32>
    %23 = arith.subf %21, %22 : vector<1x32xf32>
    %cst_18 = arith.constant 0.000000e+00 : f32
    %24 = vector.broadcast %cst_18 : f32 to vector<1x32xf32>
    %25 = arith.maximumf %23, %24 : vector<1x32xf32>
    %c0_19 = arith.constant 0 : index
    %c0_20 = arith.constant 0 : index
    %26 = vector.load %arg2[%c0_19, %c0_20] : memref<1x32xf32, #tpu.memory_space<vmem>>, vector<1x32xf32>
    %cst_21 = arith.constant 9.99999974E-6 : f32
    %27 = vector.broadcast %cst_21 : f32 to vector<1x32xf32>
    %28 = arith.addf %25, %27 : vector<1x32xf32>
    %29 = math.rsqrt %28 : vector<1x32xf32>
    %30 = arith.mulf %26, %29 : vector<1x32xf32>
    %c0_22 = arith.constant 0 : index
    %c0_23 = arith.constant 0 : index
    %31 = vector.load %arg3[%c0_22, %c0_23] : memref<1x32xf32, #tpu.memory_space<vmem>>, vector<1x32xf32>
    %32 = arith.mulf %19, %30 : vector<1x32xf32>
    %33 = arith.subf %31, %32 : vector<1x32xf32>
    %c0_24 = arith.constant 0 : index
    %c0_25 = arith.constant 0 : index
    %34 = vector.load %arg8[%c0_24, %c0_25] : memref<32x512xf32, #tpu.memory_space<vmem>>, vector<32x512xf32>
    %cst_26 = arith.constant dense<0.000000e+00> : vector<1x512xf32>
    %35 = tpu.matmul %30, %34, %cst_26 {dimension_numbers = #tpu.dot_dimension_numbers<[1], [0], [0], [1], [0, 0, 1, 1], [], []>} : vector<1x32xf32>, vector<32x512xf32>, vector<1x512xf32> -> vector<1x512xf32>
    %c0_27 = arith.constant 0 : index
    %c0_28 = arith.constant 0 : index
    %36 = vector.load %arg8[%c0_27, %c0_28] : memref<32x512xf32, #tpu.memory_space<vmem>>, vector<32x512xf32>
    %cst_29 = arith.constant dense<0.000000e+00> : vector<1x512xf32>
    %37 = tpu.matmul %33, %36, %cst_29 {dimension_numbers = #tpu.dot_dimension_numbers<[1], [0], [0], [1], [0, 0, 1, 1], [], []>} : vector<1x32xf32>, vector<32x512xf32>, vector<1x512xf32> -> vector<1x512xf32>
    %38 = vector.broadcast %35 : vector<1x512xf32> to vector<32x512xf32>
    %39 = arith.mulf %8, %38 : vector<32x512xf32>
    %40 = vector.broadcast %37 : vector<1x512xf32> to vector<32x512xf32>
    %41 = arith.addf %39, %40 : vector<32x512xf32>
    %cst_30 = arith.constant 0.000000e+00 : f32
    %42 = vector.broadcast %cst_30 : f32 to vector<32x512xf32>
    %43 = arith.maximumf %41, %42 : vector<32x512xf32>
    %44 = vector.shape_cast %43 : vector<32x512xf32> to vector<2x16x512xf32>
    %cst_31 = arith.constant dense<0.000000e+00> : vector<2x512xf32>
    %45 = vector.multi_reduction <add>, %44, %cst_31 [1] : vector<2x16x512xf32> to vector<2x512xf32>
    %c0_32 = arith.constant 0 : index
    %c0_33 = arith.constant 0 : index
    %46 = vector.load %arg7[%c0_32, %c0_33] : memref<512x32xf32, #tpu.memory_space<vmem>>, vector<512x32xf32>
    %cst_34 = arith.constant dense<0.000000e+00> : vector<2x32xf32>
    %47 = tpu.matmul %45, %46, %cst_34 {dimension_numbers = #tpu.dot_dimension_numbers<[1], [0], [0], [1], [0, 0, 1, 1], [], []>} : vector<2x512xf32>, vector<512x32xf32>, vector<2x32xf32> -> vector<2x32xf32>
    %cst_35 = arith.constant 3.906250e-03 : f32
    %48 = vector.broadcast %cst_35 : f32 to vector<2x32xf32>
    %49 = arith.mulf %47, %48 : vector<2x32xf32>
    %c0_36 = arith.constant 0 : index
    %c0_37 = arith.constant 0 : index
    %50 = vector.load %arg4[%c0_36, %c0_37] : memref<32x2xf32, #tpu.memory_space<vmem>>, vector<32x2xf32>
    %cst_38 = arith.constant dense<0.000000e+00> : vector<2x2xf32>
    %51 = tpu.matmul %49, %50, %cst_38 {dimension_numbers = #tpu.dot_dimension_numbers<[1], [0], [0], [1], [0, 0, 1, 1], [], []>} : vector<2x32xf32>, vector<32x2xf32>, vector<2x2xf32> -> vector<2x2xf32>
    %cst_39 = arith.constant 0.000000e+00 : f32
    %52 = vector.broadcast %cst_39 : f32 to vector<2x2xf32>
    %53 = arith.maximumf %51, %52 : vector<2x2xf32>
    %c0_40 = arith.constant 0 : index
    %c0_41 = arith.constant 0 : index
    %54 = vector.load %arg5[%c0_40, %c0_41] : memref<2x32xf32, #tpu.memory_space<vmem>>, vector<2x32xf32>
    %cst_42 = arith.constant dense<0.000000e+00> : vector<2x32xf32>
    %55 = tpu.matmul %53, %54, %cst_42 {dimension_numbers = #tpu.dot_dimension_numbers<[1], [0], [0], [1], [0, 0, 1, 1], [], []>} : vector<2x2xf32>, vector<2x32xf32>, vector<2x32xf32> -> vector<2x32xf32>
    %56 = arith.negf %55 : vector<2x32xf32>
    %57 = math.exp %56 : vector<2x32xf32>
    %cst_43 = arith.constant 1.000000e+00 : f32
    %58 = vector.broadcast %cst_43 : f32 to vector<2x32xf32>
    %59 = arith.addf %58, %57 : vector<2x32xf32>
    %60 = arith.divf %58, %59 : vector<2x32xf32>
    %c0_44 = arith.constant 0 : index
    %c0_45 = arith.constant 0 : index
    %61 = vector.load %arg8[%c0_44, %c0_45] : memref<32x512xf32, #tpu.memory_space<vmem>>, vector<32x512xf32>
    %cst_46 = arith.constant dense<0.000000e+00> : vector<2x512xf32>
    %62 = tpu.matmul %60, %61, %cst_46 {dimension_numbers = #tpu.dot_dimension_numbers<[1], [0], [0], [1], [0, 0, 1, 1], [], []>} : vector<2x32xf32>, vector<32x512xf32>, vector<2x512xf32> -> vector<2x512xf32>
    %63 = vector.shape_cast %43 : vector<32x512xf32> to vector<2x16x512xf32>
    %64 = vector.shape_cast %62 : vector<2x512xf32> to vector<2x1x512xf32>
    %65 = vector.broadcast %64 : vector<2x1x512xf32> to vector<2x16x512xf32>
    %66 = arith.mulf %63, %65 : vector<2x16x512xf32>
    %67 = vector.shape_cast %66 : vector<2x16x512xf32> to vector<32x512xf32>
    %c1_i32 = arith.constant 1 : i32
    %68 = tpu.dynamic_rotate %67 by %c1_i32 dim 1 : vector<32x512xf32>, i32 -> vector<32x512xf32>
    %69 = arith.maximumf %67, %68 : vector<32x512xf32>
    %c2_i32 = arith.constant 2 : i32
    %70 = tpu.dynamic_rotate %69 by %c2_i32 dim 1 : vector<32x512xf32>, i32 -> vector<32x512xf32>
    %71 = arith.maximumf %69, %70 : vector<32x512xf32>
    %c4_i32 = arith.constant 4 : i32
    %72 = tpu.dynamic_rotate %71 by %c4_i32 dim 1 : vector<32x512xf32>, i32 -> vector<32x512xf32>
    %73 = arith.maximumf %71, %72 : vector<32x512xf32>
    %c8_i32 = arith.constant 8 : i32
    %74 = tpu.dynamic_rotate %73 by %c8_i32 dim 1 : vector<32x512xf32>, i32 -> vector<32x512xf32>
    %75 = arith.maximumf %73, %74 : vector<32x512xf32>
    %c16_i32 = arith.constant 16 : i32
    %76 = tpu.dynamic_rotate %75 by %c16_i32 dim 1 : vector<32x512xf32>, i32 -> vector<32x512xf32>
    %77 = arith.maximumf %75, %76 : vector<32x512xf32>
    %c0_47 = arith.constant 0 : index
    %c0_48 = arith.constant 0 : index
    %78 = vector.load %arg10[%c0_47, %c0_48] : memref<512x128xf32, #tpu.memory_space<vmem>>, vector<512x128xf32>
    %cst_49 = arith.constant dense<0.000000e+00> : vector<32x128xf32>
    %79 = tpu.matmul %67, %78, %cst_49 {dimension_numbers = #tpu.dot_dimension_numbers<[1], [0], [0], [1], [0, 0, 1, 1], [], []>} : vector<32x512xf32>, vector<512x128xf32>, vector<32x128xf32> -> vector<32x128xf32>
    %c0_50 = arith.constant 0 : index
    %c0_51 = arith.constant 0 : index
    %80 = vector.load %arg11[%c0_50, %c0_51] : memref<512x128xf32, #tpu.memory_space<vmem>>, vector<512x128xf32>
    %cst_52 = arith.constant dense<0.000000e+00> : vector<32x128xf32>
    %81 = tpu.matmul %77, %80, %cst_52 {dimension_numbers = #tpu.dot_dimension_numbers<[1], [0], [0], [1], [0, 0, 1, 1], [], []>} : vector<32x512xf32>, vector<512x128xf32>, vector<32x128xf32> -> vector<32x128xf32>
    %82 = arith.addf %79, %81 : vector<32x128xf32>
    %cst_53 = arith.constant 0.000000e+00 : f32
    %83 = vector.broadcast %cst_53 : f32 to vector<2x3x128xf32>
    %c0_54 = arith.constant 0 : index
    %c0_55 = arith.constant 0 : index
    %c0_56 = arith.constant 0 : index
    %84 = vector.load %arg15[%c0_54, %c0_55, %c0_56] : memref<2x22x128xf32, #tpu.memory_space<vmem>>, vector<2x3x128xf32>
    tpu.vector_store %arg15[%c0_54, %c0_55, %c0_56], %83 {strides = array<i32>} : memref<2x22x128xf32, #tpu.memory_space<vmem>>, vector<2x3x128xf32>,
    %cst_57 = arith.constant 0.000000e+00 : f32
    %85 = vector.broadcast %cst_57 : f32 to vector<2x3x128xf32>
    %c0_58 = arith.constant 0 : index
    %c19 = arith.constant 19 : index
    %c0_59 = arith.constant 0 : index
    %86 = vector.load %arg15[%c0_58, %c19, %c0_59] : memref<2x22x128xf32, #tpu.memory_space<vmem>>, vector<2x3x128xf32>
    tpu.vector_store %arg15[%c0_58, %c19, %c0_59], %85 {strides = array<i32>} : memref<2x22x128xf32, #tpu.memory_space<vmem>>, vector<2x3x128xf32>,
    %87 = vector.shape_cast %82 : vector<32x128xf32> to vector<2x16x128xf32>
    %c0_60 = arith.constant 0 : index
    %c3 = arith.constant 3 : index
    %c0_61 = arith.constant 0 : index
    %88 = vector.load %arg15[%c0_60, %c3, %c0_61] : memref<2x22x128xf32, #tpu.memory_space<vmem>>, vector<2x16x128xf32>
    tpu.vector_store %arg15[%c0_60, %c3, %c0_61], %87 {strides = array<i32>} : memref<2x22x128xf32, #tpu.memory_space<vmem>>, vector<2x16x128xf32>,
    %c0_62 = arith.constant 0 : index
    %c0_63 = arith.constant 0 : index
    %c0_64 = arith.constant 0 : index
    %89 = vector.load %arg15[%c0_62, %c0_63, %c0_64] : memref<2x22x128xf32, #tpu.memory_space<vmem>>, vector<2x16x128xf32>
    %90 = vector.shape_cast %89 : vector<2x16x128xf32> to vector<32x128xf32>
    %c0_65 = arith.constant 0 : index
    %c1_66 = arith.constant 1 : index
    %c0_67 = arith.constant 0 : index
    %91 = vector.load %arg15[%c0_65, %c1_66, %c0_67] : memref<2x22x128xf32, #tpu.memory_space<vmem>>, vector<2x16x128xf32>
    %92 = vector.shape_cast %91 : vector<2x16x128xf32> to vector<32x128xf32>
    %c0_68 = arith.constant 0 : index
    %c2_69 = arith.constant 2 : index
    %c0_70 = arith.constant 0 : index
    %93 = vector.load %arg15[%c0_68, %c2_69, %c0_70] : memref<2x22x128xf32, #tpu.memory_space<vmem>>, vector<2x16x128xf32>
    %94 = vector.shape_cast %93 : vector<2x16x128xf32> to vector<32x128xf32>
    %c0_71 = arith.constant 0 : index
    %c3_72 = arith.constant 3 : index
    %c0_73 = arith.constant 0 : index
    %95 = vector.load %arg15[%c0_71, %c3_72, %c0_73] : memref<2x22x128xf32, #tpu.memory_space<vmem>>, vector<2x16x128xf32>
    %96 = vector.shape_cast %95 : vector<2x16x128xf32> to vector<32x128xf32>
    %c0_74 = arith.constant 0 : index
    %c4 = arith.constant 4 : index
    %c0_75 = arith.constant 0 : index
    %97 = vector.load %arg15[%c0_74, %c4, %c0_75] : memref<2x22x128xf32, #tpu.memory_space<vmem>>, vector<2x16x128xf32>
    %98 = vector.shape_cast %97 : vector<2x16x128xf32> to vector<32x128xf32>
    %c0_76 = arith.constant 0 : index
    %c5 = arith.constant 5 : index
    %c0_77 = arith.constant 0 : index
    %99 = vector.load %arg15[%c0_76, %c5, %c0_77] : memref<2x22x128xf32, #tpu.memory_space<vmem>>, vector<2x16x128xf32>
    %100 = vector.shape_cast %99 : vector<2x16x128xf32> to vector<32x128xf32>
    %c0_78 = arith.constant 0 : index
    %c6 = arith.constant 6 : index
    %c0_79 = arith.constant 0 : index
    %101 = vector.load %arg15[%c0_78, %c6, %c0_79] : memref<2x22x128xf32, #tpu.memory_space<vmem>>, vector<2x16x128xf32>
    %102 = vector.shape_cast %101 : vector<2x16x128xf32> to vector<32x128xf32>
    %103 = tpu.concatenate %90, %92, %94, %96, %98, %100, %102 in 1 : vector<32x128xf32>, vector<32x128xf32>, vector<32x128xf32>, vector<32x128xf32>, vector<32x128xf32>, vector<32x128xf32>, vector<32x128xf32> -> vector<32x896xf32>
    %c0_80 = arith.constant 0 : index
    %c0_81 = arith.constant 0 : index
    %104 = vector.load %arg6[%c0_80, %c0_81] : memref<896x16xf32, #tpu.memory_space<vmem>>, vector<896x16xf32>
    %cst_82 = arith.constant dense<0.000000e+00> : vector<32x16xf32>
    %105 = tpu.matmul %103, %104, %cst_82 {dimension_numbers = #tpu.dot_dimension_numbers<[1], [0], [0], [1], [0, 0, 1, 1], [], []>} : vector<32x896xf32>, vector<896x16xf32>, vector<32x16xf32> -> vector<32x16xf32>
    %106 = vector.shape_cast %105 : vector<32x16xf32> to vector<1x32x16xf32>
    %cst_83 = arith.constant dense<0.000000e+00> : vector<1xf32>
    %107 = vector.multi_reduction <add>, %106, %cst_83 [1, 2] : vector<1x32x16xf32> to vector<1xf32>
    %108 = vector.shape_cast %107 : vector<1xf32> to vector<1x1x1xf32>
    %109 = vector.extract %108[0, 0, 0] : f32 from vector<1x1x1xf32>
    %cst_84 = arith.constant 0.001953125 : f32
    %110 = arith.mulf %109, %cst_84 : f32
    %111 = arith.mulf %105, %105 : vector<32x16xf32>
    %112 = vector.shape_cast %111 : vector<32x16xf32> to vector<1x32x16xf32>
    %cst_85 = arith.constant dense<0.000000e+00> : vector<1xf32>
    %113 = vector.multi_reduction <add>, %112, %cst_85 [1, 2] : vector<1x32x16xf32> to vector<1xf32>
    %114 = vector.shape_cast %113 : vector<1xf32> to vector<1x1x1xf32>
    %115 = vector.extract %114[0, 0, 0] : f32 from vector<1x1x1xf32>
    %cst_86 = arith.constant 0.001953125 : f32
    %116 = arith.mulf %115, %cst_86 : f32
    %117 = arith.mulf %110, %110 : f32
    %118 = arith.subf %116, %117 : f32
    %cst_87 = arith.constant 0.000000e+00 : f32
    %119 = arith.maximumf %118, %cst_87 : f32
    %c0_88 = arith.constant 0 : index
    %c0_89 = arith.constant 0 : index
    %120 = memref.load %arg12[%c0_88, %c0_89] : memref<1x1xf32, #tpu.memory_space<smem>>
    %cst_90 = arith.constant 9.99999974E-6 : f32
    %121 = arith.addf %119, %cst_90 : f32
    %122 = math.rsqrt %121 : f32
    %123 = arith.mulf %120, %122 : f32
    %c0_91 = arith.constant 0 : index
    %c0_92 = arith.constant 0 : index
    %124 = memref.load %arg13[%c0_91, %c0_92] : memref<1x1xf32, #tpu.memory_space<smem>>
    %125 = arith.mulf %110, %123 : f32
    %126 = arith.subf %124, %125 : f32
    %127 = vector.broadcast %123 : f32 to vector<32x16xf32>
    %128 = arith.mulf %105, %127 : vector<32x16xf32>
    %129 = vector.broadcast %126 : f32 to vector<32x16xf32>
    %130 = arith.addf %128, %129 : vector<32x16xf32>
    %131 = arith.negf %130 : vector<32x16xf32>
    %132 = math.exp %131 : vector<32x16xf32>
    %cst_93 = arith.constant 1.000000e+00 : f32
    %133 = vector.broadcast %cst_93 : f32 to vector<32x16xf32>
    %134 = arith.addf %133, %132 : vector<32x16xf32>
    %135 = arith.divf %133, %134 : vector<32x16xf32>
    %c0_94 = arith.constant 0 : index
    %c0_95 = arith.constant 0 : index
    %136 = vector.load %arg9[%c0_94, %c0_95] : memref<16x512xf32, #tpu.memory_space<vmem>>, vector<16x512xf32>
    %cst_96 = arith.constant dense<0.000000e+00> : vector<32x512xf32>
    %137 = tpu.matmul %135, %136, %cst_96 {dimension_numbers = #tpu.dot_dimension_numbers<[1], [0], [0], [1], [0, 0, 1, 1], [], []>} : vector<32x16xf32>, vector<16x512xf32>, vector<32x512xf32> -> vector<32x512xf32>
    %138 = arith.mulf %67, %137 : vector<32x512xf32>
    %c0_97 = arith.constant 0 : index
    %c0_98 = arith.constant 0 : index
    %139 = vector.load %arg14[%c0_97, %c0_98] : memref<32x512xf32, #tpu.memory_space<vmem>>, vector<32x512xf32>
    tpu.vector_store %arg14[%c0_97, %c0_98], %138 {strides = array<i32>} : memref<32x512xf32, #tpu.memory_space<vmem>>, vector<32x512xf32>,
    return
  }
}

</mosaic_0001>

<llo_original>
// kernel: conv_block_with_se_atten.1
$region0: #{conv_block_with_se_atten.1}
  #allocation0 [shape = 'u32[]', space=smem, size = 0x4, offset = 0x4, fixed_abs, tag = 'smem constant byte address 0x4 - core index']
  #allocation1 [shape = 'u32[144,128]{1,0:T(1,128)}', space=vmem, size = 0x12000, scoped, tag = 'internal scratch']
  #allocation2 [shape = 'f32[2,22,128]{2,1,0:T(8,128)}', space=vmem, size = 0x6000, scoped, tag = 'scratch operand']
  #allocation3 [shape = 'f32[1,1]{1,0:T(1,128)S(6)}', space=smem, size = 0x200, scoped, tag = 'scoped memory for conv_block_with_se_atten.1']
  #allocation4 [shape = 'f32[1,1]{1,0:T(1,128)S(6)}', space=smem, size = 0x200, scoped, tag = 'scoped memory for conv_block_with_se_atten.1']
  %s0 = inlined_call_operand.vmem [shape: bf16[2,18,128], index: 0, kind: input, shape index: {}]
  %s1 = inlined_call_operand.vmem [shape: bf16[384,512], index: 1, kind: input, shape index: {}]
  %s2 = inlined_call_operand.vmem [shape: f32[1,32], index: 2, kind: input, shape index: {}]
  %s3 = inlined_call_operand.vmem [shape: f32[1,32], index: 3, kind: input, shape index: {}]
  %s4 = inlined_call_operand.vmem [shape: f32[32,2], index: 4, kind: input, shape index: {}]
  %s5 = inlined_call_operand.vmem [shape: f32[2,32], index: 5, kind: input, shape index: {}]
  %s6 = inlined_call_operand.vmem [shape: f32[896,16], index: 6, kind: input, shape index: {}]
  %s7 = inlined_call_operand.vmem [shape: f32[512,32], index: 7, kind: input, shape index: {}]
  %s8 = inlined_call_operand.vmem [shape: f32[32,512], index: 8, kind: input, shape index: {}]
  %s9 = inlined_call_operand.vmem [shape: f32[16,512], index: 9, kind: input, shape index: {}]
  %s10 = inlined_call_operand.vmem [shape: f32[512,128], index: 10, kind: input, shape index: {}]
  %s11 = inlined_call_operand.vmem [shape: f32[512,128], index: 11, kind: input, shape index: {}]
  %s12 = inlined_call_operand.<no memory space> [shape: f32[1,1], index: 12, kind: input, shape index: {}]
  %s13 = inlined_call_operand.<no memory space> [shape: f32[1,1], index: 13, kind: input, shape index: {}]
  %s14 = inlined_call_operand.vmem [shape: f32[32,512], index: 14, kind: output, shape index: {}]
  %s15 = sld [smem:[#allocation0]]
  $region66: #{conv_block_with_se_atten.1} parent=0
    _
  %s17 = ssub.s32 1, %s15
  %s18 = scalar_select 0, %s17, %s15
  %19 = sst [smem:[#allocation3]] %s12
  %20 = sst [smem:[#allocation4]] %s13
  // Predicated region
  $region2: #{conv_block_with_se_atten.1} parent=0 // pred_check
    _
  $region3: #{conv_block_with_se_atten.1} parent=0 // pred_check_branch
    %22 = sbr.rel (0) target = $region5
  $region4: #{conv_block_with_se_atten.1} parent=0 // pred_region
    _
  $region5: #{conv_block_with_se_atten.1} parent=0 // pred_fallthru
    _
  // Predicated region
  $region6: #{conv_block_with_se_atten.1} parent=0 // pred_check
    _
  $region7: #{conv_block_with_se_atten.1} parent=0 // pred_check_branch
    %24 = sbr.rel (0) target = $region9
  $region8: #{conv_block_with_se_atten.1} parent=0 // pred_region
    _
  $region9: #{conv_block_with_se_atten.1} parent=0 // pred_fallthru
    _
  // Predicated region
  $region10: #{conv_block_with_se_atten.1} parent=0 // pred_check
    _
  $region11: #{conv_block_with_se_atten.1} parent=0 // pred_check_branch
    %26 = sbr.rel (0) target = $region13
  $region12: #{conv_block_with_se_atten.1} parent=0 // pred_region
    _
  $region13: #{conv_block_with_se_atten.1} parent=0 // pred_fallthru
    _
  // Predicated region
  $region14: #{conv_block_with_se_atten.1} parent=0 // pred_check
    _
  $region15: #{conv_block_with_se_atten.1} parent=0 // pred_check_branch
    %28 = sbr.rel (0) target = $region17
  $region16: #{conv_block_with_se_atten.1} parent=0 // pred_region
    _
  $region17: #{conv_block_with_se_atten.1} parent=0 // pred_fallthru
    _
  // Predicated region
  $region18: #{conv_block_with_se_atten.1} parent=0 // pred_check
    _
  $region19: #{conv_block_with_se_atten.1} parent=0 // pred_check_branch
    %30 = sbr.rel (0) target = $region21
  $region20: #{conv_block_with_se_atten.1} parent=0 // pred_region
    _
  $region21: #{conv_block_with_se_atten.1} parent=0 // pred_fallthru
    _
  // Predicated region
  $region22: #{conv_block_with_se_atten.1} parent=0 // pred_check
    _
  $region23: #{conv_block_with_se_atten.1} parent=0 // pred_check_branch
    %32 = sbr.rel (0) target = $region25
  $region24: #{conv_block_with_se_atten.1} parent=0 // pred_region
    _
  $region25: #{conv_block_with_se_atten.1} parent=0 // pred_fallthru
    _
  // Predicated region
  $region26: #{conv_block_with_se_atten.1} parent=0 // pred_check
    _
  $region27: #{conv_block_with_se_atten.1} parent=0 // pred_check_branch
    %34 = sbr.rel (0) target = $region29
  $region28: #{conv_block_with_se_atten.1} parent=0 // pred_region
    _
  $region29: #{conv_block_with_se_atten.1} parent=0 // pred_fallthru
    _
  // Predicated region
  $region30: #{conv_block_with_se_atten.1} parent=0 // pred_check
    _
  $region31: #{conv_block_with_se_atten.1} parent=0 // pred_check_branch
    %36 = sbr.rel (0) target = $region33
  $region32: #{conv_block_with_se_atten.1} parent=0 // pred_region
    _
  $region33: #{conv_block_with_se_atten.1} parent=0 // pred_fallthru
    _
  // Predicated region
  $region34: #{conv_block_with_se_atten.1} parent=0 // pred_check
    _
  $region35: #{conv_block_with_se_atten.1} parent=0 // pred_check_branch
    %38 = sbr.rel (0) target = $region37
  $region36: #{conv_block_with_se_atten.1} parent=0 // pred_region
    _
  $region37: #{conv_block_with_se_atten.1} parent=0 // pred_fallthru
    _
  // Predicated region
  $region38: #{conv_block_with_se_atten.1} parent=0 // pred_check
    _
  $region39: #{conv_block_with_se_atten.1} parent=0 // pred_check_branch
    %40 = sbr.rel (0) target = $region41
  $region40: #{conv_block_with_se_atten.1} parent=0 // pred_region
    _
  $region41: #{conv_block_with_se_atten.1} parent=0 // pred_fallthru
    _
  // Predicated region
  $region42: #{conv_block_with_se_atten.1} parent=0 // pred_check
    _
  $region43: #{conv_block_with_se_atten.1} parent=0 // pred_check_branch
    %42 = sbr.rel (0) target = $region45
  $region44: #{conv_block_with_se_atten.1} parent=0 // pred_region
    _
  $region45: #{conv_block_with_se_atten.1} parent=0 // pred_fallthru
    _
  // Predicated region
  $region46: #{conv_block_with_se_atten.1} parent=0 // pred_check
    _
  $region47: #{conv_block_with_se_atten.1} parent=0 // pred_check_branch
    %44 = sbr.rel (0) target = $region49
  $region48: #{conv_block_with_se_atten.1} parent=0 // pred_region
    _
  $region49: #{conv_block_with_se_atten.1} parent=0 // pred_fallthru
    _
  // Predicated region
  $region50: #{conv_block_with_se_atten.1} parent=0 // pred_check
    _
  $region51: #{conv_block_with_se_atten.1} parent=0 // pred_check_branch
    %46 = sbr.rel (0) target = $region53
  $region52: #{conv_block_with_se_atten.1} parent=0 // pred_region
    _
  $region53: #{conv_block_with_se_atten.1} parent=0 // pred_fallthru
    _
  // Predicated region
  $region54: #{conv_block_with_se_atten.1} parent=0 // pred_check
    _
  $region55: #{conv_block_with_se_atten.1} parent=0 // pred_check_branch
    %48 = sbr.rel (0) target = $region57
  $region56: #{conv_block_with_se_atten.1} parent=0 // pred_region
    _
  $region57: #{conv_block_with_se_atten.1} parent=0 // pred_fallthru
    _
  %v50 = vld [vmem:[%s0] sm:$0xf]
  %v51 = vld [vmem:[%s0 + $0x4] sm:$0xf]
  %v52 = vld [vmem:[%s0 + $0xc] sm:$0xf]
  %v53 = vld [vmem:[%s0 + $0x10] sm:$0xf]
  %v54 = vld [vmem:[%s0 + $0x8] sm:$0x1]
  %v55 = vld [vmem:[%s0 + $0x14] sm:$0x1]
  %vm56 = vsmask.f32 3328
  %vm57 = vsmask.f32 7440
  %vm58 = vmor %vm56, %vm57
  %v60 = vshrl.u32 %v50, 16
  %v62 = vrot.slane %v60, 4
  %v63 = vshll.u32 %v50, 16
  %v65 = vrot.slane %v63, 5
  %v66 = vor.u32 %v62, %v65
  %v67 = vrot.slane %v66, 4
  %v69 = vshll.u32 %v51, 16
  %v71 = vrot.slane %v69, 5
  %v72 = vsel %vm58, %v67, %v71
  %v73 = vshrl.u32 %v51, 16
  %v75 = vrot.slane %v73, 4
  %v76 = vor.u32 %v75, %v71
  %v77 = vrot.slane %v76, 4
  %v79 = vshll.u32 %v54, 16
  %v81 = vrot.slane %v79, 5
  %v82 = vsel %vm58, %v77, %v81
  %v84 = vshrl.u32 %v52, 16
  %v86 = vrot.slane %v84, 4
  %v87 = vshll.u32 %v52, 16
  %v89 = vrot.slane %v87, 5
  %v90 = vor.u32 %v86, %v89
  %v91 = vrot.slane %v90, 4
  %v93 = vshll.u32 %v53, 16
  %v95 = vrot.slane %v93, 5
  %v96 = vsel %vm58, %v91, %v95
  %v97 = vshrl.u32 %v53, 16
  %v99 = vrot.slane %v97, 4
  %v100 = vor.u32 %v99, %v95
  %v101 = vrot.slane %v100, 4
  %v103 = vshll.u32 %v55, 16
  %v105 = vrot.slane %v103, 5
  %v106 = vsel %vm58, %v101, %v105
  %v107 = vld [vmem:[%s0] sm:$0xe]
  %v108 = vld [vmem:[%s0 + $0xc] sm:$0xe]
  %vm115 = vcmask 1042432
  %vm116 = vcmask 1046532
  %vm117 = vmor %vm115, %vm116
  %v118 = vrot.slane %v107, 5
  %v119 = vrot.slane %v118, 4
  %v120 = vrot.slane %v51, 5
  %v121 = vsel %vm117, %v119, %v120
  %v122 = vrot.slane %v120, 4
  %v123 = vrot.slane %v54, 5
  %v124 = vsel %vm117, %v122, %v123
  %v125 = vrot.slane %v108, 5
  %v126 = vrot.slane %v125, 4
  %v127 = vrot.slane %v53, 5
  %v128 = vsel %vm117, %v126, %v127
  %v129 = vrot.slane %v127, 4
  %v130 = vrot.slane %v55, 5
  %v131 = vsel %vm117, %v129, %v130
  %v134 = vunpack.c.l.b16 %v50
  %v135 = vunpack.c.l.b16 %v51
  %v136 = vunpack.c.l.b16 %v52
  %v137 = vunpack.c.l.b16 %v53
  %v138 = vpack.c.b16 %v135, %v134
  %v139 = vpack.c.b16 %v137, %v136
  %v142 = vunpack.c.l.b16 %v72
  %v143 = vunpack.c.l.b16 %v82
  %v144 = vunpack.c.l.b16 %v96
  %v145 = vunpack.c.l.b16 %v106
  %v146 = vpack.c.b16 %v143, %v142
  %v147 = vpack.c.b16 %v145, %v144
  %v150 = vunpack.c.l.b16 %v121
  %v151 = vunpack.c.l.b16 %v124
  %v152 = vunpack.c.l.b16 %v128
  %v153 = vunpack.c.l.b16 %v131
  %v154 = vpack.c.b16 %v151, %v150
  %v155 = vpack.c.b16 %v153, %v152
  %v158 = vld [vmem:[%s1] sm:$0xff]
  %v159 = vld [vmem:[%s1 + $0x8] sm:$0xff]
  %v160 = vld [vmem:[%s1 + $0x10] sm:$0xff]
  %v161 = vld [vmem:[%s1 + $0x18] sm:$0xff]
  %v162 = vld [vmem:[%s1 + $0x20] sm:$0xff]
  %v163 = vld [vmem:[%s1 + $0x28] sm:$0xff]
  %v164 = vld [vmem:[%s1 + $0x30] sm:$0xff]
  %v165 = vld [vmem:[%s1 + $0x38] sm:$0xff]
  %v166 = vld [vmem:[%s1 + $0x40] sm:$0xff]
  %v167 = vld [vmem:[%s1 + $0x48] sm:$0xff]
  %v168 = vld [vmem:[%s1 + $0x50] sm:$0xff]
  %v169 = vld [vmem:[%s1 + $0x58] sm:$0xff]
  %v170 = vld [vmem:[%s1 + $0x60] sm:$0xff]
  %v171 = vld [vmem:[%s1 + $0x68] sm:$0xff]
  %v172 = vld [vmem:[%s1 + $0x70] sm:$0xff]
  %v173 = vld [vmem:[%s1 + $0x78] sm:$0xff]
  %v174 = vld [vmem:[%s1 + $0x80] sm:$0xff]
  %v175 = vld [vmem:[%s1 + $0x88] sm:$0xff]
  %v176 = vld [vmem:[%s1 + $0x90] sm:$0xff]
  %v177 = vld [vmem:[%s1 + $0x98] sm:$0xff]
  %v178 = vld [vmem:[%s1 + $0xa0] sm:$0xff]
  %v179 = vld [vmem:[%s1 + $0xa8] sm:$0xff]
  %v180 = vld [vmem:[%s1 + $0xb0] sm:$0xff]
  %v181 = vld [vmem:[%s1 + $0xb8] sm:$0xff]
  %v182 = vld [vmem:[%s1 + $0xc0] sm:$0xff]
  %v183 = vld [vmem:[%s1 + $0xc8] sm:$0xff]
  %v184 = vld [vmem:[%s1 + $0xd0] sm:$0xff]
  %v185 = vld [vmem:[%s1 + $0xd8] sm:$0xff]
  %v186 = vld [vmem:[%s1 + $0xe0] sm:$0xff]
  %v187 = vld [vmem:[%s1 + $0xe8] sm:$0xff]
  %v188 = vld [vmem:[%s1 + $0xf0] sm:$0xff]
  %v189 = vld [vmem:[%s1 + $0xf8] sm:$0xff]
  %v190 = vld [vmem:[%s1 + $0x100] sm:$0xff]
  %v191 = vld [vmem:[%s1 + $0x108] sm:$0xff]
  %v192 = vld [vmem:[%s1 + $0x110] sm:$0xff]
  %v193 = vld [vmem:[%s1 + $0x118] sm:$0xff]
  %v194 = vld [vmem:[%s1 + $0x120] sm:$0xff]
  %v195 = vld [vmem:[%s1 + $0x128] sm:$0xff]
  %v196 = vld [vmem:[%s1 + $0x130] sm:$0xff]
  %v197 = vld [vmem:[%s1 + $0x138] sm:$0xff]
  %v198 = vld [vmem:[%s1 + $0x140] sm:$0xff]
  %v199 = vld [vmem:[%s1 + $0x148] sm:$0xff]
  %v200 = vld [vmem:[%s1 + $0x150] sm:$0xff]
  %v201 = vld [vmem:[%s1 + $0x158] sm:$0xff]
  %v202 = vld [vmem:[%s1 + $0x160] sm:$0xff]
  %v203 = vld [vmem:[%s1 + $0x168] sm:$0xff]
  %v204 = vld [vmem:[%s1 + $0x170] sm:$0xff]
  %v205 = vld [vmem:[%s1 + $0x178] sm:$0xff]
  %v206 = vld [vmem:[%s1 + $0x180] sm:$0xff]
  %v207 = vld [vmem:[%s1 + $0x188] sm:$0xff]
  %v208 = vld [vmem:[%s1 + $0x190] sm:$0xff]
  %v209 = vld [vmem:[%s1 + $0x198] sm:$0xff]
  %v210 = vld [vmem:[%s1 + $0x1a0] sm:$0xff]
  %v211 = vld [vmem:[%s1 + $0x1a8] sm:$0xff]
  %v212 = vld [vmem:[%s1 + $0x1b0] sm:$0xff]
  %v213 = vld [vmem:[%s1 + $0x1b8] sm:$0xff]
  %v214 = vld [vmem:[%s1 + $0x1c0] sm:$0xff]
  %v215 = vld [vmem:[%s1 + $0x1c8] sm:$0xff]
  %v216 = vld [vmem:[%s1 + $0x1d0] sm:$0xff]
  %v217 = vld [vmem:[%s1 + $0x1d8] sm:$0xff]
  %v218 = vld [vmem:[%s1 + $0x1e0] sm:$0xff]
  %v219 = vld [vmem:[%s1 + $0x1e8] sm:$0xff]
  %v220 = vld [vmem:[%s1 + $0x1f0] sm:$0xff]
  %v221 = vld [vmem:[%s1 + $0x1f8] sm:$0xff]
  %v222 = vld [vmem:[%s1 + $0x200] sm:$0xff]
  %v223 = vld [vmem:[%s1 + $0x208] sm:$0xff]
  %v224 = vld [vmem:[%s1 + $0x210] sm:$0xff]
  %v225 = vld [vmem:[%s1 + $0x218] sm:$0xff]
  %v226 = vld [vmem:[%s1 + $0x220] sm:$0xff]
  %v227 = vld [vmem:[%s1 + $0x228] sm:$0xff]
  %v228 = vld [vmem:[%s1 + $0x230] sm:$0xff]
  %v229 = vld [vmem:[%s1 + $0x238] sm:$0xff]
  %v230 = vld [vmem:[%s1 + $0x240] sm:$0xff]
  %v231 = vld [vmem:[%s1 + $0x248] sm:$0xff]
  %v232 = vld [vmem:[%s1 + $0x250] sm:$0xff]
  %v233 = vld [vmem:[%s1 + $0x258] sm:$0xff]
  %v234 = vld [vmem:[%s1 + $0x260] sm:$0xff]
  %v235 = vld [vmem:[%s1 + $0x268] sm:$0xff]
  %v236 = vld [vmem:[%s1 + $0x270] sm:$0xff]
  %v237 = vld [vmem:[%s1 + $0x278] sm:$0xff]
  %v238 = vld [vmem:[%s1 + $0x280] sm:$0xff]
  %v239 = vld [vmem:[%s1 + $0x288] sm:$0xff]
  %v240 = vld [vmem:[%s1 + $0x290] sm:$0xff]
  %v241 = vld [vmem:[%s1 + $0x298] sm:$0xff]
  %v242 = vld [vmem:[%s1 + $0x2a0] sm:$0xff]
  %v243 = vld [vmem:[%s1 + $0x2a8] sm:$0xff]
  %v244 = vld [vmem:[%s1 + $0x2b0] sm:$0xff]
  %v245 = vld [vmem:[%s1 + $0x2b8] sm:$0xff]
  %v246 = vld [vmem:[%s1 + $0x2c0] sm:$0xff]
  %v247 = vld [vmem:[%s1 + $0x2c8] sm:$0xff]
  %v248 = vld [vmem:[%s1 + $0x2d0] sm:$0xff]
  %v249 = vld [vmem:[%s1 + $0x2d8] sm:$0xff]
  %v250 = vld [vmem:[%s1 + $0x2e0] sm:$0xff]
  %v251 = vld [vmem:[%s1 + $0x2e8] sm:$0xff]
  %v252 = vld [vmem:[%s1 + $0x2f0] sm:$0xff]
  %v253 = vld [vmem:[%s1 + $0x2f8] sm:$0xff]
  %v350 = vunpack.c.l.b16 %v158
  %v351 = vunpack.c.h.b16 %v158
  %v352 = vunpack.c.l.b16 %v159
  %v353 = vunpack.c.h.b16 %v159
  %v354 = vunpack.c.l.b16 %v160
  %v355 = vunpack.c.h.b16 %v160
  %v356 = vunpack.c.l.b16 %v161
  %v357 = vunpack.c.h.b16 %v161
  %v358 = vunpack.c.l.b16 %v162
  %v359 = vunpack.c.h.b16 %v162
  %v360 = vunpack.c.l.b16 %v163
  %v361 = vunpack.c.h.b16 %v163
  %v362 = vunpack.c.l.b16 %v164
  %v363 = vunpack.c.h.b16 %v164
  %v364 = vunpack.c.l.b16 %v165
  %v365 = vunpack.c.h.b16 %v165
  %v366 = vunpack.c.l.b16 %v166
  %v367 = vunpack.c.h.b16 %v166
  %v368 = vunpack.c.l.b16 %v167
  %v369 = vunpack.c.h.b16 %v167
  %v370 = vunpack.c.l.b16 %v168
  %v371 = vunpack.c.h.b16 %v168
  %v372 = vunpack.c.l.b16 %v169
  %v373 = vunpack.c.h.b16 %v169
  %v374 = vunpack.c.l.b16 %v170
  %v375 = vunpack.c.h.b16 %v170
  %v376 = vunpack.c.l.b16 %v171
  %v377 = vunpack.c.h.b16 %v171
  %v378 = vunpack.c.l.b16 %v172
  %v379 = vunpack.c.h.b16 %v172
  %v380 = vunpack.c.l.b16 %v173
  %v381 = vunpack.c.h.b16 %v173
  %v382 = vunpack.c.l.b16 %v174
  %v383 = vunpack.c.h.b16 %v174
  %v384 = vunpack.c.l.b16 %v175
  %v385 = vunpack.c.h.b16 %v175
  %v386 = vunpack.c.l.b16 %v176
  %v387 = vunpack.c.h.b16 %v176
  %v388 = vunpack.c.l.b16 %v177
  %v389 = vunpack.c.h.b16 %v177
  %v390 = vunpack.c.l.b16 %v178
  %v391 = vunpack.c.h.b16 %v178
  %v392 = vunpack.c.l.b16 %v179
  %v393 = vunpack.c.h.b16 %v179
  %v394 = vunpack.c.l.b16 %v180
  %v395 = vunpack.c.h.b16 %v180
  %v396 = vunpack.c.l.b16 %v181
  %v397 = vunpack.c.h.b16 %v181
  %v398 = vunpack.c.l.b16 %v182
  %v399 = vunpack.c.h.b16 %v182
  %v400 = vunpack.c.l.b16 %v183
  %v401 = vunpack.c.h.b16 %v183
  %v402 = vunpack.c.l.b16 %v184
  %v403 = vunpack.c.h.b16 %v184
  %v404 = vunpack.c.l.b16 %v185
  %v405 = vunpack.c.h.b16 %v185
  %v406 = vunpack.c.l.b16 %v186
  %v407 = vunpack.c.h.b16 %v186
  %v408 = vunpack.c.l.b16 %v187
  %v409 = vunpack.c.h.b16 %v187
  %v410 = vunpack.c.l.b16 %v188
  %v411 = vunpack.c.h.b16 %v188
  %v412 = vunpack.c.l.b16 %v189
  %v413 = vunpack.c.h.b16 %v189
  %v414 = vunpack.c.l.b16 %v190
  %v415 = vunpack.c.h.b16 %v190
  %v416 = vunpack.c.l.b16 %v191
  %v417 = vunpack.c.h.b16 %v191
  %v418 = vunpack.c.l.b16 %v192
  %v419 = vunpack.c.h.b16 %v192
  %v420 = vunpack.c.l.b16 %v193
  %v421 = vunpack.c.h.b16 %v193
  %v422 = vunpack.c.l.b16 %v194
  %v423 = vunpack.c.h.b16 %v194
  %v424 = vunpack.c.l.b16 %v195
  %v425 = vunpack.c.h.b16 %v195
  %v426 = vunpack.c.l.b16 %v196
  %v427 = vunpack.c.h.b16 %v196
  %v428 = vunpack.c.l.b16 %v197
  %v429 = vunpack.c.h.b16 %v197
  %v430 = vunpack.c.l.b16 %v198
  %v431 = vunpack.c.h.b16 %v198
  %v432 = vunpack.c.l.b16 %v199
  %v433 = vunpack.c.h.b16 %v199
  %v434 = vunpack.c.l.b16 %v200
  %v435 = vunpack.c.h.b16 %v200
  %v436 = vunpack.c.l.b16 %v201
  %v437 = vunpack.c.h.b16 %v201
  %v438 = vunpack.c.l.b16 %v202
  %v439 = vunpack.c.h.b16 %v202
  %v440 = vunpack.c.l.b16 %v203
  %v441 = vunpack.c.h.b16 %v203
  %v442 = vunpack.c.l.b16 %v204
  %v443 = vunpack.c.h.b16 %v204
  %v444 = vunpack.c.l.b16 %v205
  %v445 = vunpack.c.h.b16 %v205
  %v446 = vunpack.c.l.b16 %v206
  %v447 = vunpack.c.h.b16 %v206
  %v448 = vunpack.c.l.b16 %v207
  %v449 = vunpack.c.h.b16 %v207
  %v450 = vunpack.c.l.b16 %v208
  %v451 = vunpack.c.h.b16 %v208
  %v452 = vunpack.c.l.b16 %v209
  %v453 = vunpack.c.h.b16 %v209
  %v454 = vunpack.c.l.b16 %v210
  %v455 = vunpack.c.h.b16 %v210
  %v456 = vunpack.c.l.b16 %v211
  %v457 = vunpack.c.h.b16 %v211
  %v458 = vunpack.c.l.b16 %v212
  %v459 = vunpack.c.h.b16 %v212
  %v460 = vunpack.c.l.b16 %v213
  %v461 = vunpack.c.h.b16 %v213
  %v462 = vunpack.c.l.b16 %v214
  %v463 = vunpack.c.h.b16 %v214
  %v464 = vunpack.c.l.b16 %v215
  %v465 = vunpack.c.h.b16 %v215
  %v466 = vunpack.c.l.b16 %v216
  %v467 = vunpack.c.h.b16 %v216
  %v468 = vunpack.c.l.b16 %v217
  %v469 = vunpack.c.h.b16 %v217
  %v470 = vunpack.c.l.b16 %v218
  %v471 = vunpack.c.h.b16 %v218
  %v472 = vunpack.c.l.b16 %v219
  %v473 = vunpack.c.h.b16 %v219
  %v474 = vunpack.c.l.b16 %v220
  %v475 = vunpack.c.h.b16 %v220
  %v476 = vunpack.c.l.b16 %v221
  %v477 = vunpack.c.h.b16 %v221
  %v478 = vunpack.c.l.b16 %v222
  %v479 = vunpack.c.h.b16 %v222
  %v480 = vunpack.c.l.b16 %v223
  %v481 = vunpack.c.h.b16 %v223
  %v482 = vunpack.c.l.b16 %v224
  %v483 = vunpack.c.h.b16 %v224
  %v484 = vunpack.c.l.b16 %v225
  %v485 = vunpack.c.h.b16 %v225
  %v486 = vunpack.c.l.b16 %v226
  %v487 = vunpack.c.h.b16 %v226
  %v488 = vunpack.c.l.b16 %v227
  %v489 = vunpack.c.h.b16 %v227
  %v490 = vunpack.c.l.b16 %v228
  %v491 = vunpack.c.h.b16 %v228
  %v492 = vunpack.c.l.b16 %v229
  %v493 = vunpack.c.h.b16 %v229
  %v494 = vunpack.c.l.b16 %v230
  %v495 = vunpack.c.h.b16 %v230
  %v496 = vunpack.c.l.b16 %v231
  %v497 = vunpack.c.h.b16 %v231
  %v498 = vunpack.c.l.b16 %v232
  %v499 = vunpack.c.h.b16 %v232
  %v500 = vunpack.c.l.b16 %v233
  %v501 = vunpack.c.h.b16 %v233
  %v502 = vunpack.c.l.b16 %v234
  %v503 = vunpack.c.h.b16 %v234
  %v504 = vunpack.c.l.b16 %v235
  %v505 = vunpack.c.h.b16 %v235
  %v506 = vunpack.c.l.b16 %v236
  %v507 = vunpack.c.h.b16 %v236
  %v508 = vunpack.c.l.b16 %v237
  %v509 = vunpack.c.h.b16 %v237
  %v510 = vunpack.c.l.b16 %v238
  %v511 = vunpack.c.h.b16 %v238
  %v512 = vunpack.c.l.b16 %v239
  %v513 = vunpack.c.h.b16 %v239
  %v514 = vunpack.c.l.b16 %v240
  %v515 = vunpack.c.h.b16 %v240
  %v516 = vunpack.c.l.b16 %v241
  %v517 = vunpack.c.h.b16 %v241
  %v518 = vunpack.c.l.b16 %v242
  %v519 = vunpack.c.h.b16 %v242
  %v520 = vunpack.c.l.b16 %v243
  %v521 = vunpack.c.h.b16 %v243
  %v522 = vunpack.c.l.b16 %v244
  %v523 = vunpack.c.h.b16 %v244
  %v524 = vunpack.c.l.b16 %v245
  %v525 = vunpack.c.h.b16 %v245
  %v526 = vunpack.c.l.b16 %v246
  %v527 = vunpack.c.h.b16 %v246
  %v528 = vunpack.c.l.b16 %v247
  %v529 = vunpack.c.h.b16 %v247
  %v530 = vunpack.c.l.b16 %v248
  %v531 = vunpack.c.h.b16 %v248
  %v532 = vunpack.c.l.b16 %v249
  %v533 = vunpack.c.h.b16 %v249
  %v534 = vunpack.c.l.b16 %v250
  %v535 = vunpack.c.h.b16 %v250
  %v536 = vunpack.c.l.b16 %v251
  %v537 = vunpack.c.h.b16 %v251
  %v538 = vunpack.c.l.b16 %v252
  %v539 = vunpack.c.h.b16 %v252
  %v540 = vunpack.c.l.b16 %v253
  %v541 = vunpack.c.h.b16 %v253
  %v542 = vpack.c.b16 %v354, %v350
  %v543 = vpack.c.b16 %v355, %v351
  %v544 = vpack.c.b16 %v356, %v352
  %v545 = vpack.c.b16 %v357, %v353
  %v546 = vpack.c.b16 %v362, %v358
  %v547 = vpack.c.b16 %v363, %v359
  %v548 = vpack.c.b16 %v364, %v360
  %v549 = vpack.c.b16 %v365, %v361
  %v550 = vpack.c.b16 %v370, %v366
  %v551 = vpack.c.b16 %v371, %v367
  %v552 = vpack.c.b16 %v372, %v368
  %v553 = vpack.c.b16 %v373, %v369
  %v554 = vpack.c.b16 %v378, %v374
  %v555 = vpack.c.b16 %v379, %v375
  %v556 = vpack.c.b16 %v380, %v376
  %v557 = vpack.c.b16 %v381, %v377
  %v558 = vpack.c.b16 %v386, %v382
  %v559 = vpack.c.b16 %v387, %v383
  %v560 = vpack.c.b16 %v388, %v384
  %v561 = vpack.c.b16 %v389, %v385
  %v562 = vpack.c.b16 %v394, %v390
  %v563 = vpack.c.b16 %v395, %v391
  %v564 = vpack.c.b16 %v396, %v392
  %v565 = vpack.c.b16 %v397, %v393
  %v566 = vpack.c.b16 %v402, %v398
  %v567 = vpack.c.b16 %v403, %v399
  %v568 = vpack.c.b16 %v404, %v400
  %v569 = vpack.c.b16 %v405, %v401
  %v570 = vpack.c.b16 %v410, %v406
  %v571 = vpack.c.b16 %v411, %v407
  %v572 = vpack.c.b16 %v412, %v408
  %v573 = vpack.c.b16 %v413, %v409
  %v574 = vpack.c.b16 %v418, %v414
  %v575 = vpack.c.b16 %v419, %v415
  %v576 = vpack.c.b16 %v420, %v416
  %v577 = vpack.c.b16 %v421, %v417
  %v578 = vpack.c.b16 %v426, %v422
  %v579 = vpack.c.b16 %v427, %v423
  %v580 = vpack.c.b16 %v428, %v424
  %v581 = vpack.c.b16 %v429, %v425
  %v582 = vpack.c.b16 %v434, %v430
  %v583 = vpack.c.b16 %v435, %v431
  %v584 = vpack.c.b16 %v436, %v432
  %v585 = vpack.c.b16 %v437, %v433
  %v586 = vpack.c.b16 %v442, %v438
  %v587 = vpack.c.b16 %v443, %v439
  %v588 = vpack.c.b16 %v444, %v440
  %v589 = vpack.c.b16 %v445, %v441
  %v590 = vpack.c.b16 %v450, %v446
  %v591 = vpack.c.b16 %v451, %v447
  %v592 = vpack.c.b16 %v452, %v448
  %v593 = vpack.c.b16 %v453, %v449
  %v594 = vpack.c.b16 %v458, %v454
  %v595 = vpack.c.b16 %v459, %v455
  %v596 = vpack.c.b16 %v460, %v456
  %v597 = vpack.c.b16 %v461, %v457
  %v598 = vpack.c.b16 %v466, %v462
  %v599 = vpack.c.b16 %v467, %v463
  %v600 = vpack.c.b16 %v468, %v464
  %v601 = vpack.c.b16 %v469, %v465
  %v602 = vpack.c.b16 %v474, %v470
  %v603 = vpack.c.b16 %v475, %v471
  %v604 = vpack.c.b16 %v476, %v472
  %v605 = vpack.c.b16 %v477, %v473
  %v606 = vpack.c.b16 %v482, %v478
  %v607 = vpack.c.b16 %v483, %v479
  %v608 = vpack.c.b16 %v484, %v480
  %v609 = vpack.c.b16 %v485, %v481
  %v610 = vpack.c.b16 %v490, %v486
  %v611 = vpack.c.b16 %v491, %v487
  %v612 = vpack.c.b16 %v492, %v488
  %v613 = vpack.c.b16 %v493, %v489
  %v614 = vpack.c.b16 %v498, %v494
  %v615 = vpack.c.b16 %v499, %v495
  %v616 = vpack.c.b16 %v500, %v496
  %v617 = vpack.c.b16 %v501, %v497
  %v618 = vpack.c.b16 %v506, %v502
  %v619 = vpack.c.b16 %v507, %v503
  %v620 = vpack.c.b16 %v508, %v504
  %v621 = vpack.c.b16 %v509, %v505
  %v622 = vpack.c.b16 %v514, %v510
  %v623 = vpack.c.b16 %v515, %v511
  %v624 = vpack.c.b16 %v516, %v512
  %v625 = vpack.c.b16 %v517, %v513
  %v626 = vpack.c.b16 %v522, %v518
  %v627 = vpack.c.b16 %v523, %v519
  %v628 = vpack.c.b16 %v524, %v520
  %v629 = vpack.c.b16 %v525, %v521
  %v630 = vpack.c.b16 %v530, %v526
  %v631 = vpack.c.b16 %v531, %v527
  %v632 = vpack.c.b16 %v532, %v528
  %v633 = vpack.c.b16 %v533, %v529
  %v634 = vpack.c.b16 %v538, %v534
  %v635 = vpack.c.b16 %v539, %v535
  %v636 = vpack.c.b16 %v540, %v536
  %v637 = vpack.c.b16 %v541, %v537
  %734 = vmatprep.subr.bf16.mxu0 %v543
  %735 = vmatpush1.bf16.msra.mxu0 %v542
  %736 = vmatprep.subr.bf16.mxu0 %v547
  %737 = vmatpush1.bf16.msra.mxu0 %v546
  %738 = vmatprep.subr.bf16.mxu0 %v551
  %739 = vmatpush1.bf16.msra.mxu0 %v550
  %740 = vmatprep.subr.bf16.mxu0 %v555
  %741 = vmatpush1.bf16.msra.mxu0 %v554
  %742 = vmatprep.subr.bf16.mxu0 %v559
  %743 = vmatpush1.bf16.msra.mxu0 %v558
  %744 = vmatprep.subr.bf16.mxu0 %v563
  %745 = vmatpush1.bf16.msra.mxu0 %v562
  %746 = vmatprep.subr.bf16.mxu0 %v567
  %747 = vmatpush1.bf16.msra.mxu0 %v566
  %748 = vmatprep.subr.bf16.mxu0 %v571
  %749 = vmatpush1.bf16.msra.mxu0 %v570
  %750 = vmatprep.subr.bf16.mxu0 %v575
  %751 = vmatpush1.bf16.msra.mxu0 %v574
  %752 = vmatprep.subr.bf16.mxu0 %v579
  %753 = vmatpush1.bf16.msra.mxu0 %v578
  %754 = vmatprep.subr.bf16.mxu0 %v583
  %755 = vmatpush1.bf16.msra.mxu0 %v582
  %756 = vmatprep.subr.bf16.mxu0 %v587
  %757 = vmatpush1.bf16.msra.mxu0 %v586
  %758 = vmatprep.subr.bf16.mxu0 %v591
  %759 = vmatpush1.bf16.msra.mxu0 %v590
  %760 = vmatprep.subr.bf16.mxu0 %v595
  %761 = vmatpush1.bf16.msra.mxu0 %v594
  %762 = vmatprep.subr.bf16.mxu0 %v599
  %763 = vmatpush1.bf16.msra.mxu0 %v598
  %764 = vmatprep.subr.bf16.mxu0 %v603
  %765 = vmatpush1.bf16.msra.mxu0 %v602
  %766 = vmatprep.mubr.bf16.mxu0 %v146
  %767 = vmatmul.mubr.bf16.gmra.mrb[0].mxu0 %v138
  %v768 = vpop.f32.mrb[0].mxu0
  %v769 = vadd.f32 0.0, %v768
  %v770 = vpop.f32.mrb[0].mxu0
  %v771 = vadd.f32 0.0, %v770
  %v772 = vpop.f32.mrb[0].mxu0
  %v773 = vadd.f32 0.0, %v772
  %v774 = vpop.f32.mrb[0].mxu0
  %v775 = vadd.f32 0.0, %v774
  %776 = vmatprep.mubr.bf16.mxu0 %v147
  %777 = vmatmul.mubr.bf16.gmra.mrb[0].mxu0 %v139
  %v778 = vpop.f32.mrb[0].mxu0
  %v779 = vadd.f32 0.0, %v778
  %v780 = vpop.f32.mrb[0].mxu0
  %v781 = vadd.f32 0.0, %v780
  %v782 = vpop.f32.mrb[0].mxu0
  %v783 = vadd.f32 0.0, %v782
  %v784 = vpop.f32.mrb[0].mxu0
  %v785 = vadd.f32 0.0, %v784
  %786 = vdwg.mxu0
  %787 = vmatprep.subr.bf16.mxu0 %v607
  %788 = vmatpush1.bf16.msra.mxu0 %v606
  %789 = vmatprep.subr.bf16.mxu0 %v611
  %790 = vmatpush1.bf16.msra.mxu0 %v610
  %791 = vmatprep.subr.bf16.mxu0 %v615
  %792 = vmatpush1.bf16.msra.mxu0 %v614
  %793 = vmatprep.subr.bf16.mxu0 %v619
  %794 = vmatpush1.bf16.msra.mxu0 %v618
  %795 = vmatprep.subr.bf16.mxu0 %v623
  %796 = vmatpush1.bf16.msra.mxu0 %v622
  %797 = vmatprep.subr.bf16.mxu0 %v627
  %798 = vmatpush1.bf16.msra.mxu0 %v626
  %799 = vmatprep.subr.bf16.mxu0 %v631
  %800 = vmatpush1.bf16.msra.mxu0 %v630
  %801 = vmatprep.subr.bf16.mxu0 %v635
  %802 = vmatpush1.bf16.msra.mxu0 %v634
  %803 = vmatprep.subr.bf16.mxu0 0
  %804 = vmatpush1.bf16.msra.mxu0 0
  %805 = vmatprep.subr.bf16.mxu0 0
  %806 = vmatpush1.bf16.msra.mxu0 0
  %807 = vmatprep.subr.bf16.mxu0 0
  %808 = vmatpush1.bf16.msra.mxu0 0
  %809 = vmatprep.subr.bf16.mxu0 0
  %810 = vmatpush1.bf16.msra.mxu0 0
  %811 = vmatprep.subr.bf16.mxu0 0
  %812 = vmatpush1.bf16.msra.mxu0 0
  %813 = vmatprep.subr.bf16.mxu0 0
  %814 = vmatpush1.bf16.msra.mxu0 0
  %815 = vmatprep.subr.bf16.mxu0 0
  %816 = vmatpush1.bf16.msra.mxu0 0
  %817 = vmatprep.subr.bf16.mxu0 0
  %818 = vmatpush1.bf16.msra.mxu0 0
  %819 = vmatprep.mubr.bf16.mxu0 0
  %820 = vmatmul.mubr.bf16.gmra.mrb[0].mxu0 %v154
  %v821 = vpop.f32.mrb[0].mxu0
  %v822 = vadd.f32 %v769, %v821
  %v823 = vpop.f32.mrb[0].mxu0
  %v824 = vadd.f32 %v771, %v823
  %v825 = vpop.f32.mrb[0].mxu0
  %v826 = vadd.f32 %v773, %v825
  %v827 = vpop.f32.mrb[0].mxu0
  %v828 = vadd.f32 %v775, %v827
  %829 = vmatprep.mubr.bf16.mxu0 0
  %830 = vmatmul.mubr.bf16.gmra.mrb[0].mxu0 %v155
  %v831 = vpop.f32.mrb[0].mxu0
  %v832 = vadd.f32 %v779, %v831
  %v833 = vpop.f32.mrb[0].mxu0
  %v834 = vadd.f32 %v781, %v833
  %v835 = vpop.f32.mrb[0].mxu0
  %v836 = vadd.f32 %v783, %v835
  %v837 = vpop.f32.mrb[0].mxu0
  %v838 = vadd.f32 %v785, %v837
  %839 = vdwg.mxu0
  %840 = vmatprep.subr.bf16.mxu0 %v545
  %841 = vmatpush1.bf16.msra.mxu0 %v544
  %842 = vmatprep.subr.bf16.mxu0 %v549
  %843 = vmatpush1.bf16.msra.mxu0 %v548
  %844 = vmatprep.subr.bf16.mxu0 %v553
  %845 = vmatpush1.bf16.msra.mxu0 %v552
  %846 = vmatprep.subr.bf16.mxu0 %v557
  %847 = vmatpush1.bf16.msra.mxu0 %v556
  %848 = vmatprep.subr.bf16.mxu0 %v561
  %849 = vmatpush1.bf16.msra.mxu0 %v560
  %850 = vmatprep.subr.bf16.mxu0 %v565
  %851 = vmatpush1.bf16.msra.mxu0 %v564
  %852 = vmatprep.subr.bf16.mxu0 %v569
  %853 = vmatpush1.bf16.msra.mxu0 %v568
  %854 = vmatprep.subr.bf16.mxu0 %v573
  %855 = vmatpush1.bf16.msra.mxu0 %v572
  %856 = vmatprep.subr.bf16.mxu0 %v577
  %857 = vmatpush1.bf16.msra.mxu0 %v576
  %858 = vmatprep.subr.bf16.mxu0 %v581
  %859 = vmatpush1.bf16.msra.mxu0 %v580
  %860 = vmatprep.subr.bf16.mxu0 %v585
  %861 = vmatpush1.bf16.msra.mxu0 %v584
  %862 = vmatprep.subr.bf16.mxu0 %v589
  %863 = vmatpush1.bf16.msra.mxu0 %v588
  %864 = vmatprep.subr.bf16.mxu0 %v593
  %865 = vmatpush1.bf16.msra.mxu0 %v592
  %866 = vmatprep.subr.bf16.mxu0 %v597
  %867 = vmatpush1.bf16.msra.mxu0 %v596
  %868 = vmatprep.subr.bf16.mxu0 %v601
  %869 = vmatpush1.bf16.msra.mxu0 %v600
  %870 = vmatprep.subr.bf16.mxu0 %v605
  %871 = vmatpush1.bf16.msra.mxu0 %v604
  %872 = vmatprep.mubr.bf16.mxu0 %v146
  %873 = vmatmul.mubr.bf16.gmra.mrb[0].mxu0 %v138
  %v874 = vpop.f32.mrb[0].mxu0
  %v875 = vadd.f32 0.0, %v874
  %v876 = vpop.f32.mrb[0].mxu0
  %v877 = vadd.f32 0.0, %v876
  %v878 = vpop.f32.mrb[0].mxu0
  %v879 = vadd.f32 0.0, %v878
  %v880 = vpop.f32.mrb[0].mxu0
  %v881 = vadd.f32 0.0, %v880
  %882 = vmatprep.mubr.bf16.mxu0 %v147
  %883 = vmatmul.mubr.bf16.gmra.mrb[0].mxu0 %v139
  %v884 = vpop.f32.mrb[0].mxu0
  %v885 = vadd.f32 0.0, %v884
  %v886 = vpop.f32.mrb[0].mxu0
  %v887 = vadd.f32 0.0, %v886
  %v888 = vpop.f32.mrb[0].mxu0
  %v889 = vadd.f32 0.0, %v888
  %v890 = vpop.f32.mrb[0].mxu0
  %v891 = vadd.f32 0.0, %v890
  %892 = vdwg.mxu0
  %893 = vmatprep.subr.bf16.mxu0 %v609
  %894 = vmatpush1.bf16.msra.mxu0 %v608
  %895 = vmatprep.subr.bf16.mxu0 %v613
  %896 = vmatpush1.bf16.msra.mxu0 %v612
  %897 = vmatprep.subr.bf16.mxu0 %v617
  %898 = vmatpush1.bf16.msra.mxu0 %v616
  %899 = vmatprep.subr.bf16.mxu0 %v621
  %900 = vmatpush1.bf16.msra.mxu0 %v620
  %901 = vmatprep.subr.bf16.mxu0 %v625
  %902 = vmatpush1.bf16.msra.mxu0 %v624
  %903 = vmatprep.subr.bf16.mxu0 %v629
  %904 = vmatpush1.bf16.msra.mxu0 %v628
  %905 = vmatprep.subr.bf16.mxu0 %v633
  %906 = vmatpush1.bf16.msra.mxu0 %v632
  %907 = vmatprep.subr.bf16.mxu0 %v637
  %908 = vmatpush1.bf16.msra.mxu0 %v636
  %909 = vmatprep.subr.bf16.mxu0 0
  %910 = vmatpush1.bf16.msra.mxu0 0
  %911 = vmatprep.subr.bf16.mxu0 0
  %912 = vmatpush1.bf16.msra.mxu0 0
  %913 = vmatprep.subr.bf16.mxu0 0
  %914 = vmatpush1.bf16.msra.mxu0 0
  %915 = vmatprep.subr.bf16.mxu0 0
  %916 = vmatpush1.bf16.msra.mxu0 0
  %917 = vmatprep.subr.bf16.mxu0 0
  %918 = vmatpush1.bf16.msra.mxu0 0
  %919 = vmatprep.subr.bf16.mxu0 0
  %920 = vmatpush1.bf16.msra.mxu0 0
  %921 = vmatprep.subr.bf16.mxu0 0
  %922 = vmatpush1.bf16.msra.mxu0 0
  %923 = vmatprep.subr.bf16.mxu0 0
  %924 = vmatpush1.bf16.msra.mxu0 0
  %925 = vmatprep.mubr.bf16.mxu0 0
  %926 = vmatmul.mubr.bf16.gmra.mrb[0].mxu0 %v154
  %v927 = vpop.f32.mrb[0].mxu0
  %v928 = vadd.f32 %v875, %v927
  %v929 = vpop.f32.mrb[0].mxu0
  %v930 = vadd.f32 %v877, %v929
  %v931 = vpop.f32.mrb[0].mxu0
  %v932 = vadd.f32 %v879, %v931
  %v933 = vpop.f32.mrb[0].mxu0
  %v934 = vadd.f32 %v881, %v933
  %935 = vmatprep.mubr.bf16.mxu0 0
  %936 = vmatmul.mubr.bf16.gmra.mrb[0].mxu0 %v155
  %v937 = vpop.f32.mrb[0].mxu0
  %v938 = vadd.f32 %v885, %v937
  %v939 = vpop.f32.mrb[0].mxu0
  %v940 = vadd.f32 %v887, %v939
  %v941 = vpop.f32.mrb[0].mxu0
  %v942 = vadd.f32 %v889, %v941
  %v943 = vpop.f32.mrb[0].mxu0
  %v944 = vadd.f32 %v891, %v943
  %945 = vdwg.mxu0
  %v946 = vadd.f32 %v822, %v826
  %v947 = vadd.f32 %v946, %v832
  %v948 = vadd.f32 %v947, %v836
  %v949 = vrot.slane %v948, 4
  %v950 = vadd.f32 %v948, %v949
  %v951 = vrot.slane %v950, 2
  %v952 = vadd.f32 %v950, %v951
  %v953 = vrot.slane %v952, 1
  %v954 = vadd.f32 %v952, %v953
  %v955 = vadd.f32 %v824, %v828
  %v956 = vadd.f32 %v955, %v834
  %v957 = vadd.f32 %v956, %v838
  %v958 = vrot.slane %v957, 4
  %v959 = vadd.f32 %v957, %v958
  %v960 = vrot.slane %v959, 2
  %v961 = vadd.f32 %v959, %v960
  %v962 = vrot.slane %v961, 1
  %v963 = vadd.f32 %v961, %v962
  %v964 = vadd.f32 %v928, %v932
  %v965 = vadd.f32 %v964, %v938
  %v966 = vadd.f32 %v965, %v942
  %v967 = vrot.slane %v966, 4
  %v968 = vadd.f32 %v966, %v967
  %v969 = vrot.slane %v968, 2
  %v970 = vadd.f32 %v968, %v969
  %v971 = vrot.slane %v970, 1
  %v972 = vadd.f32 %v970, %v971
  %v973 = vadd.f32 %v930, %v934
  %v974 = vadd.f32 %v973, %v940
  %v975 = vadd.f32 %v974, %v944
  %v976 = vrot.slane %v975, 4
  %v977 = vadd.f32 %v975, %v976
  %v978 = vrot.slane %v977, 2
  %v979 = vadd.f32 %v977, %v978
  %v980 = vrot.slane %v979, 1
  %v981 = vadd.f32 %v979, %v980
  %v982 = vmul.f32 %v822, %v822
  %v983 = vmul.f32 %v824, %v824
  %v984 = vmul.f32 %v928, %v928
  %v985 = vmul.f32 %v930, %v930
  %v986 = vmul.f32 %v826, %v826
  %v987 = vmul.f32 %v828, %v828
  %v988 = vmul.f32 %v932, %v932
  %v989 = vmul.f32 %v934, %v934
  %v990 = vmul.f32 %v832, %v832
  %v991 = vmul.f32 %v834, %v834
  %v992 = vmul.f32 %v938, %v938
  %v993 = vmul.f32 %v940, %v940
  %v994 = vmul.f32 %v836, %v836
  %v995 = vmul.f32 %v838, %v838
  %v996 = vmul.f32 %v942, %v942
  %v997 = vmul.f32 %v944, %v944
  %v998 = vadd.f32 %v982, %v986
  %v999 = vadd.f32 %v998, %v990
  %v1000 = vadd.f32 %v999, %v994
  %v1001 = vrot.slane %v1000, 4
  %v1002 = vadd.f32 %v1000, %v1001
  %v1003 = vrot.slane %v1002, 2
  %v1004 = vadd.f32 %v1002, %v1003
  %v1005 = vrot.slane %v1004, 1
  %v1006 = vadd.f32 %v1004, %v1005
  %v1007 = vadd.f32 %v983, %v987
  %v1008 = vadd.f32 %v1007, %v991
  %v1009 = vadd.f32 %v1008, %v995
  %v1010 = vrot.slane %v1009, 4
  %v1011 = vadd.f32 %v1009, %v1010
  %v1012 = vrot.slane %v1011, 2
  %v1013 = vadd.f32 %v1011, %v1012
  %v1014 = vrot.slane %v1013, 1
  %v1015 = vadd.f32 %v1013, %v1014
  %v1016 = vadd.f32 %v984, %v988
  %v1017 = vadd.f32 %v1016, %v992
  %v1018 = vadd.f32 %v1017, %v996
  %v1019 = vrot.slane %v1018, 4
  %v1020 = vadd.f32 %v1018, %v1019
  %v1021 = vrot.slane %v1020, 2
  %v1022 = vadd.f32 %v1020, %v1021
  %v1023 = vrot.slane %v1022, 1
  %v1024 = vadd.f32 %v1022, %v1023
  %v1025 = vadd.f32 %v985, %v989
  %v1026 = vadd.f32 %v1025, %v993
  %v1027 = vadd.f32 %v1026, %v997
  %v1028 = vrot.slane %v1027, 4
  %v1029 = vadd.f32 %v1027, %v1028
  %v1030 = vrot.slane %v1029, 2
  %v1031 = vadd.f32 %v1029, %v1030
  %v1032 = vrot.slane %v1031, 1
  %v1033 = vadd.f32 %v1031, %v1032
  %v1034 = vld [vmem:[%s7] sm:$0xff]
  %v1035 = vld [vmem:[%s7 + $0x8] sm:$0xff]
  %v1036 = vld [vmem:[%s7 + $0x10] sm:$0xff]
  %v1037 = vld [vmem:[%s7 + $0x18] sm:$0xff]
  %v1038 = vld [vmem:[%s7 + $0x20] sm:$0xff]
  %v1039 = vld [vmem:[%s7 + $0x28] sm:$0xff]
  %v1040 = vld [vmem:[%s7 + $0x30] sm:$0xff]
  %v1041 = vld [vmem:[%s7 + $0x38] sm:$0xff]
  %v1042 = vld [vmem:[%s7 + $0x40] sm:$0xff]
  %v1043 = vld [vmem:[%s7 + $0x48] sm:$0xff]
  %v1044 = vld [vmem:[%s7 + $0x50] sm:$0xff]
  %v1045 = vld [vmem:[%s7 + $0x58] sm:$0xff]
  %v1046 = vld [vmem:[%s7 + $0x60] sm:$0xff]
  %v1047 = vld [vmem:[%s7 + $0x68] sm:$0xff]
  %v1048 = vld [vmem:[%s7 + $0x70] sm:$0xff]
  %v1049 = vld [vmem:[%s7 + $0x78] sm:$0xff]
  %v1050 = vld [vmem:[%s7 + $0x80] sm:$0xff]
  %v1051 = vld [vmem:[%s7 + $0x88] sm:$0xff]
  %v1052 = vld [vmem:[%s7 + $0x90] sm:$0xff]
  %v1053 = vld [vmem:[%s7 + $0x98] sm:$0xff]
  %v1054 = vld [vmem:[%s7 + $0xa0] sm:$0xff]
  %v1055 = vld [vmem:[%s7 + $0xa8] sm:$0xff]
  %v1056 = vld [vmem:[%s7 + $0xb0] sm:$0xff]
  %v1057 = vld [vmem:[%s7 + $0xb8] sm:$0xff]
  %v1058 = vld [vmem:[%s7 + $0xc0] sm:$0xff]
  %v1059 = vld [vmem:[%s7 + $0xc8] sm:$0xff]
  %v1060 = vld [vmem:[%s7 + $0xd0] sm:$0xff]
  %v1061 = vld [vmem:[%s7 + $0xd8] sm:$0xff]
  %v1062 = vld [vmem:[%s7 + $0xe0] sm:$0xff]
  %v1063 = vld [vmem:[%s7 + $0xe8] sm:$0xff]
  %v1064 = vld [vmem:[%s7 + $0xf0] sm:$0xff]
  %v1065 = vld [vmem:[%s7 + $0xf8] sm:$0xff]
  %v1066 = vld [vmem:[%s7 + $0x100] sm:$0xff]
  %v1067 = vld [vmem:[%s7 + $0x108] sm:$0xff]
  %v1068 = vld [vmem:[%s7 + $0x110] sm:$0xff]
  %v1069 = vld [vmem:[%s7 + $0x118] sm:$0xff]
  %v1070 = vld [vmem:[%s7 + $0x120] sm:$0xff]
  %v1071 = vld [vmem:[%s7 + $0x128] sm:$0xff]
  %v1072 = vld [vmem:[%s7 + $0x130] sm:$0xff]
  %v1073 = vld [vmem:[%s7 + $0x138] sm:$0xff]
  %v1074 = vld [vmem:[%s7 + $0x140] sm:$0xff]
  %v1075 = vld [vmem:[%s7 + $0x148] sm:$0xff]
  %v1076 = vld [vmem:[%s7 + $0x150] sm:$0xff]
  %v1077 = vld [vmem:[%s7 + $0x158] sm:$0xff]
  %v1078 = vld [vmem:[%s7 + $0x160] sm:$0xff]
  %v1079 = vld [vmem:[%s7 + $0x168] sm:$0xff]
  %v1080 = vld [vmem:[%s7 + $0x170] sm:$0xff]
  %v1081 = vld [vmem:[%s7 + $0x178] sm:$0xff]
  %v1082 = vld [vmem:[%s7 + $0x180] sm:$0xff]
  %v1083 = vld [vmem:[%s7 + $0x188] sm:$0xff]
  %v1084 = vld [vmem:[%s7 + $0x190] sm:$0xff]
  %v1085 = vld [vmem:[%s7 + $0x198] sm:$0xff]
  %v1086 = vld [vmem:[%s7 + $0x1a0] sm:$0xff]
  %v1087 = vld [vmem:[%s7 + $0x1a8] sm:$0xff]
  %v1088 = vld [vmem:[%s7 + $0x1b0] sm:$0xff]
  %v1089 = vld [vmem:[%s7 + $0x1b8] sm:$0xff]
  %v1090 = vld [vmem:[%s7 + $0x1c0] sm:$0xff]
  %v1091 = vld [vmem:[%s7 + $0x1c8] sm:$0xff]
  %v1092 = vld [vmem:[%s7 + $0x1d0] sm:$0xff]
  %v1093 = vld [vmem:[%s7 + $0x1d8] sm:$0xff]
  %v1094 = vld [vmem:[%s7 + $0x1e0] sm:$0xff]
  %v1095 = vld [vmem:[%s7 + $0x1e8] sm:$0xff]
  %v1096 = vld [vmem:[%s7 + $0x1f0] sm:$0xff]
  %v1097 = vld [vmem:[%s7 + $0x1f8] sm:$0xff]
  %1098 = vmatprep.subr.mxu0 0.0
  %1099 = vmatpush1.msra.mxu0 %v1034
  %1100 = vmatprep.subr.mxu0 0.0
  %1101 = vmatpush1.msra.mxu0 %v1035
  %1102 = vmatprep.subr.mxu0 0.0
  %1103 = vmatpush1.msra.mxu0 %v1036
  %1104 = vmatprep.subr.mxu0 0.0
  %1105 = vmatpush1.msra.mxu0 %v1037
  %1106 = vmatprep.subr.mxu0 0.0
  %1107 = vmatpush1.msra.mxu0 %v1038
  %1108 = vmatprep.subr.mxu0 0.0
  %1109 = vmatpush1.msra.mxu0 %v1039
  %1110 = vmatprep.subr.mxu0 0.0
  %1111 = vmatpush1.msra.mxu0 %v1040
  %1112 = vmatprep.subr.mxu0 0.0
  %1113 = vmatpush1.msra.mxu0 %v1041
  %1114 = vmatprep.subr.mxu0 0.0
  %1115 = vmatpush1.msra.mxu0 %v1042
  %1116 = vmatprep.subr.mxu0 0.0
  %1117 = vmatpush1.msra.mxu0 %v1043
  %1118 = vmatprep.subr.mxu0 0.0
  %1119 = vmatpush1.msra.mxu0 %v1044
  %1120 = vmatprep.subr.mxu0 0.0
  %1121 = vmatpush1.msra.mxu0 %v1045
  %1122 = vmatprep.subr.mxu0 0.0
  %1123 = vmatpush1.msra.mxu0 %v1046
  %1124 = vmatprep.subr.mxu0 0.0
  %1125 = vmatpush1.msra.mxu0 %v1047
  %1126 = vmatprep.subr.mxu0 0.0
  %1127 = vmatpush1.msra.mxu0 %v1048
  %1128 = vmatprep.subr.mxu0 0.0
  %1129 = vmatpush1.msra.mxu0 %v1049
  %1130 = vmatprep.subr.mxu0 0.0
  %1131 = vmatpush1.msra.mxu0 %v1050
  %1132 = vmatprep.subr.mxu0 0.0
  %1133 = vmatpush1.msra.mxu0 %v1051
  %1134 = vmatprep.subr.mxu0 0.0
  %1135 = vmatpush1.msra.mxu0 %v1052
  %1136 = vmatprep.subr.mxu0 0.0
  %1137 = vmatpush1.msra.mxu0 %v1053
  %1138 = vmatprep.subr.mxu0 0.0
  %1139 = vmatpush1.msra.mxu0 %v1054
  %1140 = vmatprep.subr.mxu0 0.0
  %1141 = vmatpush1.msra.mxu0 %v1055
  %1142 = vmatprep.subr.mxu0 0.0
  %1143 = vmatpush1.msra.mxu0 %v1056
  %1144 = vmatprep.subr.mxu0 0.0
  %1145 = vmatpush1.msra.mxu0 %v1057
  %1146 = vmatprep.subr.mxu0 0.0
  %1147 = vmatpush1.msra.mxu0 %v1058
  %1148 = vmatprep.subr.mxu0 0.0
  %1149 = vmatpush1.msra.mxu0 %v1059
  %1150 = vmatprep.subr.mxu0 0.0
  %1151 = vmatpush1.msra.mxu0 %v1060
  %1152 = vmatprep.subr.mxu0 0.0
  %1153 = vmatpush1.msra.mxu0 %v1061
  %1154 = vmatprep.subr.mxu0 0.0
  %1155 = vmatpush1.msra.mxu0 %v1062
  %1156 = vmatprep.subr.mxu0 0.0
  %1157 = vmatpush1.msra.mxu0 %v1063
  %1158 = vmatprep.subr.mxu0 0.0
  %1159 = vmatpush1.msra.mxu0 %v1064
  %1160 = vmatprep.subr.mxu0 0.0
  %1161 = vmatpush1.msra.mxu0 %v1065
  %1162 = vmatprep.mubr.f32.mxu0 %v963
  %1163 = vmatmul.mubr.f32.gmra.mrb[0].mxu0 %v954
  %v1164 = vpop.f32.mrb[0].mxu0
  %v1165 = vadd.f32 0.0, %v1164
  %v1166 = vpop.f32.mrb[0].mxu0
  %1167 = vdwg.mxu0
  %1168 = vmatprep.subr.mxu0 0.0
  %1169 = vmatpush1.msra.mxu0 %v1066
  %1170 = vmatprep.subr.mxu0 0.0
  %1171 = vmatpush1.msra.mxu0 %v1067
  %1172 = vmatprep.subr.mxu0 0.0
  %1173 = vmatpush1.msra.mxu0 %v1068
  %1174 = vmatprep.subr.mxu0 0.0
  %1175 = vmatpush1.msra.mxu0 %v1069
  %1176 = vmatprep.subr.mxu0 0.0
  %1177 = vmatpush1.msra.mxu0 %v1070
  %1178 = vmatprep.subr.mxu0 0.0
  %1179 = vmatpush1.msra.mxu0 %v1071
  %1180 = vmatprep.subr.mxu0 0.0
  %1181 = vmatpush1.msra.mxu0 %v1072
  %1182 = vmatprep.subr.mxu0 0.0
  %1183 = vmatpush1.msra.mxu0 %v1073
  %1184 = vmatprep.subr.mxu0 0.0
  %1185 = vmatpush1.msra.mxu0 %v1074
  %1186 = vmatprep.subr.mxu0 0.0
  %1187 = vmatpush1.msra.mxu0 %v1075
  %1188 = vmatprep.subr.mxu0 0.0
  %1189 = vmatpush1.msra.mxu0 %v1076
  %1190 = vmatprep.subr.mxu0 0.0
  %1191 = vmatpush1.msra.mxu0 %v1077
  %1192 = vmatprep.subr.mxu0 0.0
  %1193 = vmatpush1.msra.mxu0 %v1078
  %1194 = vmatprep.subr.mxu0 0.0
  %1195 = vmatpush1.msra.mxu0 %v1079
  %1196 = vmatprep.subr.mxu0 0.0
  %1197 = vmatpush1.msra.mxu0 %v1080
  %1198 = vmatprep.subr.mxu0 0.0
  %1199 = vmatpush1.msra.mxu0 %v1081
  %1200 = vmatprep.subr.mxu0 0.0
  %1201 = vmatpush1.msra.mxu0 %v1082
  %1202 = vmatprep.subr.mxu0 0.0
  %1203 = vmatpush1.msra.mxu0 %v1083
  %1204 = vmatprep.subr.mxu0 0.0
  %1205 = vmatpush1.msra.mxu0 %v1084
  %1206 = vmatprep.subr.mxu0 0.0
  %1207 = vmatpush1.msra.mxu0 %v1085
  %1208 = vmatprep.subr.mxu0 0.0
  %1209 = vmatpush1.msra.mxu0 %v1086
  %1210 = vmatprep.subr.mxu0 0.0
  %1211 = vmatpush1.msra.mxu0 %v1087
  %1212 = vmatprep.subr.mxu0 0.0
  %1213 = vmatpush1.msra.mxu0 %v1088
  %1214 = vmatprep.subr.mxu0 0.0
  %1215 = vmatpush1.msra.mxu0 %v1089
  %1216 = vmatprep.subr.mxu0 0.0
  %1217 = vmatpush1.msra.mxu0 %v1090
  %1218 = vmatprep.subr.mxu0 0.0
  %1219 = vmatpush1.msra.mxu0 %v1091
  %1220 = vmatprep.subr.mxu0 0.0
  %1221 = vmatpush1.msra.mxu0 %v1092
  %1222 = vmatprep.subr.mxu0 0.0
  %1223 = vmatpush1.msra.mxu0 %v1093
  %1224 = vmatprep.subr.mxu0 0.0
  %1225 = vmatpush1.msra.mxu0 %v1094
  %1226 = vmatprep.subr.mxu0 0.0
  %1227 = vmatpush1.msra.mxu0 %v1095
  %1228 = vmatprep.subr.mxu0 0.0
  %1229 = vmatpush1.msra.mxu0 %v1096
  %1230 = vmatprep.subr.mxu0 0.0
  %1231 = vmatpush1.msra.mxu0 %v1097
  %1232 = vmatprep.mubr.f32.mxu0 %v981
  %1233 = vmatmul.mubr.f32.gmra.mrb[0].mxu0 %v972
  %v1234 = vpop.f32.mrb[0].mxu0
  %v1235 = vadd.f32 %v1165, %v1234
  %v1236 = vpop.f32.mrb[0].mxu0
  %1237 = vdwg.mxu0
  %1238 = vmatprep.subr.mxu0 0.0
  %1239 = vmatpush1.msra.mxu0 %v1034
  %1240 = vmatprep.subr.mxu0 0.0
  %1241 = vmatpush1.msra.mxu0 %v1035
  %1242 = vmatprep.subr.mxu0 0.0
  %1243 = vmatpush1.msra.mxu0 %v1036
  %1244 = vmatprep.subr.mxu0 0.0
  %1245 = vmatpush1.msra.mxu0 %v1037
  %1246 = vmatprep.subr.mxu0 0.0
  %1247 = vmatpush1.msra.mxu0 %v1038
  %1248 = vmatprep.subr.mxu0 0.0
  %1249 = vmatpush1.msra.mxu0 %v1039
  %1250 = vmatprep.subr.mxu0 0.0
  %1251 = vmatpush1.msra.mxu0 %v1040
  %1252 = vmatprep.subr.mxu0 0.0
  %1253 = vmatpush1.msra.mxu0 %v1041
  %1254 = vmatprep.subr.mxu0 0.0
  %1255 = vmatpush1.msra.mxu0 %v1042
  %1256 = vmatprep.subr.mxu0 0.0
  %1257 = vmatpush1.msra.mxu0 %v1043
  %1258 = vmatprep.subr.mxu0 0.0
  %1259 = vmatpush1.msra.mxu0 %v1044
  %1260 = vmatprep.subr.mxu0 0.0
  %1261 = vmatpush1.msra.mxu0 %v1045
  %1262 = vmatprep.subr.mxu0 0.0
  %1263 = vmatpush1.msra.mxu0 %v1046
  %1264 = vmatprep.subr.mxu0 0.0
  %1265 = vmatpush1.msra.mxu0 %v1047
  %1266 = vmatprep.subr.mxu0 0.0
  %1267 = vmatpush1.msra.mxu0 %v1048
  %1268 = vmatprep.subr.mxu0 0.0
  %1269 = vmatpush1.msra.mxu0 %v1049
  %1270 = vmatprep.subr.mxu0 0.0
  %1271 = vmatpush1.msra.mxu0 %v1050
  %1272 = vmatprep.subr.mxu0 0.0
  %1273 = vmatpush1.msra.mxu0 %v1051
  %1274 = vmatprep.subr.mxu0 0.0
  %1275 = vmatpush1.msra.mxu0 %v1052
  %1276 = vmatprep.subr.mxu0 0.0
  %1277 = vmatpush1.msra.mxu0 %v1053
  %1278 = vmatprep.subr.mxu0 0.0
  %1279 = vmatpush1.msra.mxu0 %v1054
  %1280 = vmatprep.subr.mxu0 0.0
  %1281 = vmatpush1.msra.mxu0 %v1055
  %1282 = vmatprep.subr.mxu0 0.0
  %1283 = vmatpush1.msra.mxu0 %v1056
  %1284 = vmatprep.subr.mxu0 0.0
  %1285 = vmatpush1.msra.mxu0 %v1057
  %1286 = vmatprep.subr.mxu0 0.0
  %1287 = vmatpush1.msra.mxu0 %v1058
  %1288 = vmatprep.subr.mxu0 0.0
  %1289 = vmatpush1.msra.mxu0 %v1059
  %1290 = vmatprep.subr.mxu0 0.0
  %1291 = vmatpush1.msra.mxu0 %v1060
  %1292 = vmatprep.subr.mxu0 0.0
  %1293 = vmatpush1.msra.mxu0 %v1061
  %1294 = vmatprep.subr.mxu0 0.0
  %1295 = vmatpush1.msra.mxu0 %v1062
  %1296 = vmatprep.subr.mxu0 0.0
  %1297 = vmatpush1.msra.mxu0 %v1063
  %1298 = vmatprep.subr.mxu0 0.0
  %1299 = vmatpush1.msra.mxu0 %v1064
  %1300 = vmatprep.subr.mxu0 0.0
  %1301 = vmatpush1.msra.mxu0 %v1065
  %1302 = vmatprep.mubr.f32.mxu0 %v1015
  %1303 = vmatmul.mubr.f32.gmra.mrb[0].mxu0 %v1006
  %v1304 = vpop.f32.mrb[0].mxu0
  %v1305 = vadd.f32 0.0, %v1304
  %v1306 = vpop.f32.mrb[0].mxu0
  %1307 = vdwg.mxu0
  %1308 = vmatprep.subr.mxu0 0.0
  %1309 = vmatpush1.msra.mxu0 %v1066
  %1310 = vmatprep.subr.mxu0 0.0
  %1311 = vmatpush1.msra.mxu0 %v1067
  %1312 = vmatprep.subr.mxu0 0.0
  %1313 = vmatpush1.msra.mxu0 %v1068
  %1314 = vmatprep.subr.mxu0 0.0
  %1315 = vmatpush1.msra.mxu0 %v1069
  %1316 = vmatprep.subr.mxu0 0.0
  %1317 = vmatpush1.msra.mxu0 %v1070
  %1318 = vmatprep.subr.mxu0 0.0
  %1319 = vmatpush1.msra.mxu0 %v1071
  %1320 = vmatprep.subr.mxu0 0.0
  %1321 = vmatpush1.msra.mxu0 %v1072
  %1322 = vmatprep.subr.mxu0 0.0
  %1323 = vmatpush1.msra.mxu0 %v1073
  %1324 = vmatprep.subr.mxu0 0.0
  %1325 = vmatpush1.msra.mxu0 %v1074
  %1326 = vmatprep.subr.mxu0 0.0
  %1327 = vmatpush1.msra.mxu0 %v1075
  %1328 = vmatprep.subr.mxu0 0.0
  %1329 = vmatpush1.msra.mxu0 %v1076
  %1330 = vmatprep.subr.mxu0 0.0
  %1331 = vmatpush1.msra.mxu0 %v1077
  %1332 = vmatprep.subr.mxu0 0.0
  %1333 = vmatpush1.msra.mxu0 %v1078
  %1334 = vmatprep.subr.mxu0 0.0
  %1335 = vmatpush1.msra.mxu0 %v1079
  %1336 = vmatprep.subr.mxu0 0.0
  %1337 = vmatpush1.msra.mxu0 %v1080
  %1338 = vmatprep.subr.mxu0 0.0
  %1339 = vmatpush1.msra.mxu0 %v1081
  %1340 = vmatprep.subr.mxu0 0.0
  %1341 = vmatpush1.msra.mxu0 %v1082
  %1342 = vmatprep.subr.mxu0 0.0
  %1343 = vmatpush1.msra.mxu0 %v1083
  %1344 = vmatprep.subr.mxu0 0.0
  %1345 = vmatpush1.msra.mxu0 %v1084
  %1346 = vmatprep.subr.mxu0 0.0
  %1347 = vmatpush1.msra.mxu0 %v1085
  %1348 = vmatprep.subr.mxu0 0.0
  %1349 = vmatpush1.msra.mxu0 %v1086
  %1350 = vmatprep.subr.mxu0 0.0
  %1351 = vmatpush1.msra.mxu0 %v1087
  %1352 = vmatprep.subr.mxu0 0.0
  %1353 = vmatpush1.msra.mxu0 %v1088
  %1354 = vmatprep.subr.mxu0 0.0
  %1355 = vmatpush1.msra.mxu0 %v1089
  %1356 = vmatprep.subr.mxu0 0.0
  %1357 = vmatpush1.msra.mxu0 %v1090
  %1358 = vmatprep.subr.mxu0 0.0
  %1359 = vmatpush1.msra.mxu0 %v1091
  %1360 = vmatprep.subr.mxu0 0.0
  %1361 = vmatpush1.msra.mxu0 %v1092
  %1362 = vmatprep.subr.mxu0 0.0
  %1363 = vmatpush1.msra.mxu0 %v1093
  %1364 = vmatprep.subr.mxu0 0.0
  %1365 = vmatpush1.msra.mxu0 %v1094
  %1366 = vmatprep.subr.mxu0 0.0
  %1367 = vmatpush1.msra.mxu0 %v1095
  %1368 = vmatprep.subr.mxu0 0.0
  %1369 = vmatpush1.msra.mxu0 %v1096
  %1370 = vmatprep.subr.mxu0 0.0
  %1371 = vmatpush1.msra.mxu0 %v1097
  %1372 = vmatprep.mubr.f32.mxu0 %v1033
  %1373 = vmatmul.mubr.f32.gmra.mrb[0].mxu0 %v1024
  %v1374 = vpop.f32.mrb[0].mxu0
  %v1375 = vadd.f32 %v1305, %v1374
  %v1376 = vpop.f32.mrb[0].mxu0
  %1377 = vdwg.mxu0
  %v1378 = vmul.f32 %v1235, 0.001953125
  %v1379 = vmul.f32 %v1375, 0.001953125
  %v1380 = vmul.f32 %v1378, %v1378
  %v1381 = vsub.f32 %v1379, %v1380
  %v1382 = vmax.f32 %v1381, 0.0
  %v1383 = vld [vmem:[%s2] sm:$0x1]
  %v1384 = vadd.f32 %v1382, 1e-05
  %v1385 = vrsqrt.pop %v1384
  %v1386 = vmul.f32 %v1383, %v1385
  %v1387 = vld [vmem:[%s3] sm:$0x1]
  %v1388 = vmul.f32 %v1378, %v1386
  %v1389 = vsub.f32 %v1387, %v1388
  %v1390 = vld [vmem:[%s8] sm:$0xff]
  %v1391 = vld [vmem:[%s8 + $0x8] sm:$0xff]
  %v1392 = vld [vmem:[%s8 + $0x10] sm:$0xff]
  %v1393 = vld [vmem:[%s8 + $0x18] sm:$0xff]
  %v1394 = vld [vmem:[%s8 + $0x20] sm:$0xff]
  %v1395 = vld [vmem:[%s8 + $0x28] sm:$0xff]
  %v1396 = vld [vmem:[%s8 + $0x30] sm:$0xff]
  %v1397 = vld [vmem:[%s8 + $0x38] sm:$0xff]
  %v1398 = vld [vmem:[%s8 + $0x40] sm:$0xff]
  %v1399 = vld [vmem:[%s8 + $0x48] sm:$0xff]
  %v1400 = vld [vmem:[%s8 + $0x50] sm:$0xff]
  %v1401 = vld [vmem:[%s8 + $0x58] sm:$0xff]
  %v1402 = vld [vmem:[%s8 + $0x60] sm:$0xff]
  %v1403 = vld [vmem:[%s8 + $0x68] sm:$0xff]
  %v1404 = vld [vmem:[%s8 + $0x70] sm:$0xff]
  %v1405 = vld [vmem:[%s8 + $0x78] sm:$0xff]
  %vm1406 = vcmask 261120
  %v1408 = vsel %vm1406, %v1386, 0
  %1410 = vmatprep.subr.mxu0 %v1391
  %1411 = vmatpush1.msra.mxu0 %v1390
  %1412 = vmatprep.subr.mxu0 %v1395
  %1413 = vmatpush1.msra.mxu0 %v1394
  %1414 = vmatprep.subr.mxu0 %v1399
  %1415 = vmatpush1.msra.mxu0 %v1398
  %1416 = vmatprep.subr.mxu0 %v1403
  %1417 = vmatpush1.msra.mxu0 %v1402
  %1418 = vmatprep.subr.mxu0 0.0
  %1419 = vmatpush1.msra.mxu0 0.0
  %1420 = vmatprep.subr.mxu0 0.0
  %1421 = vmatpush1.msra.mxu0 0.0
  %1422 = vmatprep.subr.mxu0 0.0
  %1423 = vmatpush1.msra.mxu0 0.0
  %1424 = vmatprep.subr.mxu0 0.0
  %1425 = vmatpush1.msra.mxu0 0.0
  %1426 = vmatprep.subr.mxu0 0.0
  %1427 = vmatpush1.msra.mxu0 0.0
  %1428 = vmatprep.subr.mxu0 0.0
  %1429 = vmatpush1.msra.mxu0 0.0
  %1430 = vmatprep.subr.mxu0 0.0
  %1431 = vmatpush1.msra.mxu0 0.0
  %1432 = vmatprep.subr.mxu0 0.0
  %1433 = vmatpush1.msra.mxu0 0.0
  %1434 = vmatprep.subr.mxu0 0.0
  %1435 = vmatpush1.msra.mxu0 0.0
  %1436 = vmatprep.subr.mxu0 0.0
  %1437 = vmatpush1.msra.mxu0 0.0
  %1438 = vmatprep.subr.mxu0 0.0
  %1439 = vmatpush1.msra.mxu0 0.0
  %1440 = vmatprep.subr.mxu0 0.0
  %1441 = vmatpush1.msra.mxu0 0.0
  %1442 = vmatprep.subr.mxu0 0.0
  %1443 = vmatpush1.msra.mxu0 0.0
  %1444 = vmatprep.subr.mxu0 0.0
  %1445 = vmatpush1.msra.mxu0 0.0
  %1446 = vmatprep.subr.mxu0 0.0
  %1447 = vmatpush1.msra.mxu0 0.0
  %1448 = vmatprep.subr.mxu0 0.0
  %1449 = vmatpush1.msra.mxu0 0.0
  %1450 = vmatprep.subr.mxu0 0.0
  %1451 = vmatpush1.msra.mxu0 0.0
  %1452 = vmatprep.subr.mxu0 0.0
  %1453 = vmatpush1.msra.mxu0 0.0
  %1454 = vmatprep.subr.mxu0 0.0
  %1455 = vmatpush1.msra.mxu0 0.0
  %1456 = vmatprep.subr.mxu0 0.0
  %1457 = vmatpush1.msra.mxu0 0.0
  %1458 = vmatprep.subr.mxu0 0.0
  %1459 = vmatpush1.msra.mxu0 0.0
  %1460 = vmatprep.subr.mxu0 0.0
  %1461 = vmatpush1.msra.mxu0 0.0
  %1462 = vmatprep.subr.mxu0 0.0
  %1463 = vmatpush1.msra.mxu0 0.0
  %1464 = vmatprep.subr.mxu0 0.0
  %1465 = vmatpush1.msra.mxu0 0.0
  %1466 = vmatprep.subr.mxu0 0.0
  %1467 = vmatpush1.msra.mxu0 0.0
  %1468 = vmatprep.subr.mxu0 0.0
  %1469 = vmatpush1.msra.mxu0 0.0
  %1470 = vmatprep.subr.mxu0 0.0
  %1471 = vmatpush1.msra.mxu0 0.0
  %1472 = vmatprep.subr.mxu0 0.0
  %1473 = vmatpush1.msra.mxu0 0.0
  %1474 = vmatprep.mubr.f32.mxu0 0.0
  %1475 = vmatmul.mubr.f32.gmra.mrb[0].mxu0 %v1408
  %v1476 = vpop.f32.mrb[0].mxu0
  %v1477 = vadd.f32 0.0, %v1476
  %v1478 = vpop.f32.mrb[0].mxu0
  %v1479 = vadd.f32 0.0, %v1478
  %1480 = vdwg.mxu0
  %1481 = vmatprep.subr.mxu0 %v1393
  %1482 = vmatpush1.msra.mxu0 %v1392
  %1483 = vmatprep.subr.mxu0 %v1397
  %1484 = vmatpush1.msra.mxu0 %v1396
  %1485 = vmatprep.subr.mxu0 %v1401
  %1486 = vmatpush1.msra.mxu0 %v1400
  %1487 = vmatprep.subr.mxu0 %v1405
  %1488 = vmatpush1.msra.mxu0 %v1404
  %1489 = vmatprep.subr.mxu0 0.0
  %1490 = vmatpush1.msra.mxu0 0.0
  %1491 = vmatprep.subr.mxu0 0.0
  %1492 = vmatpush1.msra.mxu0 0.0
  %1493 = vmatprep.subr.mxu0 0.0
  %1494 = vmatpush1.msra.mxu0 0.0
  %1495 = vmatprep.subr.mxu0 0.0
  %1496 = vmatpush1.msra.mxu0 0.0
  %1497 = vmatprep.subr.mxu0 0.0
  %1498 = vmatpush1.msra.mxu0 0.0
  %1499 = vmatprep.subr.mxu0 0.0
  %1500 = vmatpush1.msra.mxu0 0.0
  %1501 = vmatprep.subr.mxu0 0.0
  %1502 = vmatpush1.msra.mxu0 0.0
  %1503 = vmatprep.subr.mxu0 0.0
  %1504 = vmatpush1.msra.mxu0 0.0
  %1505 = vmatprep.subr.mxu0 0.0
  %1506 = vmatpush1.msra.mxu0 0.0
  %1507 = vmatprep.subr.mxu0 0.0
  %1508 = vmatpush1.msra.mxu0 0.0
  %1509 = vmatprep.subr.mxu0 0.0
  %1510 = vmatpush1.msra.mxu0 0.0
  %1511 = vmatprep.subr.mxu0 0.0
  %1512 = vmatpush1.msra.mxu0 0.0
  %1513 = vmatprep.subr.mxu0 0.0
  %1514 = vmatpush1.msra.mxu0 0.0
  %1515 = vmatprep.subr.mxu0 0.0
  %1516 = vmatpush1.msra.mxu0 0.0
  %1517 = vmatprep.subr.mxu0 0.0
  %1518 = vmatpush1.msra.mxu0 0.0
  %1519 = vmatprep.subr.mxu0 0.0
  %1520 = vmatpush1.msra.mxu0 0.0
  %1521 = vmatprep.subr.mxu0 0.0
  %1522 = vmatpush1.msra.mxu0 0.0
  %1523 = vmatprep.subr.mxu0 0.0
  %1524 = vmatpush1.msra.mxu0 0.0
  %1525 = vmatprep.subr.mxu0 0.0
  %1526 = vmatpush1.msra.mxu0 0.0
  %1527 = vmatprep.subr.mxu0 0.0
  %1528 = vmatpush1.msra.mxu0 0.0
  %1529 = vmatprep.subr.mxu0 0.0
  %1530 = vmatpush1.msra.mxu0 0.0
  %1531 = vmatprep.subr.mxu0 0.0
  %1532 = vmatpush1.msra.mxu0 0.0
  %1533 = vmatprep.subr.mxu0 0.0
  %1534 = vmatpush1.msra.mxu0 0.0
  %1535 = vmatprep.subr.mxu0 0.0
  %1536 = vmatpush1.msra.mxu0 0.0
  %1537 = vmatprep.subr.mxu0 0.0
  %1538 = vmatpush1.msra.mxu0 0.0
  %1539 = vmatprep.subr.mxu0 0.0
  %1540 = vmatpush1.msra.mxu0 0.0
  %1541 = vmatprep.subr.mxu0 0.0
  %1542 = vmatpush1.msra.mxu0 0.0
  %1543 = vmatprep.subr.mxu0 0.0
  %1544 = vmatpush1.msra.mxu0 0.0
  %1545 = vmatprep.mubr.f32.mxu0 0.0
  %1546 = vmatmul.mubr.f32.gmra.mrb[0].mxu0 %v1408
  %v1547 = vpop.f32.mrb[0].mxu0
  %v1548 = vadd.f32 0.0, %v1547
  %v1549 = vpop.f32.mrb[0].mxu0
  %v1550 = vadd.f32 0.0, %v1549
  %1551 = vdwg.mxu0
  %v1553 = vsel %vm1406, %v1389, 0
  %1555 = vmatprep.subr.mxu0 %v1391
  %1556 = vmatpush1.msra.mxu0 %v1390
  %1557 = vmatprep.subr.mxu0 %v1395
  %1558 = vmatpush1.msra.mxu0 %v1394
  %1559 = vmatprep.subr.mxu0 %v1399
  %1560 = vmatpush1.msra.mxu0 %v1398
  %1561 = vmatprep.subr.mxu0 %v1403
  %1562 = vmatpush1.msra.mxu0 %v1402
  %1563 = vmatprep.subr.mxu0 0.0
  %1564 = vmatpush1.msra.mxu0 0.0
  %1565 = vmatprep.subr.mxu0 0.0
  %1566 = vmatpush1.msra.mxu0 0.0
  %1567 = vmatprep.subr.mxu0 0.0
  %1568 = vmatpush1.msra.mxu0 0.0
  %1569 = vmatprep.subr.mxu0 0.0
  %1570 = vmatpush1.msra.mxu0 0.0
  %1571 = vmatprep.subr.mxu0 0.0
  %1572 = vmatpush1.msra.mxu0 0.0
  %1573 = vmatprep.subr.mxu0 0.0
  %1574 = vmatpush1.msra.mxu0 0.0
  %1575 = vmatprep.subr.mxu0 0.0
  %1576 = vmatpush1.msra.mxu0 0.0
  %1577 = vmatprep.subr.mxu0 0.0
  %1578 = vmatpush1.msra.mxu0 0.0
  %1579 = vmatprep.subr.mxu0 0.0
  %1580 = vmatpush1.msra.mxu0 0.0
  %1581 = vmatprep.subr.mxu0 0.0
  %1582 = vmatpush1.msra.mxu0 0.0
  %1583 = vmatprep.subr.mxu0 0.0
  %1584 = vmatpush1.msra.mxu0 0.0
  %1585 = vmatprep.subr.mxu0 0.0
  %1586 = vmatpush1.msra.mxu0 0.0
  %1587 = vmatprep.subr.mxu0 0.0
  %1588 = vmatpush1.msra.mxu0 0.0
  %1589 = vmatprep.subr.mxu0 0.0
  %1590 = vmatpush1.msra.mxu0 0.0
  %1591 = vmatprep.subr.mxu0 0.0
  %1592 = vmatpush1.msra.mxu0 0.0
  %1593 = vmatprep.subr.mxu0 0.0
  %1594 = vmatpush1.msra.mxu0 0.0
  %1595 = vmatprep.subr.mxu0 0.0
  %1596 = vmatpush1.msra.mxu0 0.0
  %1597 = vmatprep.subr.mxu0 0.0
  %1598 = vmatpush1.msra.mxu0 0.0
  %1599 = vmatprep.subr.mxu0 0.0
  %1600 = vmatpush1.msra.mxu0 0.0
  %1601 = vmatprep.subr.mxu0 0.0
  %1602 = vmatpush1.msra.mxu0 0.0
  %1603 = vmatprep.subr.mxu0 0.0
  %1604 = vmatpush1.msra.mxu0 0.0
  %1605 = vmatprep.subr.mxu0 0.0
  %1606 = vmatpush1.msra.mxu0 0.0
  %1607 = vmatprep.subr.mxu0 0.0
  %1608 = vmatpush1.msra.mxu0 0.0
  %1609 = vmatprep.subr.mxu0 0.0
  %1610 = vmatpush1.msra.mxu0 0.0
  %1611 = vmatprep.subr.mxu0 0.0
  %1612 = vmatpush1.msra.mxu0 0.0
  %1613 = vmatprep.subr.mxu0 0.0
  %1614 = vmatpush1.msra.mxu0 0.0
  %1615 = vmatprep.subr.mxu0 0.0
  %1616 = vmatpush1.msra.mxu0 0.0
  %1617 = vmatprep.subr.mxu0 0.0
  %1618 = vmatpush1.msra.mxu0 0.0
  %1619 = vmatprep.mubr.f32.mxu0 0.0
  %1620 = vmatmul.mubr.f32.gmra.mrb[0].mxu0 %v1553
  %v1621 = vpop.f32.mrb[0].mxu0
  %v1622 = vadd.f32 0.0, %v1621
  %v1623 = vpop.f32.mrb[0].mxu0
  %v1624 = vadd.f32 0.0, %v1623
  %1625 = vdwg.mxu0
  %1626 = vmatprep.subr.mxu0 %v1393
  %1627 = vmatpush1.msra.mxu0 %v1392
  %1628 = vmatprep.subr.mxu0 %v1397
  %1629 = vmatpush1.msra.mxu0 %v1396
  %1630 = vmatprep.subr.mxu0 %v1401
  %1631 = vmatpush1.msra.mxu0 %v1400
  %1632 = vmatprep.subr.mxu0 %v1405
  %1633 = vmatpush1.msra.mxu0 %v1404
  %1634 = vmatprep.subr.mxu0 0.0
  %1635 = vmatpush1.msra.mxu0 0.0
  %1636 = vmatprep.subr.mxu0 0.0
  %1637 = vmatpush1.msra.mxu0 0.0
  %1638 = vmatprep.subr.mxu0 0.0
  %1639 = vmatpush1.msra.mxu0 0.0
  %1640 = vmatprep.subr.mxu0 0.0
  %1641 = vmatpush1.msra.mxu0 0.0
  %1642 = vmatprep.subr.mxu0 0.0
  %1643 = vmatpush1.msra.mxu0 0.0
  %1644 = vmatprep.subr.mxu0 0.0
  %1645 = vmatpush1.msra.mxu0 0.0
  %1646 = vmatprep.subr.mxu0 0.0
  %1647 = vmatpush1.msra.mxu0 0.0
  %1648 = vmatprep.subr.mxu0 0.0
  %1649 = vmatpush1.msra.mxu0 0.0
  %1650 = vmatprep.subr.mxu0 0.0
  %1651 = vmatpush1.msra.mxu0 0.0
  %1652 = vmatprep.subr.mxu0 0.0
  %1653 = vmatpush1.msra.mxu0 0.0
  %1654 = vmatprep.subr.mxu0 0.0
  %1655 = vmatpush1.msra.mxu0 0.0
  %1656 = vmatprep.subr.mxu0 0.0
  %1657 = vmatpush1.msra.mxu0 0.0
  %1658 = vmatprep.subr.mxu0 0.0
  %1659 = vmatpush1.msra.mxu0 0.0
  %1660 = vmatprep.subr.mxu0 0.0
  %1661 = vmatpush1.msra.mxu0 0.0
  %1662 = vmatprep.subr.mxu0 0.0
  %1663 = vmatpush1.msra.mxu0 0.0
  %1664 = vmatprep.subr.mxu0 0.0
  %1665 = vmatpush1.msra.mxu0 0.0
  %1666 = vmatprep.subr.mxu0 0.0
  %1667 = vmatpush1.msra.mxu0 0.0
  %1668 = vmatprep.subr.mxu0 0.0
  %1669 = vmatpush1.msra.mxu0 0.0
  %1670 = vmatprep.subr.mxu0 0.0
  %1671 = vmatpush1.msra.mxu0 0.0
  %1672 = vmatprep.subr.mxu0 0.0
  %1673 = vmatpush1.msra.mxu0 0.0
  %1674 = vmatprep.subr.mxu0 0.0
  %1675 = vmatpush1.msra.mxu0 0.0
  %1676 = vmatprep.subr.mxu0 0.0
  %1677 = vmatpush1.msra.mxu0 0.0
  %1678 = vmatprep.subr.mxu0 0.0
  %1679 = vmatpush1.msra.mxu0 0.0
  %1680 = vmatprep.subr.mxu0 0.0
  %1681 = vmatpush1.msra.mxu0 0.0
  %1682 = vmatprep.subr.mxu0 0.0
  %1683 = vmatpush1.msra.mxu0 0.0
  %1684 = vmatprep.subr.mxu0 0.0
  %1685 = vmatpush1.msra.mxu0 0.0
  %1686 = vmatprep.subr.mxu0 0.0
  %1687 = vmatpush1.msra.mxu0 0.0
  %1688 = vmatprep.subr.mxu0 0.0
  %1689 = vmatpush1.msra.mxu0 0.0
  %1690 = vmatprep.mubr.f32.mxu0 0.0
  %1691 = vmatmul.mubr.f32.gmra.mrb[0].mxu0 %v1553
  %v1692 = vpop.f32.mrb[0].mxu0
  %v1693 = vadd.f32 0.0, %v1692
  %v1694 = vpop.f32.mrb[0].mxu0
  %v1695 = vadd.f32 0.0, %v1694
  %1696 = vdwg.mxu0
  %v1697 = vlaneseq
  %v1698 = vshrl.u32 %v1697, 7
  %v1699 = vsub.s32 0, %v1698
  %v1700 = vrot.slane %v1477, %v1699
  %v1701 = vlaneseq
  %v1702 = vshrl.u32 %v1701, 7
  %v1703 = vsub.s32 0, %v1702
  %v1704 = vrot.slane %v1479, %v1703
  %v1705 = vlaneseq
  %v1706 = vshrl.u32 %v1705, 7
  %v1707 = vsub.s32 0, %v1706
  %v1708 = vrot.slane %v1548, %v1707
  %v1709 = vlaneseq
  %v1710 = vshrl.u32 %v1709, 7
  %v1711 = vsub.s32 0, %v1710
  %v1712 = vrot.slane %v1550, %v1711
  %v1713 = vmul.f32 %v822, %v1700
  %v1714 = vmul.f32 %v824, %v1704
  %v1715 = vmul.f32 %v928, %v1708
  %v1716 = vmul.f32 %v930, %v1712
  %v1717 = vmul.f32 %v826, %v1700
  %v1718 = vmul.f32 %v828, %v1704
  %v1719 = vmul.f32 %v932, %v1708
  %v1720 = vmul.f32 %v934, %v1712
  %v1721 = vmul.f32 %v832, %v1700
  %v1722 = vmul.f32 %v834, %v1704
  %v1723 = vmul.f32 %v938, %v1708
  %v1724 = vmul.f32 %v940, %v1712
  %v1725 = vmul.f32 %v836, %v1700
  %v1726 = vmul.f32 %v838, %v1704
  %v1727 = vmul.f32 %v942, %v1708
  %v1728 = vmul.f32 %v944, %v1712
  %v1729 = vlaneseq
  %v1730 = vshrl.u32 %v1729, 7
  %v1731 = vsub.s32 0, %v1730
  %v1732 = vrot.slane %v1622, %v1731
  %v1733 = vlaneseq
  %v1734 = vshrl.u32 %v1733, 7
  %v1735 = vsub.s32 0, %v1734
  %v1736 = vrot.slane %v1624, %v1735
  %v1737 = vlaneseq
  %v1738 = vshrl.u32 %v1737, 7
  %v1739 = vsub.s32 0, %v1738
  %v1740 = vrot.slane %v1693, %v1739
  %v1741 = vlaneseq
  %v1742 = vshrl.u32 %v1741, 7
  %v1743 = vsub.s32 0, %v1742
  %v1744 = vrot.slane %v1695, %v1743
  %v1745 = vadd.f32 %v1713, %v1732
  %v1746 = vadd.f32 %v1714, %v1736
  %v1747 = vadd.f32 %v1715, %v1740
  %v1748 = vadd.f32 %v1716, %v1744
  %v1749 = vadd.f32 %v1717, %v1732
  %v1750 = vadd.f32 %v1718, %v1736
  %v1751 = vadd.f32 %v1719, %v1740
  %v1752 = vadd.f32 %v1720, %v1744
  %v1753 = vadd.f32 %v1721, %v1732
  %v1754 = vadd.f32 %v1722, %v1736
  %v1755 = vadd.f32 %v1723, %v1740
  %v1756 = vadd.f32 %v1724, %v1744
  %v1757 = vadd.f32 %v1725, %v1732
  %v1758 = vadd.f32 %v1726, %v1736
  %v1759 = vadd.f32 %v1727, %v1740
  %v1760 = vadd.f32 %v1728, %v1744
  %v1761 = vmax.f32 %v1745, 0.0
  %v1762 = vmax.f32 %v1746, 0.0
  %v1763 = vmax.f32 %v1747, 0.0
  %v1764 = vmax.f32 %v1748, 0.0
  %v1765 = vmax.f32 %v1749, 0.0
  %v1766 = vmax.f32 %v1750, 0.0
  %v1767 = vmax.f32 %v1751, 0.0
  %v1768 = vmax.f32 %v1752, 0.0
  %v1769 = vmax.f32 %v1753, 0.0
  %v1770 = vmax.f32 %v1754, 0.0
  %v1771 = vmax.f32 %v1755, 0.0
  %v1772 = vmax.f32 %v1756, 0.0
  %v1773 = vmax.f32 %v1757, 0.0
  %v1774 = vmax.f32 %v1758, 0.0
  %v1775 = vmax.f32 %v1759, 0.0
  %v1776 = vmax.f32 %v1760, 0.0
  %v1777 = vadd.f32 %v1761, %v1765
  %v1778 = vrot.slane %v1777, 4
  %v1779 = vadd.f32 %v1777, %v1778
  %v1780 = vrot.slane %v1779, 2
  %v1781 = vadd.f32 %v1779, %v1780
  %v1782 = vrot.slane %v1781, 1
  %v1783 = vadd.f32 %v1781, %v1782
  %v1784 = vadd.f32 %v1762, %v1766
  %v1785 = vrot.slane %v1784, 4
  %v1786 = vadd.f32 %v1784, %v1785
  %v1787 = vrot.slane %v1786, 2
  %v1788 = vadd.f32 %v1786, %v1787
  %v1789 = vrot.slane %v1788, 1
  %v1790 = vadd.f32 %v1788, %v1789
  %v1791 = vadd.f32 %v1763, %v1767
  %v1792 = vrot.slane %v1791, 4
  %v1793 = vadd.f32 %v1791, %v1792
  %v1794 = vrot.slane %v1793, 2
  %v1795 = vadd.f32 %v1793, %v1794
  %v1796 = vrot.slane %v1795, 1
  %v1797 = vadd.f32 %v1795, %v1796
  %v1798 = vadd.f32 %v1764, %v1768
  %v1799 = vrot.slane %v1798, 4
  %v1800 = vadd.f32 %v1798, %v1799
  %v1801 = vrot.slane %v1800, 2
  %v1802 = vadd.f32 %v1800, %v1801
  %v1803 = vrot.slane %v1802, 1
  %v1804 = vadd.f32 %v1802, %v1803
  %v1805 = vadd.f32 %v1769, %v1773
  %v1806 = vrot.slane %v1805, 4
  %v1807 = vadd.f32 %v1805, %v1806
  %v1808 = vrot.slane %v1807, 2
  %v1809 = vadd.f32 %v1807, %v1808
  %v1810 = vrot.slane %v1809, 1
  %v1811 = vadd.f32 %v1809, %v1810
  %v1812 = vadd.f32 %v1770, %v1774
  %v1813 = vrot.slane %v1812, 4
  %v1814 = vadd.f32 %v1812, %v1813
  %v1815 = vrot.slane %v1814, 2
  %v1816 = vadd.f32 %v1814, %v1815
  %v1817 = vrot.slane %v1816, 1
  %v1818 = vadd.f32 %v1816, %v1817
  %v1819 = vadd.f32 %v1771, %v1775
  %v1820 = vrot.slane %v1819, 4
  %v1821 = vadd.f32 %v1819, %v1820
  %v1822 = vrot.slane %v1821, 2
  %v1823 = vadd.f32 %v1821, %v1822
  %v1824 = vrot.slane %v1823, 1
  %v1825 = vadd.f32 %v1823, %v1824
  %v1826 = vadd.f32 %v1772, %v1776
  %v1827 = vrot.slane %v1826, 4
  %v1828 = vadd.f32 %v1826, %v1827
  %v1829 = vrot.slane %v1828, 2
  %v1830 = vadd.f32 %v1828, %v1829
  %v1831 = vrot.slane %v1830, 1
  %v1832 = vadd.f32 %v1830, %v1831
  %vm1841 = vcmask 1041409
  %v1842 = vsel %vm1841, %v1811, %v1783
  %v1843 = vsel %vm1841, %v1818, %v1790
  %v1844 = vsel %vm1841, %v1825, %v1797
  %v1845 = vsel %vm1841, %v1832, %v1804
  %1850 = vmatprep.subr.mxu0 0.0
  %1851 = vmatpush1.msra.mxu0 %v1034
  %1852 = vmatprep.subr.mxu0 0.0
  %1853 = vmatpush1.msra.mxu0 %v1035
  %1854 = vmatprep.subr.mxu0 0.0
  %1855 = vmatpush1.msra.mxu0 %v1036
  %1856 = vmatprep.subr.mxu0 0.0
  %1857 = vmatpush1.msra.mxu0 %v1037
  %1858 = vmatprep.subr.mxu0 0.0
  %1859 = vmatpush1.msra.mxu0 %v1038
  %1860 = vmatprep.subr.mxu0 0.0
  %1861 = vmatpush1.msra.mxu0 %v1039
  %1862 = vmatprep.subr.mxu0 0.0
  %1863 = vmatpush1.msra.mxu0 %v1040
  %1864 = vmatprep.subr.mxu0 0.0
  %1865 = vmatpush1.msra.mxu0 %v1041
  %1866 = vmatprep.subr.mxu0 0.0
  %1867 = vmatpush1.msra.mxu0 %v1042
  %1868 = vmatprep.subr.mxu0 0.0
  %1869 = vmatpush1.msra.mxu0 %v1043
  %1870 = vmatprep.subr.mxu0 0.0
  %1871 = vmatpush1.msra.mxu0 %v1044
  %1872 = vmatprep.subr.mxu0 0.0
  %1873 = vmatpush1.msra.mxu0 %v1045
  %1874 = vmatprep.subr.mxu0 0.0
  %1875 = vmatpush1.msra.mxu0 %v1046
  %1876 = vmatprep.subr.mxu0 0.0
  %1877 = vmatpush1.msra.mxu0 %v1047
  %1878 = vmatprep.subr.mxu0 0.0
  %1879 = vmatpush1.msra.mxu0 %v1048
  %1880 = vmatprep.subr.mxu0 0.0
  %1881 = vmatpush1.msra.mxu0 %v1049
  %1882 = vmatprep.subr.mxu0 0.0
  %1883 = vmatpush1.msra.mxu0 %v1050
  %1884 = vmatprep.subr.mxu0 0.0
  %1885 = vmatpush1.msra.mxu0 %v1051
  %1886 = vmatprep.subr.mxu0 0.0
  %1887 = vmatpush1.msra.mxu0 %v1052
  %1888 = vmatprep.subr.mxu0 0.0
  %1889 = vmatpush1.msra.mxu0 %v1053
  %1890 = vmatprep.subr.mxu0 0.0
  %1891 = vmatpush1.msra.mxu0 %v1054
  %1892 = vmatprep.subr.mxu0 0.0
  %1893 = vmatpush1.msra.mxu0 %v1055
  %1894 = vmatprep.subr.mxu0 0.0
  %1895 = vmatpush1.msra.mxu0 %v1056
  %1896 = vmatprep.subr.mxu0 0.0
  %1897 = vmatpush1.msra.mxu0 %v1057
  %1898 = vmatprep.subr.mxu0 0.0
  %1899 = vmatpush1.msra.mxu0 %v1058
  %1900 = vmatprep.subr.mxu0 0.0
  %1901 = vmatpush1.msra.mxu0 %v1059
  %1902 = vmatprep.subr.mxu0 0.0
  %1903 = vmatpush1.msra.mxu0 %v1060
  %1904 = vmatprep.subr.mxu0 0.0
  %1905 = vmatpush1.msra.mxu0 %v1061
  %1906 = vmatprep.subr.mxu0 0.0
  %1907 = vmatpush1.msra.mxu0 %v1062
  %1908 = vmatprep.subr.mxu0 0.0
  %1909 = vmatpush1.msra.mxu0 %v1063
  %1910 = vmatprep.subr.mxu0 0.0
  %1911 = vmatpush1.msra.mxu0 %v1064
  %1912 = vmatprep.subr.mxu0 0.0
  %1913 = vmatpush1.msra.mxu0 %v1065
  %1914 = vmatprep.mubr.f32.mxu0 %v1843
  %1915 = vmatmul.mubr.f32.gmra.mrb[0].mxu0 %v1842
  %v1916 = vpop.f32.mrb[0].mxu0
  %v1917 = vadd.f32 0.0, %v1916
  %v1918 = vpop.f32.mrb[0].mxu0
  %1919 = vdwg.mxu0
  %1920 = vmatprep.subr.mxu0 0.0
  %1921 = vmatpush1.msra.mxu0 %v1066
  %1922 = vmatprep.subr.mxu0 0.0
  %1923 = vmatpush1.msra.mxu0 %v1067
  %1924 = vmatprep.subr.mxu0 0.0
  %1925 = vmatpush1.msra.mxu0 %v1068
  %1926 = vmatprep.subr.mxu0 0.0
  %1927 = vmatpush1.msra.mxu0 %v1069
  %1928 = vmatprep.subr.mxu0 0.0
  %1929 = vmatpush1.msra.mxu0 %v1070
  %1930 = vmatprep.subr.mxu0 0.0
  %1931 = vmatpush1.msra.mxu0 %v1071
  %1932 = vmatprep.subr.mxu0 0.0
  %1933 = vmatpush1.msra.mxu0 %v1072
  %1934 = vmatprep.subr.mxu0 0.0
  %1935 = vmatpush1.msra.mxu0 %v1073
  %1936 = vmatprep.subr.mxu0 0.0
  %1937 = vmatpush1.msra.mxu0 %v1074
  %1938 = vmatprep.subr.mxu0 0.0
  %1939 = vmatpush1.msra.mxu0 %v1075
  %1940 = vmatprep.subr.mxu0 0.0
  %1941 = vmatpush1.msra.mxu0 %v1076
  %1942 = vmatprep.subr.mxu0 0.0
  %1943 = vmatpush1.msra.mxu0 %v1077
  %1944 = vmatprep.subr.mxu0 0.0
  %1945 = vmatpush1.msra.mxu0 %v1078
  %1946 = vmatprep.subr.mxu0 0.0
  %1947 = vmatpush1.msra.mxu0 %v1079
  %1948 = vmatprep.subr.mxu0 0.0
  %1949 = vmatpush1.msra.mxu0 %v1080
  %1950 = vmatprep.subr.mxu0 0.0
  %1951 = vmatpush1.msra.mxu0 %v1081
  %1952 = vmatprep.subr.mxu0 0.0
  %1953 = vmatpush1.msra.mxu0 %v1082
  %1954 = vmatprep.subr.mxu0 0.0
  %1955 = vmatpush1.msra.mxu0 %v1083
  %1956 = vmatprep.subr.mxu0 0.0
  %1957 = vmatpush1.msra.mxu0 %v1084
  %1958 = vmatprep.subr.mxu0 0.0
  %1959 = vmatpush1.msra.mxu0 %v1085
  %1960 = vmatprep.subr.mxu0 0.0
  %1961 = vmatpush1.msra.mxu0 %v1086
  %1962 = vmatprep.subr.mxu0 0.0
  %1963 = vmatpush1.msra.mxu0 %v1087
  %1964 = vmatprep.subr.mxu0 0.0
  %1965 = vmatpush1.msra.mxu0 %v1088
  %1966 = vmatprep.subr.mxu0 0.0
  %1967 = vmatpush1.msra.mxu0 %v1089
  %1968 = vmatprep.subr.mxu0 0.0
  %1969 = vmatpush1.msra.mxu0 %v1090
  %1970 = vmatprep.subr.mxu0 0.0
  %1971 = vmatpush1.msra.mxu0 %v1091
  %1972 = vmatprep.subr.mxu0 0.0
  %1973 = vmatpush1.msra.mxu0 %v1092
  %1974 = vmatprep.subr.mxu0 0.0
  %1975 = vmatpush1.msra.mxu0 %v1093
  %1976 = vmatprep.subr.mxu0 0.0
  %1977 = vmatpush1.msra.mxu0 %v1094
  %1978 = vmatprep.subr.mxu0 0.0
  %1979 = vmatpush1.msra.mxu0 %v1095
  %1980 = vmatprep.subr.mxu0 0.0
  %1981 = vmatpush1.msra.mxu0 %v1096
  %1982 = vmatprep.subr.mxu0 0.0
  %1983 = vmatpush1.msra.mxu0 %v1097
  %1984 = vmatprep.mubr.f32.mxu0 %v1845
  %1985 = vmatmul.mubr.f32.gmra.mrb[0].mxu0 %v1844
  %v1986 = vpop.f32.mrb[0].mxu0
  %v1987 = vadd.f32 %v1917, %v1986
  %v1988 = vpop.f32.mrb[0].mxu0
  %1989 = vdwg.mxu0
  %v1990 = vmul.f32 %v1987, 0.00390625
  %v1991 = vld [vmem:[%s4] sm:$0xff]
  %v1992 = vld [vmem:[%s4 + $0x8] sm:$0xff]
  %v1993 = vld [vmem:[%s4 + $0x10] sm:$0xff]
  %v1994 = vld [vmem:[%s4 + $0x18] sm:$0xff]
  %v1996 = vsel %vm1406, %v1990, 0
  %1998 = vmatprep.subr.mxu0 0.0
  %1999 = vmatpush1.msra.mxu0 %v1991
  %2000 = vmatprep.subr.mxu0 0.0
  %2001 = vmatpush1.msra.mxu0 %v1992
  %2002 = vmatprep.subr.mxu0 0.0
  %2003 = vmatpush1.msra.mxu0 %v1993
  %2004 = vmatprep.subr.mxu0 0.0
  %2005 = vmatpush1.msra.mxu0 %v1994
  %2006 = vmatprep.subr.mxu0 0.0
  %2007 = vmatpush1.msra.mxu0 0.0
  %2008 = vmatprep.subr.mxu0 0.0
  %2009 = vmatpush1.msra.mxu0 0.0
  %2010 = vmatprep.subr.mxu0 0.0
  %2011 = vmatpush1.msra.mxu0 0.0
  %2012 = vmatprep.subr.mxu0 0.0
  %2013 = vmatpush1.msra.mxu0 0.0
  %2014 = vmatprep.subr.mxu0 0.0
  %2015 = vmatpush1.msra.mxu0 0.0
  %2016 = vmatprep.subr.mxu0 0.0
  %2017 = vmatpush1.msra.mxu0 0.0
  %2018 = vmatprep.subr.mxu0 0.0
  %2019 = vmatpush1.msra.mxu0 0.0
  %2020 = vmatprep.subr.mxu0 0.0
  %2021 = vmatpush1.msra.mxu0 0.0
  %2022 = vmatprep.subr.mxu0 0.0
  %2023 = vmatpush1.msra.mxu0 0.0
  %2024 = vmatprep.subr.mxu0 0.0
  %2025 = vmatpush1.msra.mxu0 0.0
  %2026 = vmatprep.subr.mxu0 0.0
  %2027 = vmatpush1.msra.mxu0 0.0
  %2028 = vmatprep.subr.mxu0 0.0
  %2029 = vmatpush1.msra.mxu0 0.0
  %2030 = vmatprep.subr.mxu0 0.0
  %2031 = vmatpush1.msra.mxu0 0.0
  %2032 = vmatprep.subr.mxu0 0.0
  %2033 = vmatpush1.msra.mxu0 0.0
  %2034 = vmatprep.subr.mxu0 0.0
  %2035 = vmatpush1.msra.mxu0 0.0
  %2036 = vmatprep.subr.mxu0 0.0
  %2037 = vmatpush1.msra.mxu0 0.0
  %2038 = vmatprep.subr.mxu0 0.0
  %2039 = vmatpush1.msra.mxu0 0.0
  %2040 = vmatprep.subr.mxu0 0.0
  %2041 = vmatpush1.msra.mxu0 0.0
  %2042 = vmatprep.subr.mxu0 0.0
  %2043 = vmatpush1.msra.mxu0 0.0
  %2044 = vmatprep.subr.mxu0 0.0
  %2045 = vmatpush1.msra.mxu0 0.0
  %2046 = vmatprep.subr.mxu0 0.0
  %2047 = vmatpush1.msra.mxu0 0.0
  %2048 = vmatprep.subr.mxu0 0.0
  %2049 = vmatpush1.msra.mxu0 0.0
  %2050 = vmatprep.subr.mxu0 0.0
  %2051 = vmatpush1.msra.mxu0 0.0
  %2052 = vmatprep.subr.mxu0 0.0
  %2053 = vmatpush1.msra.mxu0 0.0
  %2054 = vmatprep.subr.mxu0 0.0
  %2055 = vmatpush1.msra.mxu0 0.0
  %2056 = vmatprep.subr.mxu0 0.0
  %2057 = vmatpush1.msra.mxu0 0.0
  %2058 = vmatprep.subr.mxu0 0.0
  %2059 = vmatpush1.msra.mxu0 0.0
  %2060 = vmatprep.subr.mxu0 0.0
  %2061 = vmatpush1.msra.mxu0 0.0
  %2062 = vmatprep.mubr.f32.mxu0 0.0
  %2063 = vmatmul.mubr.f32.gmra.mrb[0].mxu0 %v1996
  %v2064 = vpop.f32.mrb[0].mxu0
  %v2065 = vadd.f32 0.0, %v2064
  %v2066 = vpop.f32.mrb[0].mxu0
  %2067 = vdwg.mxu0
  %v2068 = vmax.f32 %v2065, 0.0
  %v2069 = vld [vmem:[%s5] sm:$0x3]
  %vm2070 = vcmask 15360
  %v2072 = vsel %vm2070, %v2068, 0
  %vm2074 = vcmask 1041408
  %v2076 = vsel %vm2074, %v2069, 0
  %2078 = vmatprep.subr.mxu0 0.0
  %2079 = vmatpush1.msra.mxu0 %v2076
  %2080 = vmatprep.subr.mxu0 0.0
  %2081 = vmatpush1.msra.mxu0 0.0
  %2082 = vmatprep.subr.mxu0 0.0
  %2083 = vmatpush1.msra.mxu0 0.0
  %2084 = vmatprep.subr.mxu0 0.0
  %2085 = vmatpush1.msra.mxu0 0.0
  %2086 = vmatprep.subr.mxu0 0.0
  %2087 = vmatpush1.msra.mxu0 0.0
  %2088 = vmatprep.subr.mxu0 0.0
  %2089 = vmatpush1.msra.mxu0 0.0
  %2090 = vmatprep.subr.mxu0 0.0
  %2091 = vmatpush1.msra.mxu0 0.0
  %2092 = vmatprep.subr.mxu0 0.0
  %2093 = vmatpush1.msra.mxu0 0.0
  %2094 = vmatprep.subr.mxu0 0.0
  %2095 = vmatpush1.msra.mxu0 0.0
  %2096 = vmatprep.subr.mxu0 0.0
  %2097 = vmatpush1.msra.mxu0 0.0
  %2098 = vmatprep.subr.mxu0 0.0
  %2099 = vmatpush1.msra.mxu0 0.0
  %2100 = vmatprep.subr.mxu0 0.0
  %2101 = vmatpush1.msra.mxu0 0.0
  %2102 = vmatprep.subr.mxu0 0.0
  %2103 = vmatpush1.msra.mxu0 0.0
  %2104 = vmatprep.subr.mxu0 0.0
  %2105 = vmatpush1.msra.mxu0 0.0
  %2106 = vmatprep.subr.mxu0 0.0
  %2107 = vmatpush1.msra.mxu0 0.0
  %2108 = vmatprep.subr.mxu0 0.0
  %2109 = vmatpush1.msra.mxu0 0.0
  %2110 = vmatprep.subr.mxu0 0.0
  %2111 = vmatpush1.msra.mxu0 0.0
  %2112 = vmatprep.subr.mxu0 0.0
  %2113 = vmatpush1.msra.mxu0 0.0
  %2114 = vmatprep.subr.mxu0 0.0
  %2115 = vmatpush1.msra.mxu0 0.0
  %2116 = vmatprep.subr.mxu0 0.0
  %2117 = vmatpush1.msra.mxu0 0.0
  %2118 = vmatprep.subr.mxu0 0.0
  %2119 = vmatpush1.msra.mxu0 0.0
  %2120 = vmatprep.subr.mxu0 0.0
  %2121 = vmatpush1.msra.mxu0 0.0
  %2122 = vmatprep.subr.mxu0 0.0
  %2123 = vmatpush1.msra.mxu0 0.0
  %2124 = vmatprep.subr.mxu0 0.0
  %2125 = vmatpush1.msra.mxu0 0.0
  %2126 = vmatprep.subr.mxu0 0.0
  %2127 = vmatpush1.msra.mxu0 0.0
  %2128 = vmatprep.subr.mxu0 0.0
  %2129 = vmatpush1.msra.mxu0 0.0
  %2130 = vmatprep.subr.mxu0 0.0
  %2131 = vmatpush1.msra.mxu0 0.0
  %2132 = vmatprep.subr.mxu0 0.0
  %2133 = vmatpush1.msra.mxu0 0.0
  %2134 = vmatprep.subr.mxu0 0.0
  %2135 = vmatpush1.msra.mxu0 0.0
  %2136 = vmatprep.subr.mxu0 0.0
  %2137 = vmatpush1.msra.mxu0 0.0
  %2138 = vmatprep.subr.mxu0 0.0
  %2139 = vmatpush1.msra.mxu0 0.0
  %2140 = vmatprep.subr.mxu0 0.0
  %2141 = vmatpush1.msra.mxu0 0.0
  %2142 = vmatprep.mubr.f32.mxu0 0.0
  %2143 = vmatmul.mubr.f32.gmra.mrb[0].mxu0 %v2072
  %v2144 = vpop.f32.mrb[0].mxu0
  %v2145 = vadd.f32 0.0, %v2144
  %v2146 = vpop.f32.mrb[0].mxu0
  %2147 = vdwg.mxu0
  %v2148 = vxor.u32 %v2145, 2147483648
  %v2149 = vmul.f32 %v2148, 1.442695
  %v2150 = vpow.pop %v2149
  %v2151 = vadd.f32 %v2150, 1.0
  %v2152 = vrcp.pop %v2151
  %v2153 = vmul.f32 1.0, %v2152
  %v2155 = vsel %vm1406, %v2153, 0
  %2157 = vmatprep.subr.mxu0 %v1391
  %2158 = vmatpush1.msra.mxu0 %v1390
  %2159 = vmatprep.subr.mxu0 %v1395
  %2160 = vmatpush1.msra.mxu0 %v1394
  %2161 = vmatprep.subr.mxu0 %v1399
  %2162 = vmatpush1.msra.mxu0 %v1398
  %2163 = vmatprep.subr.mxu0 %v1403
  %2164 = vmatpush1.msra.mxu0 %v1402
  %2165 = vmatprep.subr.mxu0 0.0
  %2166 = vmatpush1.msra.mxu0 0.0
  %2167 = vmatprep.subr.mxu0 0.0
  %2168 = vmatpush1.msra.mxu0 0.0
  %2169 = vmatprep.subr.mxu0 0.0
  %2170 = vmatpush1.msra.mxu0 0.0
  %2171 = vmatprep.subr.mxu0 0.0
  %2172 = vmatpush1.msra.mxu0 0.0
  %2173 = vmatprep.subr.mxu0 0.0
  %2174 = vmatpush1.msra.mxu0 0.0
  %2175 = vmatprep.subr.mxu0 0.0
  %2176 = vmatpush1.msra.mxu0 0.0
  %2177 = vmatprep.subr.mxu0 0.0
  %2178 = vmatpush1.msra.mxu0 0.0
  %2179 = vmatprep.subr.mxu0 0.0
  %2180 = vmatpush1.msra.mxu0 0.0
  %2181 = vmatprep.subr.mxu0 0.0
  %2182 = vmatpush1.msra.mxu0 0.0
  %2183 = vmatprep.subr.mxu0 0.0
  %2184 = vmatpush1.msra.mxu0 0.0
  %2185 = vmatprep.subr.mxu0 0.0
  %2186 = vmatpush1.msra.mxu0 0.0
  %2187 = vmatprep.subr.mxu0 0.0
  %2188 = vmatpush1.msra.mxu0 0.0
  %2189 = vmatprep.subr.mxu0 0.0
  %2190 = vmatpush1.msra.mxu0 0.0
  %2191 = vmatprep.subr.mxu0 0.0
  %2192 = vmatpush1.msra.mxu0 0.0
  %2193 = vmatprep.subr.mxu0 0.0
  %2194 = vmatpush1.msra.mxu0 0.0
  %2195 = vmatprep.subr.mxu0 0.0
  %2196 = vmatpush1.msra.mxu0 0.0
  %2197 = vmatprep.subr.mxu0 0.0
  %2198 = vmatpush1.msra.mxu0 0.0
  %2199 = vmatprep.subr.mxu0 0.0
  %2200 = vmatpush1.msra.mxu0 0.0
  %2201 = vmatprep.subr.mxu0 0.0
  %2202 = vmatpush1.msra.mxu0 0.0
  %2203 = vmatprep.subr.mxu0 0.0
  %2204 = vmatpush1.msra.mxu0 0.0
  %2205 = vmatprep.subr.mxu0 0.0
  %2206 = vmatpush1.msra.mxu0 0.0
  %2207 = vmatprep.subr.mxu0 0.0
  %2208 = vmatpush1.msra.mxu0 0.0
  %2209 = vmatprep.subr.mxu0 0.0
  %2210 = vmatpush1.msra.mxu0 0.0
  %2211 = vmatprep.subr.mxu0 0.0
  %2212 = vmatpush1.msra.mxu0 0.0
  %2213 = vmatprep.subr.mxu0 0.0
  %2214 = vmatpush1.msra.mxu0 0.0
  %2215 = vmatprep.subr.mxu0 0.0
  %2216 = vmatpush1.msra.mxu0 0.0
  %2217 = vmatprep.subr.mxu0 0.0
  %2218 = vmatpush1.msra.mxu0 0.0
  %2219 = vmatprep.subr.mxu0 0.0
  %2220 = vmatpush1.msra.mxu0 0.0
  %2221 = vmatprep.mubr.f32.mxu0 0.0
  %2222 = vmatmul.mubr.f32.gmra.mrb[0].mxu0 %v2155
  %v2223 = vpop.f32.mrb[0].mxu0
  %v2224 = vadd.f32 0.0, %v2223
  %v2225 = vpop.f32.mrb[0].mxu0
  %v2226 = vadd.f32 0.0, %v2225
  %2227 = vdwg.mxu0
  %2228 = vmatprep.subr.mxu0 %v1393
  %2229 = vmatpush1.msra.mxu0 %v1392
  %2230 = vmatprep.subr.mxu0 %v1397
  %2231 = vmatpush1.msra.mxu0 %v1396
  %2232 = vmatprep.subr.mxu0 %v1401
  %2233 = vmatpush1.msra.mxu0 %v1400
  %2234 = vmatprep.subr.mxu0 %v1405
  %2235 = vmatpush1.msra.mxu0 %v1404
  %2236 = vmatprep.subr.mxu0 0.0
  %2237 = vmatpush1.msra.mxu0 0.0
  %2238 = vmatprep.subr.mxu0 0.0
  %2239 = vmatpush1.msra.mxu0 0.0
  %2240 = vmatprep.subr.mxu0 0.0
  %2241 = vmatpush1.msra.mxu0 0.0
  %2242 = vmatprep.subr.mxu0 0.0
  %2243 = vmatpush1.msra.mxu0 0.0
  %2244 = vmatprep.subr.mxu0 0.0
  %2245 = vmatpush1.msra.mxu0 0.0
  %2246 = vmatprep.subr.mxu0 0.0
  %2247 = vmatpush1.msra.mxu0 0.0
  %2248 = vmatprep.subr.mxu0 0.0
  %2249 = vmatpush1.msra.mxu0 0.0
  %2250 = vmatprep.subr.mxu0 0.0
  %2251 = vmatpush1.msra.mxu0 0.0
  %2252 = vmatprep.subr.mxu0 0.0
  %2253 = vmatpush1.msra.mxu0 0.0
  %2254 = vmatprep.subr.mxu0 0.0
  %2255 = vmatpush1.msra.mxu0 0.0
  %2256 = vmatprep.subr.mxu0 0.0
  %2257 = vmatpush1.msra.mxu0 0.0
  %2258 = vmatprep.subr.mxu0 0.0
  %2259 = vmatpush1.msra.mxu0 0.0
  %2260 = vmatprep.subr.mxu0 0.0
  %2261 = vmatpush1.msra.mxu0 0.0
  %2262 = vmatprep.subr.mxu0 0.0
  %2263 = vmatpush1.msra.mxu0 0.0
  %2264 = vmatprep.subr.mxu0 0.0
  %2265 = vmatpush1.msra.mxu0 0.0
  %2266 = vmatprep.subr.mxu0 0.0
  %2267 = vmatpush1.msra.mxu0 0.0
  %2268 = vmatprep.subr.mxu0 0.0
  %2269 = vmatpush1.msra.mxu0 0.0
  %2270 = vmatprep.subr.mxu0 0.0
  %2271 = vmatpush1.msra.mxu0 0.0
  %2272 = vmatprep.subr.mxu0 0.0
  %2273 = vmatpush1.msra.mxu0 0.0
  %2274 = vmatprep.subr.mxu0 0.0
  %2275 = vmatpush1.msra.mxu0 0.0
  %2276 = vmatprep.subr.mxu0 0.0
  %2277 = vmatpush1.msra.mxu0 0.0
  %2278 = vmatprep.subr.mxu0 0.0
  %2279 = vmatpush1.msra.mxu0 0.0
  %2280 = vmatprep.subr.mxu0 0.0
  %2281 = vmatpush1.msra.mxu0 0.0
  %2282 = vmatprep.subr.mxu0 0.0
  %2283 = vmatpush1.msra.mxu0 0.0
  %2284 = vmatprep.subr.mxu0 0.0
  %2285 = vmatpush1.msra.mxu0 0.0
  %2286 = vmatprep.subr.mxu0 0.0
  %2287 = vmatpush1.msra.mxu0 0.0
  %2288 = vmatprep.subr.mxu0 0.0
  %2289 = vmatpush1.msra.mxu0 0.0
  %2290 = vmatprep.subr.mxu0 0.0
  %2291 = vmatpush1.msra.mxu0 0.0
  %2292 = vmatprep.mubr.f32.mxu0 0.0
  %2293 = vmatmul.mubr.f32.gmra.mrb[0].mxu0 %v2155
  %v2294 = vpop.f32.mrb[0].mxu0
  %v2295 = vadd.f32 0.0, %v2294
  %v2296 = vpop.f32.mrb[0].mxu0
  %v2297 = vadd.f32 0.0, %v2296
  %2298 = vdwg.mxu0
  %v2303 = vcombine.low %v2224, %v2226
  %v2304 = vcombine.low %v2295, %v2297
  %v2306 = vunpack.c.l.s4 1966171168
  %v2307 = vunpack.c.0.s8 %v2306
  %v2308 = vlaneseq
  %v2309 = vshrl.u32 %v2308, 7
  %v2310 = vsub.s32 %v2307, %v2309
  %v2311 = vrot.slane %v2303, %v2310
  %v2313 = vunpack.c.l.s4 1966171168
  %v2314 = vunpack.c.0.s8 %v2313
  %v2315 = vlaneseq
  %v2316 = vshrl.u32 %v2315, 7
  %v2317 = vsub.s32 %v2314, %v2316
  %v2318 = vrot.slane %v2304, %v2317
  %v2319 = vcombine.low %v2311, %v2318
  %v2320 = vcombine.high %v2311, %v2318
  %v2322 = vunpack.c.l.s4 1966171168
  %v2323 = vunpack.c.0.s8 %v2322
  %v2324 = vlaneseq
  %v2325 = vshrl.u32 %v2324, 7
  %v2326 = vsub.s32 %v2323, %v2325
  %v2327 = vrot.slane %v2319, %v2326
  %v2329 = vunpack.c.l.s4 1966171168
  %v2330 = vunpack.c.0.s8 %v2329
  %v2331 = vlaneseq
  %v2332 = vshrl.u32 %v2331, 7
  %v2333 = vsub.s32 %v2330, %v2332
  %v2334 = vrot.slane %v2320, %v2333
  %v2335 = vlaneseq
  %v2336 = vshrl.u32 %v2335, 7
  %v2337 = vsub.s32 0, %v2336
  %v2338 = vrot.slane %v2327, %v2337
  %v2339 = vlaneseq
  %v2340 = vshrl.u32 %v2339, 7
  %v2341 = vsub.s32 1, %v2340
  %v2342 = vrot.slane %v2327, %v2341
  %v2343 = vlaneseq
  %v2344 = vshrl.u32 %v2343, 7
  %v2345 = vsub.s32 2, %v2344
  %v2346 = vrot.slane %v2327, %v2345
  %v2347 = vlaneseq
  %v2348 = vshrl.u32 %v2347, 7
  %v2349 = vsub.s32 3, %v2348
  %v2350 = vrot.slane %v2327, %v2349
  %v2351 = vlaneseq
  %v2352 = vshrl.u32 %v2351, 7
  %v2353 = vsub.s32 0, %v2352
  %v2354 = vrot.slane %v2334, %v2353
  %v2355 = vlaneseq
  %v2356 = vshrl.u32 %v2355, 7
  %v2357 = vsub.s32 1, %v2356
  %v2358 = vrot.slane %v2334, %v2357
  %v2359 = vlaneseq
  %v2360 = vshrl.u32 %v2359, 7
  %v2361 = vsub.s32 2, %v2360
  %v2362 = vrot.slane %v2334, %v2361
  %v2363 = vlaneseq
  %v2364 = vshrl.u32 %v2363, 7
  %v2365 = vsub.s32 3, %v2364
  %v2366 = vrot.slane %v2334, %v2365
  %v2375 = vmul.f32 %v1761, %v2338
  %v2376 = vmul.f32 %v1762, %v2342
  %v2377 = vmul.f32 %v1763, %v2346
  %v2378 = vmul.f32 %v1764, %v2350
  %v2379 = vmul.f32 %v1765, %v2338
  %v2380 = vmul.f32 %v1766, %v2342
  %v2381 = vmul.f32 %v1767, %v2346
  %v2382 = vmul.f32 %v1768, %v2350
  %v2383 = vmul.f32 %v1769, %v2354
  %v2384 = vmul.f32 %v1770, %v2358
  %v2385 = vmul.f32 %v1771, %v2362
  %v2386 = vmul.f32 %v1772, %v2366
  %v2387 = vmul.f32 %v1773, %v2354
  %v2388 = vmul.f32 %v1774, %v2358
  %v2389 = vmul.f32 %v1775, %v2362
  %v2390 = vmul.f32 %v1776, %v2366
  %2391 = vrot.lane.b32.xlu0 %v2375, 1
  %v2392 = vpop.permute.xlu0 %2391
  %2393 = vrot.lane.b32.xlu0 %v2379, 1
  %v2394 = vpop.permute.xlu0 %2393
  %2395 = vrot.lane.b32.xlu0 %v2383, 1
  %v2396 = vpop.permute.xlu0 %2395
  %2397 = vrot.lane.b32.xlu0 %v2387, 1
  %v2398 = vpop.permute.xlu0 %2397
  %2399 = vrot.lane.b32.xlu0 %v2376, 1
  %v2400 = vpop.permute.xlu0 %2399
  %2401 = vrot.lane.b32.xlu0 %v2380, 1
  %v2402 = vpop.permute.xlu0 %2401
  %2403 = vrot.lane.b32.xlu0 %v2384, 1
  %v2404 = vpop.permute.xlu0 %2403
  %2405 = vrot.lane.b32.xlu0 %v2388, 1
  %v2406 = vpop.permute.xlu0 %2405
  %2407 = vrot.lane.b32.xlu0 %v2377, 1
  %v2408 = vpop.permute.xlu0 %2407
  %2409 = vrot.lane.b32.xlu0 %v2381, 1
  %v2410 = vpop.permute.xlu0 %2409
  %2411 = vrot.lane.b32.xlu0 %v2385, 1
  %v2412 = vpop.permute.xlu0 %2411
  %2413 = vrot.lane.b32.xlu0 %v2389, 1
  %v2414 = vpop.permute.xlu0 %2413
  %2415 = vrot.lane.b32.xlu0 %v2378, 1
  %v2416 = vpop.permute.xlu0 %2415
  %2417 = vrot.lane.b32.xlu0 %v2382, 1
  %v2418 = vpop.permute.xlu0 %2417
  %2419 = vrot.lane.b32.xlu0 %v2386, 1
  %v2420 = vpop.permute.xlu0 %2419
  %2421 = vrot.lane.b32.xlu0 %v2390, 1
  %v2422 = vpop.permute.xlu0 %2421
  %v2423 = vlaneseq
  %v2424 = vand.u32 %v2423, 127
  %vm2425 = vcmp.lt.s32.totalorder %v2424, 1
  %v2426 = vsel %vm2425, %v2408, %v2416
  %v2427 = vsel %vm2425, %v2410, %v2418
  %v2428 = vsel %vm2425, %v2412, %v2420
  %v2429 = vsel %vm2425, %v2414, %v2422
  %v2430 = vsel %vm2425, %v2400, %v2408
  %v2431 = vsel %vm2425, %v2402, %v2410
  %v2432 = vsel %vm2425, %v2404, %v2412
  %v2433 = vsel %vm2425, %v2406, %v2414
  %v2434 = vsel %vm2425, %v2392, %v2400
  %v2435 = vsel %vm2425, %v2394, %v2402
  %v2436 = vsel %vm2425, %v2396, %v2404
  %v2437 = vsel %vm2425, %v2398, %v2406
  %v2438 = vsel %vm2425, %v2416, %v2392
  %v2439 = vsel %vm2425, %v2418, %v2394
  %v2440 = vsel %vm2425, %v2420, %v2396
  %v2441 = vsel %vm2425, %v2422, %v2398
  %v2442 = vmax.f32 %v2375, %v2438
  %v2443 = vmax.f32 %v2376, %v2434
  %v2444 = vmax.f32 %v2377, %v2430
  %v2445 = vmax.f32 %v2378, %v2426
  %v2446 = vmax.f32 %v2379, %v2439
  %v2447 = vmax.f32 %v2380, %v2435
  %v2448 = vmax.f32 %v2381, %v2431
  %v2449 = vmax.f32 %v2382, %v2427
  %v2450 = vmax.f32 %v2383, %v2440
  %v2451 = vmax.f32 %v2384, %v2436
  %v2452 = vmax.f32 %v2385, %v2432
  %v2453 = vmax.f32 %v2386, %v2428
  %v2454 = vmax.f32 %v2387, %v2441
  %v2455 = vmax.f32 %v2388, %v2437
  %v2456 = vmax.f32 %v2389, %v2433
  %v2457 = vmax.f32 %v2390, %v2429
  %2458 = vrot.lane.b32.xlu0 %v2442, 2
  %v2459 = vpop.permute.xlu0 %2458
  %2460 = vrot.lane.b32.xlu0 %v2446, 2
  %v2461 = vpop.permute.xlu0 %2460
  %2462 = vrot.lane.b32.xlu0 %v2450, 2
  %v2463 = vpop.permute.xlu0 %2462
  %2464 = vrot.lane.b32.xlu0 %v2454, 2
  %v2465 = vpop.permute.xlu0 %2464
  %2466 = vrot.lane.b32.xlu0 %v2443, 2
  %v2467 = vpop.permute.xlu0 %2466
  %2468 = vrot.lane.b32.xlu0 %v2447, 2
  %v2469 = vpop.permute.xlu0 %2468
  %2470 = vrot.lane.b32.xlu0 %v2451, 2
  %v2471 = vpop.permute.xlu0 %2470
  %2472 = vrot.lane.b32.xlu0 %v2455, 2
  %v2473 = vpop.permute.xlu0 %2472
  %2474 = vrot.lane.b32.xlu0 %v2444, 2
  %v2475 = vpop.permute.xlu0 %2474
  %2476 = vrot.lane.b32.xlu0 %v2448, 2
  %v2477 = vpop.permute.xlu0 %2476
  %2478 = vrot.lane.b32.xlu0 %v2452, 2
  %v2479 = vpop.permute.xlu0 %2478
  %2480 = vrot.lane.b32.xlu0 %v2456, 2
  %v2481 = vpop.permute.xlu0 %2480
  %2482 = vrot.lane.b32.xlu0 %v2445, 2
  %v2483 = vpop.permute.xlu0 %2482
  %2484 = vrot.lane.b32.xlu0 %v2449, 2
  %v2485 = vpop.permute.xlu0 %2484
  %2486 = vrot.lane.b32.xlu0 %v2453, 2
  %v2487 = vpop.permute.xlu0 %2486
  %2488 = vrot.lane.b32.xlu0 %v2457, 2
  %v2489 = vpop.permute.xlu0 %2488
  %vm2490 = vcmp.lt.s32.totalorder %v2424, 2
  %v2491 = vsel %vm2490, %v2475, %v2483
  %v2492 = vsel %vm2490, %v2477, %v2485
  %v2493 = vsel %vm2490, %v2479, %v2487
  %v2494 = vsel %vm2490, %v2481, %v2489
  %v2495 = vsel %vm2490, %v2467, %v2475
  %v2496 = vsel %vm2490, %v2469, %v2477
  %v2497 = vsel %vm2490, %v2471, %v2479
  %v2498 = vsel %vm2490, %v2473, %v2481
  %v2499 = vsel %vm2490, %v2459, %v2467
  %v2500 = vsel %vm2490, %v2461, %v2469
  %v2501 = vsel %vm2490, %v2463, %v2471
  %v2502 = vsel %vm2490, %v2465, %v2473
  %v2503 = vsel %vm2490, %v2483, %v2459
  %v2504 = vsel %vm2490, %v2485, %v2461
  %v2505 = vsel %vm2490, %v2487, %v2463
  %v2506 = vsel %vm2490, %v2489, %v2465
  %v2507 = vmax.f32 %v2442, %v2503
  %v2508 = vmax.f32 %v2443, %v2499
  %v2509 = vmax.f32 %v2444, %v2495
  %v2510 = vmax.f32 %v2445, %v2491
  %v2511 = vmax.f32 %v2446, %v2504
  %v2512 = vmax.f32 %v2447, %v2500
  %v2513 = vmax.f32 %v2448, %v2496
  %v2514 = vmax.f32 %v2449, %v2492
  %v2515 = vmax.f32 %v2450, %v2505
  %v2516 = vmax.f32 %v2451, %v2501
  %v2517 = vmax.f32 %v2452, %v2497
  %v2518 = vmax.f32 %v2453, %v2493
  %v2519 = vmax.f32 %v2454, %v2506
  %v2520 = vmax.f32 %v2455, %v2502
  %v2521 = vmax.f32 %v2456, %v2498
  %v2522 = vmax.f32 %v2457, %v2494
  %2523 = vrot.lane.b32.xlu0 %v2507, 4
  %v2524 = vpop.permute.xlu0 %2523
  %2525 = vrot.lane.b32.xlu0 %v2511, 4
  %v2526 = vpop.permute.xlu0 %2525
  %2527 = vrot.lane.b32.xlu0 %v2515, 4
  %v2528 = vpop.permute.xlu0 %2527
  %2529 = vrot.lane.b32.xlu0 %v2519, 4
  %v2530 = vpop.permute.xlu0 %2529
  %2531 = vrot.lane.b32.xlu0 %v2508, 4
  %v2532 = vpop.permute.xlu0 %2531
  %2533 = vrot.lane.b32.xlu0 %v2512, 4
  %v2534 = vpop.permute.xlu0 %2533
  %2535 = vrot.lane.b32.xlu0 %v2516, 4
  %v2536 = vpop.permute.xlu0 %2535
  %2537 = vrot.lane.b32.xlu0 %v2520, 4
  %v2538 = vpop.permute.xlu0 %2537
  %2539 = vrot.lane.b32.xlu0 %v2509, 4
  %v2540 = vpop.permute.xlu0 %2539
  %2541 = vrot.lane.b32.xlu0 %v2513, 4
  %v2542 = vpop.permute.xlu0 %2541
  %2543 = vrot.lane.b32.xlu0 %v2517, 4
  %v2544 = vpop.permute.xlu0 %2543
  %2545 = vrot.lane.b32.xlu0 %v2521, 4
  %v2546 = vpop.permute.xlu0 %2545
  %2547 = vrot.lane.b32.xlu0 %v2510, 4
  %v2548 = vpop.permute.xlu0 %2547
  %2549 = vrot.lane.b32.xlu0 %v2514, 4
  %v2550 = vpop.permute.xlu0 %2549
  %2551 = vrot.lane.b32.xlu0 %v2518, 4
  %v2552 = vpop.permute.xlu0 %2551
  %2553 = vrot.lane.b32.xlu0 %v2522, 4
  %v2554 = vpop.permute.xlu0 %2553
  %vm2555 = vcmp.lt.s32.totalorder %v2424, 4
  %v2556 = vsel %vm2555, %v2540, %v2548
  %v2557 = vsel %vm2555, %v2542, %v2550
  %v2558 = vsel %vm2555, %v2544, %v2552
  %v2559 = vsel %vm2555, %v2546, %v2554
  %v2560 = vsel %vm2555, %v2532, %v2540
  %v2561 = vsel %vm2555, %v2534, %v2542
  %v2562 = vsel %vm2555, %v2536, %v2544
  %v2563 = vsel %vm2555, %v2538, %v2546
  %v2564 = vsel %vm2555, %v2524, %v2532
  %v2565 = vsel %vm2555, %v2526, %v2534
  %v2566 = vsel %vm2555, %v2528, %v2536
  %v2567 = vsel %vm2555, %v2530, %v2538
  %v2568 = vsel %vm2555, %v2548, %v2524
  %v2569 = vsel %vm2555, %v2550, %v2526
  %v2570 = vsel %vm2555, %v2552, %v2528
  %v2571 = vsel %vm2555, %v2554, %v2530
  %v2572 = vmax.f32 %v2507, %v2568
  %v2573 = vmax.f32 %v2508, %v2564
  %v2574 = vmax.f32 %v2509, %v2560
  %v2575 = vmax.f32 %v2510, %v2556
  %v2576 = vmax.f32 %v2511, %v2569
  %v2577 = vmax.f32 %v2512, %v2565
  %v2578 = vmax.f32 %v2513, %v2561
  %v2579 = vmax.f32 %v2514, %v2557
  %v2580 = vmax.f32 %v2515, %v2570
  %v2581 = vmax.f32 %v2516, %v2566
  %v2582 = vmax.f32 %v2517, %v2562
  %v2583 = vmax.f32 %v2518, %v2558
  %v2584 = vmax.f32 %v2519, %v2571
  %v2585 = vmax.f32 %v2520, %v2567
  %v2586 = vmax.f32 %v2521, %v2563
  %v2587 = vmax.f32 %v2522, %v2559
  %2588 = vrot.lane.b32.xlu0 %v2572, 8
  %v2589 = vpop.permute.xlu0 %2588
  %2590 = vrot.lane.b32.xlu0 %v2576, 8
  %v2591 = vpop.permute.xlu0 %2590
  %2592 = vrot.lane.b32.xlu0 %v2580, 8
  %v2593 = vpop.permute.xlu0 %2592
  %2594 = vrot.lane.b32.xlu0 %v2584, 8
  %v2595 = vpop.permute.xlu0 %2594
  %2596 = vrot.lane.b32.xlu0 %v2573, 8
  %v2597 = vpop.permute.xlu0 %2596
  %2598 = vrot.lane.b32.xlu0 %v2577, 8
  %v2599 = vpop.permute.xlu0 %2598
  %2600 = vrot.lane.b32.xlu0 %v2581, 8
  %v2601 = vpop.permute.xlu0 %2600
  %2602 = vrot.lane.b32.xlu0 %v2585, 8
  %v2603 = vpop.permute.xlu0 %2602
  %2604 = vrot.lane.b32.xlu0 %v2574, 8
  %v2605 = vpop.permute.xlu0 %2604
  %2606 = vrot.lane.b32.xlu0 %v2578, 8
  %v2607 = vpop.permute.xlu0 %2606
  %2608 = vrot.lane.b32.xlu0 %v2582, 8
  %v2609 = vpop.permute.xlu0 %2608
  %2610 = vrot.lane.b32.xlu0 %v2586, 8
  %v2611 = vpop.permute.xlu0 %2610
  %2612 = vrot.lane.b32.xlu0 %v2575, 8
  %v2613 = vpop.permute.xlu0 %2612
  %2614 = vrot.lane.b32.xlu0 %v2579, 8
  %v2615 = vpop.permute.xlu0 %2614
  %2616 = vrot.lane.b32.xlu0 %v2583, 8
  %v2617 = vpop.permute.xlu0 %2616
  %2618 = vrot.lane.b32.xlu0 %v2587, 8
  %v2619 = vpop.permute.xlu0 %2618
  %vm2620 = vcmp.lt.s32.totalorder %v2424, 8
  %v2621 = vsel %vm2620, %v2605, %v2613
  %v2622 = vsel %vm2620, %v2607, %v2615
  %v2623 = vsel %vm2620, %v2609, %v2617
  %v2624 = vsel %vm2620, %v2611, %v2619
  %v2625 = vsel %vm2620, %v2597, %v2605
  %v2626 = vsel %vm2620, %v2599, %v2607
  %v2627 = vsel %vm2620, %v2601, %v2609
  %v2628 = vsel %vm2620, %v2603, %v2611
  %v2629 = vsel %vm2620, %v2589, %v2597
  %v2630 = vsel %vm2620, %v2591, %v2599
  %v2631 = vsel %vm2620, %v2593, %v2601
  %v2632 = vsel %vm2620, %v2595, %v2603
  %v2633 = vsel %vm2620, %v2613, %v2589
  %v2634 = vsel %vm2620, %v2615, %v2591
  %v2635 = vsel %vm2620, %v2617, %v2593
  %v2636 = vsel %vm2620, %v2619, %v2595
  %v2637 = vmax.f32 %v2572, %v2633
  %v2638 = vmax.f32 %v2573, %v2629
  %v2639 = vmax.f32 %v2574, %v2625
  %v2640 = vmax.f32 %v2575, %v2621
  %v2641 = vmax.f32 %v2576, %v2634
  %v2642 = vmax.f32 %v2577, %v2630
  %v2643 = vmax.f32 %v2578, %v2626
  %v2644 = vmax.f32 %v2579, %v2622
  %v2645 = vmax.f32 %v2580, %v2635
  %v2646 = vmax.f32 %v2581, %v2631
  %v2647 = vmax.f32 %v2582, %v2627
  %v2648 = vmax.f32 %v2583, %v2623
  %v2649 = vmax.f32 %v2584, %v2636
  %v2650 = vmax.f32 %v2585, %v2632
  %v2651 = vmax.f32 %v2586, %v2628
  %v2652 = vmax.f32 %v2587, %v2624
  %2653 = vrot.lane.b32.xlu0 %v2637, 16
  %v2654 = vpop.permute.xlu0 %2653
  %2655 = vrot.lane.b32.xlu0 %v2641, 16
  %v2656 = vpop.permute.xlu0 %2655
  %2657 = vrot.lane.b32.xlu0 %v2645, 16
  %v2658 = vpop.permute.xlu0 %2657
  %2659 = vrot.lane.b32.xlu0 %v2649, 16
  %v2660 = vpop.permute.xlu0 %2659
  %2661 = vrot.lane.b32.xlu0 %v2638, 16
  %v2662 = vpop.permute.xlu0 %2661
  %2663 = vrot.lane.b32.xlu0 %v2642, 16
  %v2664 = vpop.permute.xlu0 %2663
  %2665 = vrot.lane.b32.xlu0 %v2646, 16
  %v2666 = vpop.permute.xlu0 %2665
  %2667 = vrot.lane.b32.xlu0 %v2650, 16
  %v2668 = vpop.permute.xlu0 %2667
  %2669 = vrot.lane.b32.xlu0 %v2639, 16
  %v2670 = vpop.permute.xlu0 %2669
  %2671 = vrot.lane.b32.xlu0 %v2643, 16
  %v2672 = vpop.permute.xlu0 %2671
  %2673 = vrot.lane.b32.xlu0 %v2647, 16
  %v2674 = vpop.permute.xlu0 %2673
  %2675 = vrot.lane.b32.xlu0 %v2651, 16
  %v2676 = vpop.permute.xlu0 %2675
  %2677 = vrot.lane.b32.xlu0 %v2640, 16
  %v2678 = vpop.permute.xlu0 %2677
  %2679 = vrot.lane.b32.xlu0 %v2644, 16
  %v2680 = vpop.permute.xlu0 %2679
  %2681 = vrot.lane.b32.xlu0 %v2648, 16
  %v2682 = vpop.permute.xlu0 %2681
  %2683 = vrot.lane.b32.xlu0 %v2652, 16
  %v2684 = vpop.permute.xlu0 %2683
  %vm2685 = vcmp.lt.s32.totalorder %v2424, 16
  %v2686 = vsel %vm2685, %v2670, %v2678
  %v2687 = vsel %vm2685, %v2672, %v2680
  %v2688 = vsel %vm2685, %v2674, %v2682
  %v2689 = vsel %vm2685, %v2676, %v2684
  %v2690 = vsel %vm2685, %v2662, %v2670
  %v2691 = vsel %vm2685, %v2664, %v2672
  %v2692 = vsel %vm2685, %v2666, %v2674
  %v2693 = vsel %vm2685, %v2668, %v2676
  %v2694 = vsel %vm2685, %v2654, %v2662
  %v2695 = vsel %vm2685, %v2656, %v2664
  %v2696 = vsel %vm2685, %v2658, %v2666
  %v2697 = vsel %vm2685, %v2660, %v2668
  %v2698 = vsel %vm2685, %v2678, %v2654
  %v2699 = vsel %vm2685, %v2680, %v2656
  %v2700 = vsel %vm2685, %v2682, %v2658
  %v2701 = vsel %vm2685, %v2684, %v2660
  %v2702 = vmax.f32 %v2637, %v2698
  %v2703 = vmax.f32 %v2638, %v2694
  %v2704 = vmax.f32 %v2639, %v2690
  %v2705 = vmax.f32 %v2640, %v2686
  %v2706 = vmax.f32 %v2641, %v2699
  %v2707 = vmax.f32 %v2642, %v2695
  %v2708 = vmax.f32 %v2643, %v2691
  %v2709 = vmax.f32 %v2644, %v2687
  %v2710 = vmax.f32 %v2645, %v2700
  %v2711 = vmax.f32 %v2646, %v2696
  %v2712 = vmax.f32 %v2647, %v2692
  %v2713 = vmax.f32 %v2648, %v2688
  %v2714 = vmax.f32 %v2649, %v2701
  %v2715 = vmax.f32 %v2650, %v2697
  %v2716 = vmax.f32 %v2651, %v2693
  %v2717 = vmax.f32 %v2652, %v2689
  %v2718 = vld [vmem:[%s10] sm:$0xff]
  %v2719 = vld [vmem:[%s10 + $0x8] sm:$0xff]
  %v2720 = vld [vmem:[%s10 + $0x10] sm:$0xff]
  %v2721 = vld [vmem:[%s10 + $0x18] sm:$0xff]
  %v2722 = vld [vmem:[%s10 + $0x20] sm:$0xff]
  %v2723 = vld [vmem:[%s10 + $0x28] sm:$0xff]
  %v2724 = vld [vmem:[%s10 + $0x30] sm:$0xff]
  %v2725 = vld [vmem:[%s10 + $0x38] sm:$0xff]
  %v2726 = vld [vmem:[%s10 + $0x40] sm:$0xff]
  %v2727 = vld [vmem:[%s10 + $0x48] sm:$0xff]
  %v2728 = vld [vmem:[%s10 + $0x50] sm:$0xff]
  %v2729 = vld [vmem:[%s10 + $0x58] sm:$0xff]
  %v2730 = vld [vmem:[%s10 + $0x60] sm:$0xff]
  %v2731 = vld [vmem:[%s10 + $0x68] sm:$0xff]
  %v2732 = vld [vmem:[%s10 + $0x70] sm:$0xff]
  %v2733 = vld [vmem:[%s10 + $0x78] sm:$0xff]
  %v2734 = vld [vmem:[%s10 + $0x80] sm:$0xff]
  %v2735 = vld [vmem:[%s10 + $0x88] sm:$0xff]
  %v2736 = vld [vmem:[%s10 + $0x90] sm:$0xff]
  %v2737 = vld [vmem:[%s10 + $0x98] sm:$0xff]
  %v2738 = vld [vmem:[%s10 + $0xa0] sm:$0xff]
  %v2739 = vld [vmem:[%s10 + $0xa8] sm:$0xff]
  %v2740 = vld [vmem:[%s10 + $0xb0] sm:$0xff]
  %v2741 = vld [vmem:[%s10 + $0xb8] sm:$0xff]
  %v2742 = vld [vmem:[%s10 + $0xc0] sm:$0xff]
  %v2743 = vld [vmem:[%s10 + $0xc8] sm:$0xff]
  %v2744 = vld [vmem:[%s10 + $0xd0] sm:$0xff]
  %v2745 = vld [vmem:[%s10 + $0xd8] sm:$0xff]
  %v2746 = vld [vmem:[%s10 + $0xe0] sm:$0xff]
  %v2747 = vld [vmem:[%s10 + $0xe8] sm:$0xff]
  %v2748 = vld [vmem:[%s10 + $0xf0] sm:$0xff]
  %v2749 = vld [vmem:[%s10 + $0xf8] sm:$0xff]
  %v2750 = vld [vmem:[%s10 + $0x100] sm:$0xff]
  %v2751 = vld [vmem:[%s10 + $0x108] sm:$0xff]
  %v2752 = vld [vmem:[%s10 + $0x110] sm:$0xff]
  %v2753 = vld [vmem:[%s10 + $0x118] sm:$0xff]
  %v2754 = vld [vmem:[%s10 + $0x120] sm:$0xff]
  %v2755 = vld [vmem:[%s10 + $0x128] sm:$0xff]
  %v2756 = vld [vmem:[%s10 + $0x130] sm:$0xff]
  %v2757 = vld [vmem:[%s10 + $0x138] sm:$0xff]
  %v2758 = vld [vmem:[%s10 + $0x140] sm:$0xff]
  %v2759 = vld [vmem:[%s10 + $0x148] sm:$0xff]
  %v2760 = vld [vmem:[%s10 + $0x150] sm:$0xff]
  %v2761 = vld [vmem:[%s10 + $0x158] sm:$0xff]
  %v2762 = vld [vmem:[%s10 + $0x160] sm:$0xff]
  %v2763 = vld [vmem:[%s10 + $0x168] sm:$0xff]
  %v2764 = vld [vmem:[%s10 + $0x170] sm:$0xff]
  %v2765 = vld [vmem:[%s10 + $0x178] sm:$0xff]
  %v2766 = vld [vmem:[%s10 + $0x180] sm:$0xff]
  %v2767 = vld [vmem:[%s10 + $0x188] sm:$0xff]
  %v2768 = vld [vmem:[%s10 + $0x190] sm:$0xff]
  %v2769 = vld [vmem:[%s10 + $0x198] sm:$0xff]
  %v2770 = vld [vmem:[%s10 + $0x1a0] sm:$0xff]
  %v2771 = vld [vmem:[%s10 + $0x1a8] sm:$0xff]
  %v2772 = vld [vmem:[%s10 + $0x1b0] sm:$0xff]
  %v2773 = vld [vmem:[%s10 + $0x1b8] sm:$0xff]
  %v2774 = vld [vmem:[%s10 + $0x1c0] sm:$0xff]
  %v2775 = vld [vmem:[%s10 + $0x1c8] sm:$0xff]
  %v2776 = vld [vmem:[%s10 + $0x1d0] sm:$0xff]
  %v2777 = vld [vmem:[%s10 + $0x1d8] sm:$0xff]
  %v2778 = vld [vmem:[%s10 + $0x1e0] sm:$0xff]
  %v2779 = vld [vmem:[%s10 + $0x1e8] sm:$0xff]
  %v2780 = vld [vmem:[%s10 + $0x1f0] sm:$0xff]
  %v2781 = vld [vmem:[%s10 + $0x1f8] sm:$0xff]
  %v2782 = vld [vmem:[%s11] sm:$0xff]
  %v2783 = vld [vmem:[%s11 + $0x8] sm:$0xff]
  %v2784 = vld [vmem:[%s11 + $0x10] sm:$0xff]
  %v2785 = vld [vmem:[%s11 + $0x18] sm:$0xff]
  %v2786 = vld [vmem:[%s11 + $0x20] sm:$0xff]
  %v2787 = vld [vmem:[%s11 + $0x28] sm:$0xff]
  %v2788 = vld [vmem:[%s11 + $0x30] sm:$0xff]
  %v2789 = vld [vmem:[%s11 + $0x38] sm:$0xff]
  %v2790 = vld [vmem:[%s11 + $0x40] sm:$0xff]
  %v2791 = vld [vmem:[%s11 + $0x48] sm:$0xff]
  %v2792 = vld [vmem:[%s11 + $0x50] sm:$0xff]
  %v2793 = vld [vmem:[%s11 + $0x58] sm:$0xff]
  %v2794 = vld [vmem:[%s11 + $0x60] sm:$0xff]
  %v2795 = vld [vmem:[%s11 + $0x68] sm:$0xff]
  %v2796 = vld [vmem:[%s11 + $0x70] sm:$0xff]
  %v2797 = vld [vmem:[%s11 + $0x78] sm:$0xff]
  %v2798 = vld [vmem:[%s11 + $0x80] sm:$0xff]
  %v2799 = vld [vmem:[%s11 + $0x88] sm:$0xff]
  %v2800 = vld [vmem:[%s11 + $0x90] sm:$0xff]
  %v2801 = vld [vmem:[%s11 + $0x98] sm:$0xff]
  %v2802 = vld [vmem:[%s11 + $0xa0] sm:$0xff]
  %v2803 = vld [vmem:[%s11 + $0xa8] sm:$0xff]
  %v2804 = vld [vmem:[%s11 + $0xb0] sm:$0xff]
  %v2805 = vld [vmem:[%s11 + $0xb8] sm:$0xff]
  %v2806 = vld [vmem:[%s11 + $0xc0] sm:$0xff]
  %v2807 = vld [vmem:[%s11 + $0xc8] sm:$0xff]
  %v2808 = vld [vmem:[%s11 + $0xd0] sm:$0xff]
  %v2809 = vld [vmem:[%s11 + $0xd8] sm:$0xff]
  %v2810 = vld [vmem:[%s11 + $0xe0] sm:$0xff]
  %v2811 = vld [vmem:[%s11 + $0xe8] sm:$0xff]
  %v2812 = vld [vmem:[%s11 + $0xf0] sm:$0xff]
  %v2813 = vld [vmem:[%s11 + $0xf8] sm:$0xff]
  %v2814 = vld [vmem:[%s11 + $0x100] sm:$0xff]
  %v2815 = vld [vmem:[%s11 + $0x108] sm:$0xff]
  %v2816 = vld [vmem:[%s11 + $0x110] sm:$0xff]
  %v2817 = vld [vmem:[%s11 + $0x118] sm:$0xff]
  %v2818 = vld [vmem:[%s11 + $0x120] sm:$0xff]
  %v2819 = vld [vmem:[%s11 + $0x128] sm:$0xff]
  %v2820 = vld [vmem:[%s11 + $0x130] sm:$0xff]
  %v2821 = vld [vmem:[%s11 + $0x138] sm:$0xff]
  %v2822 = vld [vmem:[%s11 + $0x140] sm:$0xff]
  %v2823 = vld [vmem:[%s11 + $0x148] sm:$0xff]
  %v2824 = vld [vmem:[%s11 + $0x150] sm:$0xff]
  %v2825 = vld [vmem:[%s11 + $0x158] sm:$0xff]
  %v2826 = vld [vmem:[%s11 + $0x160] sm:$0xff]
  %v2827 = vld [vmem:[%s11 + $0x168] sm:$0xff]
  %v2828 = vld [vmem:[%s11 + $0x170] sm:$0xff]
  %v2829 = vld [vmem:[%s11 + $0x178] sm:$0xff]
  %v2830 = vld [vmem:[%s11 + $0x180] sm:$0xff]
  %v2831 = vld [vmem:[%s11 + $0x188] sm:$0xff]
  %v2832 = vld [vmem:[%s11 + $0x190] sm:$0xff]
  %v2833 = vld [vmem:[%s11 + $0x198] sm:$0xff]
  %v2834 = vld [vmem:[%s11 + $0x1a0] sm:$0xff]
  %v2835 = vld [vmem:[%s11 + $0x1a8] sm:$0xff]
  %v2836 = vld [vmem:[%s11 + $0x1b0] sm:$0xff]
  %v2837 = vld [vmem:[%s11 + $0x1b8] sm:$0xff]
  %v2838 = vld [vmem:[%s11 + $0x1c0] sm:$0xff]
  %v2839 = vld [vmem:[%s11 + $0x1c8] sm:$0xff]
  %v2840 = vld [vmem:[%s11 + $0x1d0] sm:$0xff]
  %v2841 = vld [vmem:[%s11 + $0x1d8] sm:$0xff]
  %v2842 = vld [vmem:[%s11 + $0x1e0] sm:$0xff]
  %v2843 = vld [vmem:[%s11 + $0x1e8] sm:$0xff]
  %v2844 = vld [vmem:[%s11 + $0x1f0] sm:$0xff]
  %v2845 = vld [vmem:[%s11 + $0x1f8] sm:$0xff]
  %2846 = vmatprep.subr.mxu0 0.0
  %2847 = vmatpush1.msra.mxu0 %v2782
  %2848 = vmatprep.subr.mxu0 0.0
  %2849 = vmatpush1.msra.mxu0 %v2783
  %2850 = vmatprep.subr.mxu0 0.0
  %2851 = vmatpush1.msra.mxu0 %v2784
  %2852 = vmatprep.subr.mxu0 0.0
  %2853 = vmatpush1.msra.mxu0 %v2785
  %2854 = vmatprep.subr.mxu0 0.0
  %2855 = vmatpush1.msra.mxu0 %v2786
  %2856 = vmatprep.subr.mxu0 0.0
  %2857 = vmatpush1.msra.mxu0 %v2787
  %2858 = vmatprep.subr.mxu0 0.0
  %2859 = vmatpush1.msra.mxu0 %v2788
  %2860 = vmatprep.subr.mxu0 0.0
  %2861 = vmatpush1.msra.mxu0 %v2789
  %2862 = vmatprep.subr.mxu0 0.0
  %2863 = vmatpush1.msra.mxu0 %v2790
  %2864 = vmatprep.subr.mxu0 0.0
  %2865 = vmatpush1.msra.mxu0 %v2791
  %2866 = vmatprep.subr.mxu0 0.0
  %2867 = vmatpush1.msra.mxu0 %v2792
  %2868 = vmatprep.subr.mxu0 0.0
  %2869 = vmatpush1.msra.mxu0 %v2793
  %2870 = vmatprep.subr.mxu0 0.0
  %2871 = vmatpush1.msra.mxu0 %v2794
  %2872 = vmatprep.subr.mxu0 0.0
  %2873 = vmatpush1.msra.mxu0 %v2795
  %2874 = vmatprep.subr.mxu0 0.0
  %2875 = vmatpush1.msra.mxu0 %v2796
  %2876 = vmatprep.subr.mxu0 0.0
  %2877 = vmatpush1.msra.mxu0 %v2797
  %2878 = vmatprep.subr.mxu0 0.0
  %2879 = vmatpush1.msra.mxu0 %v2798
  %2880 = vmatprep.subr.mxu0 0.0
  %2881 = vmatpush1.msra.mxu0 %v2799
  %2882 = vmatprep.subr.mxu0 0.0
  %2883 = vmatpush1.msra.mxu0 %v2800
  %2884 = vmatprep.subr.mxu0 0.0
  %2885 = vmatpush1.msra.mxu0 %v2801
  %2886 = vmatprep.subr.mxu0 0.0
  %2887 = vmatpush1.msra.mxu0 %v2802
  %2888 = vmatprep.subr.mxu0 0.0
  %2889 = vmatpush1.msra.mxu0 %v2803
  %2890 = vmatprep.subr.mxu0 0.0
  %2891 = vmatpush1.msra.mxu0 %v2804
  %2892 = vmatprep.subr.mxu0 0.0
  %2893 = vmatpush1.msra.mxu0 %v2805
  %2894 = vmatprep.subr.mxu0 0.0
  %2895 = vmatpush1.msra.mxu0 %v2806
  %2896 = vmatprep.subr.mxu0 0.0
  %2897 = vmatpush1.msra.mxu0 %v2807
  %2898 = vmatprep.subr.mxu0 0.0
  %2899 = vmatpush1.msra.mxu0 %v2808
  %2900 = vmatprep.subr.mxu0 0.0
  %2901 = vmatpush1.msra.mxu0 %v2809
  %2902 = vmatprep.subr.mxu0 0.0
  %2903 = vmatpush1.msra.mxu0 %v2810
  %2904 = vmatprep.subr.mxu0 0.0
  %2905 = vmatpush1.msra.mxu0 %v2811
  %2906 = vmatprep.subr.mxu0 0.0
  %2907 = vmatpush1.msra.mxu0 %v2812
  %2908 = vmatprep.subr.mxu0 0.0
  %2909 = vmatpush1.msra.mxu0 %v2813
  %2910 = vmatprep.mubr.f32.mxu0 %v2703
  %2911 = vmatmul.mubr.f32.gmra.mrb[0].mxu0 %v2702
  %v2912 = vpop.f32.mrb[0].mxu0
  %v2913 = vadd.f32 0.0, %v2912
  %v2914 = vpop.f32.mrb[0].mxu0
  %2915 = vmatprep.mubr.f32.mxu0 %v2707
  %2916 = vmatmul.mubr.f32.gmra.mrb[0].mxu0 %v2706
  %v2917 = vpop.f32.mrb[0].mxu0
  %v2918 = vadd.f32 0.0, %v2917
  %v2919 = vpop.f32.mrb[0].mxu0
  %2920 = vmatprep.mubr.f32.mxu0 %v2711
  %2921 = vmatmul.mubr.f32.gmra.mrb[0].mxu0 %v2710
  %v2922 = vpop.f32.mrb[0].mxu0
  %v2923 = vadd.f32 0.0, %v2922
  %v2924 = vpop.f32.mrb[0].mxu0
  %2925 = vmatprep.mubr.f32.mxu0 %v2715
  %2926 = vmatmul.mubr.f32.gmra.mrb[0].mxu0 %v2714
  %v2927 = vpop.f32.mrb[0].mxu0
  %v2928 = vadd.f32 0.0, %v2927
  %v2929 = vpop.f32.mrb[0].mxu0
  %2930 = vdwg.mxu0
  %2931 = vmatprep.subr.mxu0 0.0
  %2932 = vmatpush1.msra.mxu0 %v2814
  %2933 = vmatprep.subr.mxu0 0.0
  %2934 = vmatpush1.msra.mxu0 %v2815
  %2935 = vmatprep.subr.mxu0 0.0
  %2936 = vmatpush1.msra.mxu0 %v2816
  %2937 = vmatprep.subr.mxu0 0.0
  %2938 = vmatpush1.msra.mxu0 %v2817
  %2939 = vmatprep.subr.mxu0 0.0
  %2940 = vmatpush1.msra.mxu0 %v2818
  %2941 = vmatprep.subr.mxu0 0.0
  %2942 = vmatpush1.msra.mxu0 %v2819
  %2943 = vmatprep.subr.mxu0 0.0
  %2944 = vmatpush1.msra.mxu0 %v2820
  %2945 = vmatprep.subr.mxu0 0.0
  %2946 = vmatpush1.msra.mxu0 %v2821
  %2947 = vmatprep.subr.mxu0 0.0
  %2948 = vmatpush1.msra.mxu0 %v2822
  %2949 = vmatprep.subr.mxu0 0.0
  %2950 = vmatpush1.msra.mxu0 %v2823
  %2951 = vmatprep.subr.mxu0 0.0
  %2952 = vmatpush1.msra.mxu0 %v2824
  %2953 = vmatprep.subr.mxu0 0.0
  %2954 = vmatpush1.msra.mxu0 %v2825
  %2955 = vmatprep.subr.mxu0 0.0
  %2956 = vmatpush1.msra.mxu0 %v2826
  %2957 = vmatprep.subr.mxu0 0.0
  %2958 = vmatpush1.msra.mxu0 %v2827
  %2959 = vmatprep.subr.mxu0 0.0
  %2960 = vmatpush1.msra.mxu0 %v2828
  %2961 = vmatprep.subr.mxu0 0.0
  %2962 = vmatpush1.msra.mxu0 %v2829
  %2963 = vmatprep.subr.mxu0 0.0
  %2964 = vmatpush1.msra.mxu0 %v2830
  %2965 = vmatprep.subr.mxu0 0.0
  %2966 = vmatpush1.msra.mxu0 %v2831
  %2967 = vmatprep.subr.mxu0 0.0
  %2968 = vmatpush1.msra.mxu0 %v2832
  %2969 = vmatprep.subr.mxu0 0.0
  %2970 = vmatpush1.msra.mxu0 %v2833
  %2971 = vmatprep.subr.mxu0 0.0
  %2972 = vmatpush1.msra.mxu0 %v2834
  %2973 = vmatprep.subr.mxu0 0.0
  %2974 = vmatpush1.msra.mxu0 %v2835
  %2975 = vmatprep.subr.mxu0 0.0
  %2976 = vmatpush1.msra.mxu0 %v2836
  %2977 = vmatprep.subr.mxu0 0.0
  %2978 = vmatpush1.msra.mxu0 %v2837
  %2979 = vmatprep.subr.mxu0 0.0
  %2980 = vmatpush1.msra.mxu0 %v2838
  %2981 = vmatprep.subr.mxu0 0.0
  %2982 = vmatpush1.msra.mxu0 %v2839
  %2983 = vmatprep.subr.mxu0 0.0
  %2984 = vmatpush1.msra.mxu0 %v2840
  %2985 = vmatprep.subr.mxu0 0.0
  %2986 = vmatpush1.msra.mxu0 %v2841
  %2987 = vmatprep.subr.mxu0 0.0
  %2988 = vmatpush1.msra.mxu0 %v2842
  %2989 = vmatprep.subr.mxu0 0.0
  %2990 = vmatpush1.msra.mxu0 %v2843
  %2991 = vmatprep.subr.mxu0 0.0
  %2992 = vmatpush1.msra.mxu0 %v2844
  %2993 = vmatprep.subr.mxu0 0.0
  %2994 = vmatpush1.msra.mxu0 %v2845
  %2995 = vmatprep.mubr.f32.mxu0 %v2705
  %2996 = vmatmul.mubr.f32.gmra.mrb[0].mxu0 %v2704
  %v2997 = vpop.f32.mrb[0].mxu0
  %v2998 = vadd.f32 %v2913, %v2997
  %v2999 = vpop.f32.mrb[0].mxu0
  %3000 = vmatprep.mubr.f32.mxu0 %v2709
  %3001 = vmatmul.mubr.f32.gmra.mrb[0].mxu0 %v2708
  %v3002 = vpop.f32.mrb[0].mxu0
  %v3003 = vadd.f32 %v2918, %v3002
  %v3004 = vpop.f32.mrb[0].mxu0
  %3005 = vmatprep.mubr.f32.mxu0 %v2713
  %3006 = vmatmul.mubr.f32.gmra.mrb[0].mxu0 %v2712
  %v3007 = vpop.f32.mrb[0].mxu0
  %v3008 = vadd.f32 %v2923, %v3007
  %v3009 = vpop.f32.mrb[0].mxu0
  %3010 = vmatprep.mubr.f32.mxu0 %v2717
  %3011 = vmatmul.mubr.f32.gmra.mrb[0].mxu0 %v2716
  %v3012 = vpop.f32.mrb[0].mxu0
  %v3013 = vadd.f32 %v2928, %v3012
  %v3014 = vpop.f32.mrb[0].mxu0
  %3015 = vdwg.mxu0
  %3016 = vmatprep.subr.mxu0 0.0
  %3017 = vmatpush1.msra.mxu0 %v2718
  %3018 = vmatprep.subr.mxu0 0.0
  %3019 = vmatpush1.msra.mxu0 %v2719
  %3020 = vmatprep.subr.mxu0 0.0
  %3021 = vmatpush1.msra.mxu0 %v2720
  %3022 = vmatprep.subr.mxu0 0.0
  %3023 = vmatpush1.msra.mxu0 %v2721
  %3024 = vmatprep.subr.mxu0 0.0
  %3025 = vmatpush1.msra.mxu0 %v2722
  %3026 = vmatprep.subr.mxu0 0.0
  %3027 = vmatpush1.msra.mxu0 %v2723
  %3028 = vmatprep.subr.mxu0 0.0
  %3029 = vmatpush1.msra.mxu0 %v2724
  %3030 = vmatprep.subr.mxu0 0.0
  %3031 = vmatpush1.msra.mxu0 %v2725
  %3032 = vmatprep.subr.mxu0 0.0
  %3033 = vmatpush1.msra.mxu0 %v2726
  %3034 = vmatprep.subr.mxu0 0.0
  %3035 = vmatpush1.msra.mxu0 %v2727
  %3036 = vmatprep.subr.mxu0 0.0
  %3037 = vmatpush1.msra.mxu0 %v2728
  %3038 = vmatprep.subr.mxu0 0.0
  %3039 = vmatpush1.msra.mxu0 %v2729
  %3040 = vmatprep.subr.mxu0 0.0
  %3041 = vmatpush1.msra.mxu0 %v2730
  %3042 = vmatprep.subr.mxu0 0.0
  %3043 = vmatpush1.msra.mxu0 %v2731
  %3044 = vmatprep.subr.mxu0 0.0
  %3045 = vmatpush1.msra.mxu0 %v2732
  %3046 = vmatprep.subr.mxu0 0.0
  %3047 = vmatpush1.msra.mxu0 %v2733
  %3048 = vmatprep.subr.mxu0 0.0
  %3049 = vmatpush1.msra.mxu0 %v2734
  %3050 = vmatprep.subr.mxu0 0.0
  %3051 = vmatpush1.msra.mxu0 %v2735
  %3052 = vmatprep.subr.mxu0 0.0
  %3053 = vmatpush1.msra.mxu0 %v2736
  %3054 = vmatprep.subr.mxu0 0.0
  %3055 = vmatpush1.msra.mxu0 %v2737
  %3056 = vmatprep.subr.mxu0 0.0
  %3057 = vmatpush1.msra.mxu0 %v2738
  %3058 = vmatprep.subr.mxu0 0.0
  %3059 = vmatpush1.msra.mxu0 %v2739
  %3060 = vmatprep.subr.mxu0 0.0
  %3061 = vmatpush1.msra.mxu0 %v2740
  %3062 = vmatprep.subr.mxu0 0.0
  %3063 = vmatpush1.msra.mxu0 %v2741
  %3064 = vmatprep.subr.mxu0 0.0
  %3065 = vmatpush1.msra.mxu0 %v2742
  %3066 = vmatprep.subr.mxu0 0.0
  %3067 = vmatpush1.msra.mxu0 %v2743
  %3068 = vmatprep.subr.mxu0 0.0
  %3069 = vmatpush1.msra.mxu0 %v2744
  %3070 = vmatprep.subr.mxu0 0.0
  %3071 = vmatpush1.msra.mxu0 %v2745
  %3072 = vmatprep.subr.mxu0 0.0
  %3073 = vmatpush1.msra.mxu0 %v2746
  %3074 = vmatprep.subr.mxu0 0.0
  %3075 = vmatpush1.msra.mxu0 %v2747
  %3076 = vmatprep.subr.mxu0 0.0
  %3077 = vmatpush1.msra.mxu0 %v2748
  %3078 = vmatprep.subr.mxu0 0.0
  %3079 = vmatpush1.msra.mxu0 %v2749
  %3080 = vmatprep.mubr.f32.mxu0 %v2376
  %3081 = vmatmul.mubr.f32.gmra.mrb[0].mxu0 %v2375
  %v3082 = vpop.f32.mrb[0].mxu0
  %v3083 = vadd.f32 %v2998, %v3082
  %v3084 = vpop.f32.mrb[0].mxu0
  %3085 = vmatprep.mubr.f32.mxu0 %v2380
  %3086 = vmatmul.mubr.f32.gmra.mrb[0].mxu0 %v2379
  %v3087 = vpop.f32.mrb[0].mxu0
  %v3088 = vadd.f32 %v3003, %v3087
  %v3089 = vpop.f32.mrb[0].mxu0
  %3090 = vmatprep.mubr.f32.mxu0 %v2384
  %3091 = vmatmul.mubr.f32.gmra.mrb[0].mxu0 %v2383
  %v3092 = vpop.f32.mrb[0].mxu0
  %v3093 = vadd.f32 %v3008, %v3092
  %v3094 = vpop.f32.mrb[0].mxu0
  %3095 = vmatprep.mubr.f32.mxu0 %v2388
  %3096 = vmatmul.mubr.f32.gmra.mrb[0].mxu0 %v2387
  %v3097 = vpop.f32.mrb[0].mxu0
  %v3098 = vadd.f32 %v3013, %v3097
  %v3099 = vpop.f32.mrb[0].mxu0
  %3100 = vdwg.mxu0
  %3101 = vmatprep.subr.mxu0 0.0
  %3102 = vmatpush1.msra.mxu0 %v2750
  %3103 = vmatprep.subr.mxu0 0.0
  %3104 = vmatpush1.msra.mxu0 %v2751
  %3105 = vmatprep.subr.mxu0 0.0
  %3106 = vmatpush1.msra.mxu0 %v2752
  %3107 = vmatprep.subr.mxu0 0.0
  %3108 = vmatpush1.msra.mxu0 %v2753
  %3109 = vmatprep.subr.mxu0 0.0
  %3110 = vmatpush1.msra.mxu0 %v2754
  %3111 = vmatprep.subr.mxu0 0.0
  %3112 = vmatpush1.msra.mxu0 %v2755
  %3113 = vmatprep.subr.mxu0 0.0
  %3114 = vmatpush1.msra.mxu0 %v2756
  %3115 = vmatprep.subr.mxu0 0.0
  %3116 = vmatpush1.msra.mxu0 %v2757
  %3117 = vmatprep.subr.mxu0 0.0
  %3118 = vmatpush1.msra.mxu0 %v2758
  %3119 = vmatprep.subr.mxu0 0.0
  %3120 = vmatpush1.msra.mxu0 %v2759
  %3121 = vmatprep.subr.mxu0 0.0
  %3122 = vmatpush1.msra.mxu0 %v2760
  %3123 = vmatprep.subr.mxu0 0.0
  %3124 = vmatpush1.msra.mxu0 %v2761
  %3125 = vmatprep.subr.mxu0 0.0
  %3126 = vmatpush1.msra.mxu0 %v2762
  %3127 = vmatprep.subr.mxu0 0.0
  %3128 = vmatpush1.msra.mxu0 %v2763
  %3129 = vmatprep.subr.mxu0 0.0
  %3130 = vmatpush1.msra.mxu0 %v2764
  %3131 = vmatprep.subr.mxu0 0.0
  %3132 = vmatpush1.msra.mxu0 %v2765
  %3133 = vmatprep.subr.mxu0 0.0
  %3134 = vmatpush1.msra.mxu0 %v2766
  %3135 = vmatprep.subr.mxu0 0.0
  %3136 = vmatpush1.msra.mxu0 %v2767
  %3137 = vmatprep.subr.mxu0 0.0
  %3138 = vmatpush1.msra.mxu0 %v2768
  %3139 = vmatprep.subr.mxu0 0.0
  %3140 = vmatpush1.msra.mxu0 %v2769
  %3141 = vmatprep.subr.mxu0 0.0
  %3142 = vmatpush1.msra.mxu0 %v2770
  %3143 = vmatprep.subr.mxu0 0.0
  %3144 = vmatpush1.msra.mxu0 %v2771
  %3145 = vmatprep.subr.mxu0 0.0
  %3146 = vmatpush1.msra.mxu0 %v2772
  %3147 = vmatprep.subr.mxu0 0.0
  %3148 = vmatpush1.msra.mxu0 %v2773
  %3149 = vmatprep.subr.mxu0 0.0
  %3150 = vmatpush1.msra.mxu0 %v2774
  %3151 = vmatprep.subr.mxu0 0.0
  %3152 = vmatpush1.msra.mxu0 %v2775
  %3153 = vmatprep.subr.mxu0 0.0
  %3154 = vmatpush1.msra.mxu0 %v2776
  %3155 = vmatprep.subr.mxu0 0.0
  %3156 = vmatpush1.msra.mxu0 %v2777
  %3157 = vmatprep.subr.mxu0 0.0
  %3158 = vmatpush1.msra.mxu0 %v2778
  %3159 = vmatprep.subr.mxu0 0.0
  %3160 = vmatpush1.msra.mxu0 %v2779
  %3161 = vmatprep.subr.mxu0 0.0
  %3162 = vmatpush1.msra.mxu0 %v2780
  %3163 = vmatprep.subr.mxu0 0.0
  %3164 = vmatpush1.msra.mxu0 %v2781
  %3165 = vmatprep.mubr.f32.mxu0 %v2378
  %3166 = vmatmul.mubr.f32.gmra.mrb[0].mxu0 %v2377
  %v3167 = vpop.f32.mrb[0].mxu0
  %v3168 = vadd.f32 %v3083, %v3167
  %v3169 = vpop.f32.mrb[0].mxu0
  %3170 = vmatprep.mubr.f32.mxu0 %v2382
  %3171 = vmatmul.mubr.f32.gmra.mrb[0].mxu0 %v2381
  %v3172 = vpop.f32.mrb[0].mxu0
  %v3173 = vadd.f32 %v3088, %v3172
  %v3174 = vpop.f32.mrb[0].mxu0
  %3175 = vmatprep.mubr.f32.mxu0 %v2386
  %3176 = vmatmul.mubr.f32.gmra.mrb[0].mxu0 %v2385
  %v3177 = vpop.f32.mrb[0].mxu0
  %v3178 = vadd.f32 %v3093, %v3177
  %v3179 = vpop.f32.mrb[0].mxu0
  %3180 = vmatprep.mubr.f32.mxu0 %v2390
  %3181 = vmatmul.mubr.f32.gmra.mrb[0].mxu0 %v2389
  %v3182 = vpop.f32.mrb[0].mxu0
  %v3183 = vadd.f32 %v3098, %v3182
  %v3184 = vpop.f32.mrb[0].mxu0
  %3185 = vdwg.mxu0
  %3186 = vst [vmem:[#allocation2] sm:$0x7] 0.0
  %3187 = vst [vmem:[#allocation2 + $0x18] sm:$0x7] 0.0
  %3188 = vst [vmem:[#allocation2 + $0x13] sm:$0x7] 0.0
  %3189 = vst [vmem:[#allocation2 + $0x2b] sm:$0x7] 0.0
  %3190 = vst [vmem:[#allocation2 + $0x3] sm:$0xff] %v3168
  %3191 = vst [vmem:[#allocation2 + $0xb] sm:$0xff] %v3173
  %3192 = vst [vmem:[#allocation2 + $0x1b] sm:$0xff] %v3178
  %3193 = vst [vmem:[#allocation2 + $0x23] sm:$0xff] %v3183
  %v3194 = vld [vmem:[#allocation2] sm:$0xff]
  %v3195 = vld [vmem:[#allocation2 + $0x8] sm:$0xff]
  %v3196 = vld [vmem:[#allocation2 + $0x18] sm:$0xff]
  %v3197 = vld [vmem:[#allocation2 + $0x20] sm:$0xff]
  %v3198 = vld [vmem:[#allocation2 + $0x1] sm:$0xff]
  %v3199 = vld [vmem:[#allocation2 + $0x9] sm:$0xff]
  %v3200 = vld [vmem:[#allocation2 + $0x19] sm:$0xff]
  %v3201 = vld [vmem:[#allocation2 + $0x21] sm:$0xff]
  %v3202 = vld [vmem:[#allocation2 + $0x2] sm:$0xff]
  %v3203 = vld [vmem:[#allocation2 + $0xa] sm:$0xff]
  %v3204 = vld [vmem:[#allocation2 + $0x1a] sm:$0xff]
  %v3205 = vld [vmem:[#allocation2 + $0x22] sm:$0xff]
  %v3206 = vld [vmem:[#allocation2 + $0x3] sm:$0xff]
  %v3207 = vld [vmem:[#allocation2 + $0xb] sm:$0xff]
  %v3208 = vld [vmem:[#allocation2 + $0x1b] sm:$0xff]
  %v3209 = vld [vmem:[#allocation2 + $0x23] sm:$0xff]
  %v3210 = vld [vmem:[#allocation2 + $0x4] sm:$0xff]
  %v3211 = vld [vmem:[#allocation2 + $0xc] sm:$0xff]
  %v3212 = vld [vmem:[#allocation2 + $0x1c] sm:$0xff]
  %v3213 = vld [vmem:[#allocation2 + $0x24] sm:$0xff]
  %v3214 = vld [vmem:[#allocation2 + $0x5] sm:$0xff]
  %v3215 = vld [vmem:[#allocation2 + $0xd] sm:$0xff]
  %v3216 = vld [vmem:[#allocation2 + $0x1d] sm:$0xff]
  %v3217 = vld [vmem:[#allocation2 + $0x25] sm:$0xff]
  %v3218 = vld [vmem:[#allocation2 + $0x6] sm:$0xff]
  %v3219 = vld [vmem:[#allocation2 + $0xe] sm:$0xff]
  %v3220 = vld [vmem:[#allocation2 + $0x1e] sm:$0xff]
  %v3221 = vld [vmem:[#allocation2 + $0x26] sm:$0xff]
  %v3222 = vld [vmem:[%s6] sm:$0xff]
  %v3223 = vld [vmem:[%s6 + $0x8] sm:$0xff]
  %v3224 = vld [vmem:[%s6 + $0x10] sm:$0xff]
  %v3225 = vld [vmem:[%s6 + $0x18] sm:$0xff]
  %v3226 = vld [vmem:[%s6 + $0x20] sm:$0xff]
  %v3227 = vld [vmem:[%s6 + $0x28] sm:$0xff]
  %v3228 = vld [vmem:[%s6 + $0x30] sm:$0xff]
  %v3229 = vld [vmem:[%s6 + $0x38] sm:$0xff]
  %v3230 = vld [vmem:[%s6 + $0x40] sm:$0xff]
  %v3231 = vld [vmem:[%s6 + $0x48] sm:$0xff]
  %v3232 = vld [vmem:[%s6 + $0x50] sm:$0xff]
  %v3233 = vld [vmem:[%s6 + $0x58] sm:$0xff]
  %v3234 = vld [vmem:[%s6 + $0x60] sm:$0xff]
  %v3235 = vld [vmem:[%s6 + $0x68] sm:$0xff]
  %v3236 = vld [vmem:[%s6 + $0x70] sm:$0xff]
  %v3237 = vld [vmem:[%s6 + $0x78] sm:$0xff]
  %v3238 = vld [vmem:[%s6 + $0x80] sm:$0xff]
  %v3239 = vld [vmem:[%s6 + $0x88] sm:$0xff]
  %v3240 = vld [vmem:[%s6 + $0x90] sm:$0xff]
  %v3241 = vld [vmem:[%s6 + $0x98] sm:$0xff]
  %v3242 = vld [vmem:[%s6 + $0xa0] sm:$0xff]
  %v3243 = vld [vmem:[%s6 + $0xa8] sm:$0xff]
  %v3244 = vld [vmem:[%s6 + $0xb0] sm:$0xff]
  %v3245 = vld [vmem:[%s6 + $0xb8] sm:$0xff]
  %v3246 = vld [vmem:[%s6 + $0xc0] sm:$0xff]
  %v3247 = vld [vmem:[%s6 + $0xc8] sm:$0xff]
  %v3248 = vld [vmem:[%s6 + $0xd0] sm:$0xff]
  %v3249 = vld [vmem:[%s6 + $0xd8] sm:$0xff]
  %v3250 = vld [vmem:[%s6 + $0xe0] sm:$0xff]
  %v3251 = vld [vmem:[%s6 + $0xe8] sm:$0xff]
  %v3252 = vld [vmem:[%s6 + $0xf0] sm:$0xff]
  %v3253 = vld [vmem:[%s6 + $0xf8] sm:$0xff]
  %v3254 = vld [vmem:[%s6 + $0x100] sm:$0xff]
  %v3255 = vld [vmem:[%s6 + $0x108] sm:$0xff]
  %v3256 = vld [vmem:[%s6 + $0x110] sm:$0xff]
  %v3257 = vld [vmem:[%s6 + $0x118] sm:$0xff]
  %v3258 = vld [vmem:[%s6 + $0x120] sm:$0xff]
  %v3259 = vld [vmem:[%s6 + $0x128] sm:$0xff]
  %v3260 = vld [vmem:[%s6 + $0x130] sm:$0xff]
  %v3261 = vld [vmem:[%s6 + $0x138] sm:$0xff]
  %v3262 = vld [vmem:[%s6 + $0x140] sm:$0xff]
  %v3263 = vld [vmem:[%s6 + $0x148] sm:$0xff]
  %v3264 = vld [vmem:[%s6 + $0x150] sm:$0xff]
  %v3265 = vld [vmem:[%s6 + $0x158] sm:$0xff]
  %v3266 = vld [vmem:[%s6 + $0x160] sm:$0xff]
  %v3267 = vld [vmem:[%s6 + $0x168] sm:$0xff]
  %v3268 = vld [vmem:[%s6 + $0x170] sm:$0xff]
  %v3269 = vld [vmem:[%s6 + $0x178] sm:$0xff]
  %v3270 = vld [vmem:[%s6 + $0x180] sm:$0xff]
  %v3271 = vld [vmem:[%s6 + $0x188] sm:$0xff]
  %v3272 = vld [vmem:[%s6 + $0x190] sm:$0xff]
  %v3273 = vld [vmem:[%s6 + $0x198] sm:$0xff]
  %v3274 = vld [vmem:[%s6 + $0x1a0] sm:$0xff]
  %v3275 = vld [vmem:[%s6 + $0x1a8] sm:$0xff]
  %v3276 = vld [vmem:[%s6 + $0x1b0] sm:$0xff]
  %v3277 = vld [vmem:[%s6 + $0x1b8] sm:$0xff]
  %v3278 = vld [vmem:[%s6 + $0x1c0] sm:$0xff]
  %v3279 = vld [vmem:[%s6 + $0x1c8] sm:$0xff]
  %v3280 = vld [vmem:[%s6 + $0x1d0] sm:$0xff]
  %v3281 = vld [vmem:[%s6 + $0x1d8] sm:$0xff]
  %v3282 = vld [vmem:[%s6 + $0x1e0] sm:$0xff]
  %v3283 = vld [vmem:[%s6 + $0x1e8] sm:$0xff]
  %v3284 = vld [vmem:[%s6 + $0x1f0] sm:$0xff]
  %v3285 = vld [vmem:[%s6 + $0x1f8] sm:$0xff]
  %v3286 = vld [vmem:[%s6 + $0x200] sm:$0xff]
  %v3287 = vld [vmem:[%s6 + $0x208] sm:$0xff]
  %v3288 = vld [vmem:[%s6 + $0x210] sm:$0xff]
  %v3289 = vld [vmem:[%s6 + $0x218] sm:$0xff]
  %v3290 = vld [vmem:[%s6 + $0x220] sm:$0xff]
  %v3291 = vld [vmem:[%s6 + $0x228] sm:$0xff]
  %v3292 = vld [vmem:[%s6 + $0x230] sm:$0xff]
  %v3293 = vld [vmem:[%s6 + $0x238] sm:$0xff]
  %v3294 = vld [vmem:[%s6 + $0x240] sm:$0xff]
  %v3295 = vld [vmem:[%s6 + $0x248] sm:$0xff]
  %v3296 = vld [vmem:[%s6 + $0x250] sm:$0xff]
  %v3297 = vld [vmem:[%s6 + $0x258] sm:$0xff]
  %v3298 = vld [vmem:[%s6 + $0x260] sm:$0xff]
  %v3299 = vld [vmem:[%s6 + $0x268] sm:$0xff]
  %v3300 = vld [vmem:[%s6 + $0x270] sm:$0xff]
  %v3301 = vld [vmem:[%s6 + $0x278] sm:$0xff]
  %v3302 = vld [vmem:[%s6 + $0x280] sm:$0xff]
  %v3303 = vld [vmem:[%s6 + $0x288] sm:$0xff]
  %v3304 = vld [vmem:[%s6 + $0x290] sm:$0xff]
  %v3305 = vld [vmem:[%s6 + $0x298] sm:$0xff]
  %v3306 = vld [vmem:[%s6 + $0x2a0] sm:$0xff]
  %v3307 = vld [vmem:[%s6 + $0x2a8] sm:$0xff]
  %v3308 = vld [vmem:[%s6 + $0x2b0] sm:$0xff]
  %v3309 = vld [vmem:[%s6 + $0x2b8] sm:$0xff]
  %v3310 = vld [vmem:[%s6 + $0x2c0] sm:$0xff]
  %v3311 = vld [vmem:[%s6 + $0x2c8] sm:$0xff]
  %v3312 = vld [vmem:[%s6 + $0x2d0] sm:$0xff]
  %v3313 = vld [vmem:[%s6 + $0x2d8] sm:$0xff]
  %v3314 = vld [vmem:[%s6 + $0x2e0] sm:$0xff]
  %v3315 = vld [vmem:[%s6 + $0x2e8] sm:$0xff]
  %v3316 = vld [vmem:[%s6 + $0x2f0] sm:$0xff]
  %v3317 = vld [vmem:[%s6 + $0x2f8] sm:$0xff]
  %v3318 = vld [vmem:[%s6 + $0x300] sm:$0xff]
  %v3319 = vld [vmem:[%s6 + $0x308] sm:$0xff]
  %v3320 = vld [vmem:[%s6 + $0x310] sm:$0xff]
  %v3321 = vld [vmem:[%s6 + $0x318] sm:$0xff]
  %v3322 = vld [vmem:[%s6 + $0x320] sm:$0xff]
  %v3323 = vld [vmem:[%s6 + $0x328] sm:$0xff]
  %v3324 = vld [vmem:[%s6 + $0x330] sm:$0xff]
  %v3325 = vld [vmem:[%s6 + $0x338] sm:$0xff]
  %v3326 = vld [vmem:[%s6 + $0x340] sm:$0xff]
  %v3327 = vld [vmem:[%s6 + $0x348] sm:$0xff]
  %v3328 = vld [vmem:[%s6 + $0x350] sm:$0xff]
  %v3329 = vld [vmem:[%s6 + $0x358] sm:$0xff]
  %v3330 = vld [vmem:[%s6 + $0x360] sm:$0xff]
  %v3331 = vld [vmem:[%s6 + $0x368] sm:$0xff]
  %v3332 = vld [vmem:[%s6 + $0x370] sm:$0xff]
  %v3333 = vld [vmem:[%s6 + $0x378] sm:$0xff]
  %3334 = vmatprep.subr.mxu0 0.0
  %3335 = vmatpush1.msra.mxu0 %v3222
  %3336 = vmatprep.subr.mxu0 0.0
  %3337 = vmatpush1.msra.mxu0 %v3223
  %3338 = vmatprep.subr.mxu0 0.0
  %3339 = vmatpush1.msra.mxu0 %v3224
  %3340 = vmatprep.subr.mxu0 0.0
  %3341 = vmatpush1.msra.mxu0 %v3225
  %3342 = vmatprep.subr.mxu0 0.0
  %3343 = vmatpush1.msra.mxu0 %v3226
  %3344 = vmatprep.subr.mxu0 0.0
  %3345 = vmatpush1.msra.mxu0 %v3227
  %3346 = vmatprep.subr.mxu0 0.0
  %3347 = vmatpush1.msra.mxu0 %v3228
  %3348 = vmatprep.subr.mxu0 0.0
  %3349 = vmatpush1.msra.mxu0 %v3229
  %3350 = vmatprep.subr.mxu0 0.0
  %3351 = vmatpush1.msra.mxu0 %v3230
  %3352 = vmatprep.subr.mxu0 0.0
  %3353 = vmatpush1.msra.mxu0 %v3231
  %3354 = vmatprep.subr.mxu0 0.0
  %3355 = vmatpush1.msra.mxu0 %v3232
  %3356 = vmatprep.subr.mxu0 0.0
  %3357 = vmatpush1.msra.mxu0 %v3233
  %3358 = vmatprep.subr.mxu0 0.0
  %3359 = vmatpush1.msra.mxu0 %v3234
  %3360 = vmatprep.subr.mxu0 0.0
  %3361 = vmatpush1.msra.mxu0 %v3235
  %3362 = vmatprep.subr.mxu0 0.0
  %3363 = vmatpush1.msra.mxu0 %v3236
  %3364 = vmatprep.subr.mxu0 0.0
  %3365 = vmatpush1.msra.mxu0 %v3237
  %3366 = vmatprep.subr.mxu0 0.0
  %3367 = vmatpush1.msra.mxu0 %v3238
  %3368 = vmatprep.subr.mxu0 0.0
  %3369 = vmatpush1.msra.mxu0 %v3239
  %3370 = vmatprep.subr.mxu0 0.0
  %3371 = vmatpush1.msra.mxu0 %v3240
  %3372 = vmatprep.subr.mxu0 0.0
  %3373 = vmatpush1.msra.mxu0 %v3241
  %3374 = vmatprep.subr.mxu0 0.0
  %3375 = vmatpush1.msra.mxu0 %v3242
  %3376 = vmatprep.subr.mxu0 0.0
  %3377 = vmatpush1.msra.mxu0 %v3243
  %3378 = vmatprep.subr.mxu0 0.0
  %3379 = vmatpush1.msra.mxu0 %v3244
  %3380 = vmatprep.subr.mxu0 0.0
  %3381 = vmatpush1.msra.mxu0 %v3245
  %3382 = vmatprep.subr.mxu0 0.0
  %3383 = vmatpush1.msra.mxu0 %v3246
  %3384 = vmatprep.subr.mxu0 0.0
  %3385 = vmatpush1.msra.mxu0 %v3247
  %3386 = vmatprep.subr.mxu0 0.0
  %3387 = vmatpush1.msra.mxu0 %v3248
  %3388 = vmatprep.subr.mxu0 0.0
  %3389 = vmatpush1.msra.mxu0 %v3249
  %3390 = vmatprep.subr.mxu0 0.0
  %3391 = vmatpush1.msra.mxu0 %v3250
  %3392 = vmatprep.subr.mxu0 0.0
  %3393 = vmatpush1.msra.mxu0 %v3251
  %3394 = vmatprep.subr.mxu0 0.0
  %3395 = vmatpush1.msra.mxu0 %v3252
  %3396 = vmatprep.subr.mxu0 0.0
  %3397 = vmatpush1.msra.mxu0 %v3253
  %3398 = vmatprep.mubr.f32.mxu0 %v3198
  %3399 = vmatmul.mubr.f32.gmra.mrb[0].mxu0 %v3194
  %v3400 = vpop.f32.mrb[0].mxu0
  %v3401 = vadd.f32 0.0, %v3400
  %v3402 = vpop.f32.mrb[0].mxu0
  %3403 = vmatprep.mubr.f32.mxu0 %v3199
  %3404 = vmatmul.mubr.f32.gmra.mrb[0].mxu0 %v3195
  %v3405 = vpop.f32.mrb[0].mxu0
  %v3406 = vadd.f32 0.0, %v3405
  %v3407 = vpop.f32.mrb[0].mxu0
  %3408 = vmatprep.mubr.f32.mxu0 %v3200
  %3409 = vmatmul.mubr.f32.gmra.mrb[0].mxu0 %v3196
  %v3410 = vpop.f32.mrb[0].mxu0
  %v3411 = vadd.f32 0.0, %v3410
  %v3412 = vpop.f32.mrb[0].mxu0
  %3413 = vmatprep.mubr.f32.mxu0 %v3201
  %3414 = vmatmul.mubr.f32.gmra.mrb[0].mxu0 %v3197
  %v3415 = vpop.f32.mrb[0].mxu0
  %v3416 = vadd.f32 0.0, %v3415
  %v3417 = vpop.f32.mrb[0].mxu0
  %3418 = vdwg.mxu0
  %3419 = vmatprep.subr.mxu0 0.0
  %3420 = vmatpush1.msra.mxu0 %v3254
  %3421 = vmatprep.subr.mxu0 0.0
  %3422 = vmatpush1.msra.mxu0 %v3255
  %3423 = vmatprep.subr.mxu0 0.0
  %3424 = vmatpush1.msra.mxu0 %v3256
  %3425 = vmatprep.subr.mxu0 0.0
  %3426 = vmatpush1.msra.mxu0 %v3257
  %3427 = vmatprep.subr.mxu0 0.0
  %3428 = vmatpush1.msra.mxu0 %v3258
  %3429 = vmatprep.subr.mxu0 0.0
  %3430 = vmatpush1.msra.mxu0 %v3259
  %3431 = vmatprep.subr.mxu0 0.0
  %3432 = vmatpush1.msra.mxu0 %v3260
  %3433 = vmatprep.subr.mxu0 0.0
  %3434 = vmatpush1.msra.mxu0 %v3261
  %3435 = vmatprep.subr.mxu0 0.0
  %3436 = vmatpush1.msra.mxu0 %v3262
  %3437 = vmatprep.subr.mxu0 0.0
  %3438 = vmatpush1.msra.mxu0 %v3263
  %3439 = vmatprep.subr.mxu0 0.0
  %3440 = vmatpush1.msra.mxu0 %v3264
  %3441 = vmatprep.subr.mxu0 0.0
  %3442 = vmatpush1.msra.mxu0 %v3265
  %3443 = vmatprep.subr.mxu0 0.0
  %3444 = vmatpush1.msra.mxu0 %v3266
  %3445 = vmatprep.subr.mxu0 0.0
  %3446 = vmatpush1.msra.mxu0 %v3267
  %3447 = vmatprep.subr.mxu0 0.0
  %3448 = vmatpush1.msra.mxu0 %v3268
  %3449 = vmatprep.subr.mxu0 0.0
  %3450 = vmatpush1.msra.mxu0 %v3269
  %3451 = vmatprep.subr.mxu0 0.0
  %3452 = vmatpush1.msra.mxu0 %v3270
  %3453 = vmatprep.subr.mxu0 0.0
  %3454 = vmatpush1.msra.mxu0 %v3271
  %3455 = vmatprep.subr.mxu0 0.0
  %3456 = vmatpush1.msra.mxu0 %v3272
  %3457 = vmatprep.subr.mxu0 0.0
  %3458 = vmatpush1.msra.mxu0 %v3273
  %3459 = vmatprep.subr.mxu0 0.0
  %3460 = vmatpush1.msra.mxu0 %v3274
  %3461 = vmatprep.subr.mxu0 0.0
  %3462 = vmatpush1.msra.mxu0 %v3275
  %3463 = vmatprep.subr.mxu0 0.0
  %3464 = vmatpush1.msra.mxu0 %v3276
  %3465 = vmatprep.subr.mxu0 0.0
  %3466 = vmatpush1.msra.mxu0 %v3277
  %3467 = vmatprep.subr.mxu0 0.0
  %3468 = vmatpush1.msra.mxu0 %v3278
  %3469 = vmatprep.subr.mxu0 0.0
  %3470 = vmatpush1.msra.mxu0 %v3279
  %3471 = vmatprep.subr.mxu0 0.0
  %3472 = vmatpush1.msra.mxu0 %v3280
  %3473 = vmatprep.subr.mxu0 0.0
  %3474 = vmatpush1.msra.mxu0 %v3281
  %3475 = vmatprep.subr.mxu0 0.0
  %3476 = vmatpush1.msra.mxu0 %v3282
  %3477 = vmatprep.subr.mxu0 0.0
  %3478 = vmatpush1.msra.mxu0 %v3283
  %3479 = vmatprep.subr.mxu0 0.0
  %3480 = vmatpush1.msra.mxu0 %v3284
  %3481 = vmatprep.subr.mxu0 0.0
  %3482 = vmatpush1.msra.mxu0 %v3285
  %3483 = vmatprep.mubr.f32.mxu0 %v3206
  %3484 = vmatmul.mubr.f32.gmra.mrb[0].mxu0 %v3202
  %v3485 = vpop.f32.mrb[0].mxu0
  %v3486 = vadd.f32 %v3401, %v3485
  %v3487 = vpop.f32.mrb[0].mxu0
  %3488 = vmatprep.mubr.f32.mxu0 %v3207
  %3489 = vmatmul.mubr.f32.gmra.mrb[0].mxu0 %v3203
  %v3490 = vpop.f32.mrb[0].mxu0
  %v3491 = vadd.f32 %v3406, %v3490
  %v3492 = vpop.f32.mrb[0].mxu0
  %3493 = vmatprep.mubr.f32.mxu0 %v3208
  %3494 = vmatmul.mubr.f32.gmra.mrb[0].mxu0 %v3204
  %v3495 = vpop.f32.mrb[0].mxu0
  %v3496 = vadd.f32 %v3411, %v3495
  %v3497 = vpop.f32.mrb[0].mxu0
  %3498 = vmatprep.mubr.f32.mxu0 %v3209
  %3499 = vmatmul.mubr.f32.gmra.mrb[0].mxu0 %v3205
  %v3500 = vpop.f32.mrb[0].mxu0
  %v3501 = vadd.f32 %v3416, %v3500
  %v3502 = vpop.f32.mrb[0].mxu0
  %3503 = vdwg.mxu0
  %3504 = vmatprep.subr.mxu0 0.0
  %3505 = vmatpush1.msra.mxu0 %v3286
  %3506 = vmatprep.subr.mxu0 0.0
  %3507 = vmatpush1.msra.mxu0 %v3287
  %3508 = vmatprep.subr.mxu0 0.0
  %3509 = vmatpush1.msra.mxu0 %v3288
  %3510 = vmatprep.subr.mxu0 0.0
  %3511 = vmatpush1.msra.mxu0 %v3289
  %3512 = vmatprep.subr.mxu0 0.0
  %3513 = vmatpush1.msra.mxu0 %v3290
  %3514 = vmatprep.subr.mxu0 0.0
  %3515 = vmatpush1.msra.mxu0 %v3291
  %3516 = vmatprep.subr.mxu0 0.0
  %3517 = vmatpush1.msra.mxu0 %v3292
  %3518 = vmatprep.subr.mxu0 0.0
  %3519 = vmatpush1.msra.mxu0 %v3293
  %3520 = vmatprep.subr.mxu0 0.0
  %3521 = vmatpush1.msra.mxu0 %v3294
  %3522 = vmatprep.subr.mxu0 0.0
  %3523 = vmatpush1.msra.mxu0 %v3295
  %3524 = vmatprep.subr.mxu0 0.0
  %3525 = vmatpush1.msra.mxu0 %v3296
  %3526 = vmatprep.subr.mxu0 0.0
  %3527 = vmatpush1.msra.mxu0 %v3297
  %3528 = vmatprep.subr.mxu0 0.0
  %3529 = vmatpush1.msra.mxu0 %v3298
  %3530 = vmatprep.subr.mxu0 0.0
  %3531 = vmatpush1.msra.mxu0 %v3299
  %3532 = vmatprep.subr.mxu0 0.0
  %3533 = vmatpush1.msra.mxu0 %v3300
  %3534 = vmatprep.subr.mxu0 0.0
  %3535 = vmatpush1.msra.mxu0 %v3301
  %3536 = vmatprep.subr.mxu0 0.0
  %3537 = vmatpush1.msra.mxu0 %v3302
  %3538 = vmatprep.subr.mxu0 0.0
  %3539 = vmatpush1.msra.mxu0 %v3303
  %3540 = vmatprep.subr.mxu0 0.0
  %3541 = vmatpush1.msra.mxu0 %v3304
  %3542 = vmatprep.subr.mxu0 0.0
  %3543 = vmatpush1.msra.mxu0 %v3305
  %3544 = vmatprep.subr.mxu0 0.0
  %3545 = vmatpush1.msra.mxu0 %v3306
  %3546 = vmatprep.subr.mxu0 0.0
  %3547 = vmatpush1.msra.mxu0 %v3307
  %3548 = vmatprep.subr.mxu0 0.0
  %3549 = vmatpush1.msra.mxu0 %v3308
  %3550 = vmatprep.subr.mxu0 0.0
  %3551 = vmatpush1.msra.mxu0 %v3309
  %3552 = vmatprep.subr.mxu0 0.0
  %3553 = vmatpush1.msra.mxu0 %v3310
  %3554 = vmatprep.subr.mxu0 0.0
  %3555 = vmatpush1.msra.mxu0 %v3311
  %3556 = vmatprep.subr.mxu0 0.0
  %3557 = vmatpush1.msra.mxu0 %v3312
  %3558 = vmatprep.subr.mxu0 0.0
  %3559 = vmatpush1.msra.mxu0 %v3313
  %3560 = vmatprep.subr.mxu0 0.0
  %3561 = vmatpush1.msra.mxu0 %v3314
  %3562 = vmatprep.subr.mxu0 0.0
  %3563 = vmatpush1.msra.mxu0 %v3315
  %3564 = vmatprep.subr.mxu0 0.0
  %3565 = vmatpush1.msra.mxu0 %v3316
  %3566 = vmatprep.subr.mxu0 0.0
  %3567 = vmatpush1.msra.mxu0 %v3317
  %3568 = vmatprep.mubr.f32.mxu0 %v3214
  %3569 = vmatmul.mubr.f32.gmra.mrb[0].mxu0 %v3210
  %v3570 = vpop.f32.mrb[0].mxu0
  %v3571 = vadd.f32 %v3486, %v3570
  %v3572 = vpop.f32.mrb[0].mxu0
  %3573 = vmatprep.mubr.f32.mxu0 %v3215
  %3574 = vmatmul.mubr.f32.gmra.mrb[0].mxu0 %v3211
  %v3575 = vpop.f32.mrb[0].mxu0
  %v3576 = vadd.f32 %v3491, %v3575
  %v3577 = vpop.f32.mrb[0].mxu0
  %3578 = vmatprep.mubr.f32.mxu0 %v3216
  %3579 = vmatmul.mubr.f32.gmra.mrb[0].mxu0 %v3212
  %v3580 = vpop.f32.mrb[0].mxu0
  %v3581 = vadd.f32 %v3496, %v3580
  %v3582 = vpop.f32.mrb[0].mxu0
  %3583 = vmatprep.mubr.f32.mxu0 %v3217
  %3584 = vmatmul.mubr.f32.gmra.mrb[0].mxu0 %v3213
  %v3585 = vpop.f32.mrb[0].mxu0
  %v3586 = vadd.f32 %v3501, %v3585
  %v3587 = vpop.f32.mrb[0].mxu0
  %3588 = vdwg.mxu0
  %3589 = vmatprep.subr.mxu0 0.0
  %3590 = vmatpush1.msra.mxu0 %v3318
  %3591 = vmatprep.subr.mxu0 0.0
  %3592 = vmatpush1.msra.mxu0 %v3319
  %3593 = vmatprep.subr.mxu0 0.0
  %3594 = vmatpush1.msra.mxu0 %v3320
  %3595 = vmatprep.subr.mxu0 0.0
  %3596 = vmatpush1.msra.mxu0 %v3321
  %3597 = vmatprep.subr.mxu0 0.0
  %3598 = vmatpush1.msra.mxu0 %v3322
  %3599 = vmatprep.subr.mxu0 0.0
  %3600 = vmatpush1.msra.mxu0 %v3323
  %3601 = vmatprep.subr.mxu0 0.0
  %3602 = vmatpush1.msra.mxu0 %v3324
  %3603 = vmatprep.subr.mxu0 0.0
  %3604 = vmatpush1.msra.mxu0 %v3325
  %3605 = vmatprep.subr.mxu0 0.0
  %3606 = vmatpush1.msra.mxu0 %v3326
  %3607 = vmatprep.subr.mxu0 0.0
  %3608 = vmatpush1.msra.mxu0 %v3327
  %3609 = vmatprep.subr.mxu0 0.0
  %3610 = vmatpush1.msra.mxu0 %v3328
  %3611 = vmatprep.subr.mxu0 0.0
  %3612 = vmatpush1.msra.mxu0 %v3329
  %3613 = vmatprep.subr.mxu0 0.0
  %3614 = vmatpush1.msra.mxu0 %v3330
  %3615 = vmatprep.subr.mxu0 0.0
  %3616 = vmatpush1.msra.mxu0 %v3331
  %3617 = vmatprep.subr.mxu0 0.0
  %3618 = vmatpush1.msra.mxu0 %v3332
  %3619 = vmatprep.subr.mxu0 0.0
  %3620 = vmatpush1.msra.mxu0 %v3333
  %3621 = vmatprep.subr.mxu0 0.0
  %3622 = vmatpush1.msra.mxu0 0.0
  %3623 = vmatprep.subr.mxu0 0.0
  %3624 = vmatpush1.msra.mxu0 0.0
  %3625 = vmatprep.subr.mxu0 0.0
  %3626 = vmatpush1.msra.mxu0 0.0
  %3627 = vmatprep.subr.mxu0 0.0
  %3628 = vmatpush1.msra.mxu0 0.0
  %3629 = vmatprep.subr.mxu0 0.0
  %3630 = vmatpush1.msra.mxu0 0.0
  %3631 = vmatprep.subr.mxu0 0.0
  %3632 = vmatpush1.msra.mxu0 0.0
  %3633 = vmatprep.subr.mxu0 0.0
  %3634 = vmatpush1.msra.mxu0 0.0
  %3635 = vmatprep.subr.mxu0 0.0
  %3636 = vmatpush1.msra.mxu0 0.0
  %3637 = vmatprep.subr.mxu0 0.0
  %3638 = vmatpush1.msra.mxu0 0.0
  %3639 = vmatprep.subr.mxu0 0.0
  %3640 = vmatpush1.msra.mxu0 0.0
  %3641 = vmatprep.subr.mxu0 0.0
  %3642 = vmatpush1.msra.mxu0 0.0
  %3643 = vmatprep.subr.mxu0 0.0
  %3644 = vmatpush1.msra.mxu0 0.0
  %3645 = vmatprep.subr.mxu0 0.0
  %3646 = vmatpush1.msra.mxu0 0.0
  %3647 = vmatprep.subr.mxu0 0.0
  %3648 = vmatpush1.msra.mxu0 0.0
  %3649 = vmatprep.subr.mxu0 0.0
  %3650 = vmatpush1.msra.mxu0 0.0
  %3651 = vmatprep.subr.mxu0 0.0
  %3652 = vmatpush1.msra.mxu0 0.0
  %3653 = vmatprep.mubr.f32.mxu0 0.0
  %3654 = vmatmul.mubr.f32.gmra.mrb[0].mxu0 %v3218
  %v3655 = vpop.f32.mrb[0].mxu0
  %v3656 = vadd.f32 %v3571, %v3655
  %v3657 = vpop.f32.mrb[0].mxu0
  %3658 = vmatprep.mubr.f32.mxu0 0.0
  %3659 = vmatmul.mubr.f32.gmra.mrb[0].mxu0 %v3219
  %v3660 = vpop.f32.mrb[0].mxu0
  %v3661 = vadd.f32 %v3576, %v3660
  %v3662 = vpop.f32.mrb[0].mxu0
  %3663 = vmatprep.mubr.f32.mxu0 0.0
  %3664 = vmatmul.mubr.f32.gmra.mrb[0].mxu0 %v3220
  %v3665 = vpop.f32.mrb[0].mxu0
  %v3666 = vadd.f32 %v3581, %v3665
  %v3667 = vpop.f32.mrb[0].mxu0
  %3668 = vmatprep.mubr.f32.mxu0 0.0
  %3669 = vmatmul.mubr.f32.gmra.mrb[0].mxu0 %v3221
  %v3670 = vpop.f32.mrb[0].mxu0
  %v3671 = vadd.f32 %v3586, %v3670
  %v3672 = vpop.f32.mrb[0].mxu0
  %3673 = vdwg.mxu0
  %vm3674 = vcmask 130048
  %v3675 = vsel %vm3674, %v3656, 0.0
  %v3676 = vsel %vm3674, %v3661, 0.0
  %v3677 = vadd.f32 %v3675, %v3676
  %v3678 = vsel %vm3674, %v3666, 0.0
  %v3679 = vadd.f32 %v3677, %v3678
  %v3680 = vsel %vm3674, %v3671, 0.0
  %v3681 = vadd.f32 %v3679, %v3680
  %3682 = vadd.xlane.f32.xlu0 %v3681
  %v3683 = vpop.xlane.xlu0 %3682
  %v3684 = vrot.slane %v3683, 4
  %v3685 = vadd.f32 %v3683, %v3684
  %v3686 = vrot.slane %v3685, 2
  %v3687 = vadd.f32 %v3685, %v3686
  %v3688 = vrot.slane %v3687, 1
  %v3689 = vadd.f32 %v3687, %v3688
  %s3690 = vtos %v3689
  %s3691 = smul.f32 %s3690, 0.001953125
  %v3692 = vmul.f32 %v3656, %v3656
  %v3693 = vmul.f32 %v3661, %v3661
  %v3694 = vmul.f32 %v3666, %v3666
  %v3695 = vmul.f32 %v3671, %v3671
  %v3696 = vsel %vm3674, %v3692, 0.0
  %v3697 = vsel %vm3674, %v3693, 0.0
  %v3698 = vadd.f32 %v3696, %v3697
  %v3699 = vsel %vm3674, %v3694, 0.0
  %v3700 = vadd.f32 %v3698, %v3699
  %v3701 = vsel %vm3674, %v3695, 0.0
  %v3702 = vadd.f32 %v3700, %v3701
  %3703 = vadd.xlane.f32.xlu0 %v3702
  %v3704 = vpop.xlane.xlu0 %3703
  %v3705 = vrot.slane %v3704, 4
  %v3706 = vadd.f32 %v3704, %v3705
  %v3707 = vrot.slane %v3706, 2
  %v3708 = vadd.f32 %v3706, %v3707
  %v3709 = vrot.slane %v3708, 1
  %v3710 = vadd.f32 %v3708, %v3709
  %s3711 = vtos %v3710
  %s3712 = smul.f32 %s3711, 0.001953125
  %s3713 = smul.f32 %s3691, %s3691
  %s3714 = ssub.f32 %s3712, %s3713
  %s3715 = smax.f32 %s3714, 0.0
  %s3716 = sld [smem:[#allocation3]]
  %s3717 = sadd.f32 %s3715, 1e-05
  %v3718 = vstv %s3717
  %v3719 = vrsqrt.pop %v3718
  %s3720 = vtos %v3719
  %s3721 = smul.f32 %s3716, %s3720
  %s3722 = sld [smem:[#allocation4]]
  %s3723 = smul.f32 %s3691, %s3721
  %s3724 = ssub.f32 %s3722, %s3723
  %v3725 = vstv %s3721
  %v3726 = vmul.f32 %v3656, %v3725
  %v3727 = vmul.f32 %v3661, %v3725
  %v3728 = vmul.f32 %v3666, %v3725
  %v3729 = vmul.f32 %v3671, %v3725
  %v3730 = vstv %s3724
  %v3731 = vadd.f32 %v3726, %v3730
  %v3732 = vadd.f32 %v3727, %v3730
  %v3733 = vadd.f32 %v3728, %v3730
  %v3734 = vadd.f32 %v3729, %v3730
  %v3735 = vxor.u32 %v3731, 2147483648
  %v3736 = vxor.u32 %v3732, 2147483648
  %v3737 = vxor.u32 %v3733, 2147483648
  %v3738 = vxor.u32 %v3734, 2147483648
  %v3739 = vmul.f32 %v3735, 1.442695
  %v3740 = vpow.pop %v3739
  %v3741 = vmul.f32 %v3736, 1.442695
  %v3742 = vpow.pop %v3741
  %v3743 = vmul.f32 %v3737, 1.442695
  %v3744 = vpow.pop %v3743
  %v3745 = vmul.f32 %v3738, 1.442695
  %v3746 = vpow.pop %v3745
  %v3747 = vadd.f32 %v3740, 1.0
  %v3748 = vadd.f32 %v3742, 1.0
  %v3749 = vadd.f32 %v3744, 1.0
  %v3750 = vadd.f32 %v3746, 1.0
  %v3751 = vrcp.pop %v3747
  %v3752 = vmul.f32 1.0, %v3751
  %v3753 = vrcp.pop %v3748
  %v3754 = vmul.f32 1.0, %v3753
  %v3755 = vrcp.pop %v3749
  %v3756 = vmul.f32 1.0, %v3755
  %v3757 = vrcp.pop %v3750
  %v3758 = vmul.f32 1.0, %v3757
  %v3759 = vld [vmem:[%s9] sm:$0xff]
  %v3760 = vld [vmem:[%s9 + $0x8] sm:$0xff]
  %v3761 = vld [vmem:[%s9 + $0x10] sm:$0xff]
  %v3762 = vld [vmem:[%s9 + $0x18] sm:$0xff]
  %v3763 = vld [vmem:[%s9 + $0x20] sm:$0xff]
  %v3764 = vld [vmem:[%s9 + $0x28] sm:$0xff]
  %v3765 = vld [vmem:[%s9 + $0x30] sm:$0xff]
  %v3766 = vld [vmem:[%s9 + $0x38] sm:$0xff]
  %v3768 = vsel %vm3674, %v3752, 0
  %v3771 = vsel %vm3674, %v3754, 0
  %v3774 = vsel %vm3674, %v3756, 0
  %v3777 = vsel %vm3674, %v3758, 0
  %3779 = vmatprep.subr.mxu0 %v3760
  %3780 = vmatpush1.msra.mxu0 %v3759
  %3781 = vmatprep.subr.mxu0 %v3764
  %3782 = vmatpush1.msra.mxu0 %v3763
  %3783 = vmatprep.subr.mxu0 0.0
  %3784 = vmatpush1.msra.mxu0 0.0
  %3785 = vmatprep.subr.mxu0 0.0
  %3786 = vmatpush1.msra.mxu0 0.0
  %3787 = vmatprep.subr.mxu0 0.0
  %3788 = vmatpush1.msra.mxu0 0.0
  %3789 = vmatprep.subr.mxu0 0.0
  %3790 = vmatpush1.msra.mxu0 0.0
  %3791 = vmatprep.subr.mxu0 0.0
  %3792 = vmatpush1.msra.mxu0 0.0
  %3793 = vmatprep.subr.mxu0 0.0
  %3794 = vmatpush1.msra.mxu0 0.0
  %3795 = vmatprep.subr.mxu0 0.0
  %3796 = vmatpush1.msra.mxu0 0.0
  %3797 = vmatprep.subr.mxu0 0.0
  %3798 = vmatpush1.msra.mxu0 0.0
  %3799 = vmatprep.subr.mxu0 0.0
  %3800 = vmatpush1.msra.mxu0 0.0
  %3801 = vmatprep.subr.mxu0 0.0
  %3802 = vmatpush1.msra.mxu0 0.0
  %3803 = vmatprep.subr.mxu0 0.0
  %3804 = vmatpush1.msra.mxu0 0.0
  %3805 = vmatprep.subr.mxu0 0.0
  %3806 = vmatpush1.msra.mxu0 0.0
  %3807 = vmatprep.subr.mxu0 0.0
  %3808 = vmatpush1.msra.mxu0 0.0
  %3809 = vmatprep.subr.mxu0 0.0
  %3810 = vmatpush1.msra.mxu0 0.0
  %3811 = vmatprep.subr.mxu0 0.0
  %3812 = vmatpush1.msra.mxu0 0.0
  %3813 = vmatprep.subr.mxu0 0.0
  %3814 = vmatpush1.msra.mxu0 0.0
  %3815 = vmatprep.subr.mxu0 0.0
  %3816 = vmatpush1.msra.mxu0 0.0
  %3817 = vmatprep.subr.mxu0 0.0
  %3818 = vmatpush1.msra.mxu0 0.0
  %3819 = vmatprep.subr.mxu0 0.0
  %3820 = vmatpush1.msra.mxu0 0.0
  %3821 = vmatprep.subr.mxu0 0.0
  %3822 = vmatpush1.msra.mxu0 0.0
  %3823 = vmatprep.subr.mxu0 0.0
  %3824 = vmatpush1.msra.mxu0 0.0
  %3825 = vmatprep.subr.mxu0 0.0
  %3826 = vmatpush1.msra.mxu0 0.0
  %3827 = vmatprep.subr.mxu0 0.0
  %3828 = vmatpush1.msra.mxu0 0.0
  %3829 = vmatprep.subr.mxu0 0.0
  %3830 = vmatpush1.msra.mxu0 0.0
  %3831 = vmatprep.subr.mxu0 0.0
  %3832 = vmatpush1.msra.mxu0 0.0
  %3833 = vmatprep.subr.mxu0 0.0
  %3834 = vmatpush1.msra.mxu0 0.0
  %3835 = vmatprep.subr.mxu0 0.0
  %3836 = vmatpush1.msra.mxu0 0.0
  %3837 = vmatprep.subr.mxu0 0.0
  %3838 = vmatpush1.msra.mxu0 0.0
  %3839 = vmatprep.subr.mxu0 0.0
  %3840 = vmatpush1.msra.mxu0 0.0
  %3841 = vmatprep.subr.mxu0 0.0
  %3842 = vmatpush1.msra.mxu0 0.0
  %3843 = vmatprep.mubr.f32.mxu0 0.0
  %3844 = vmatmul.mubr.f32.gmra.mrb[0].mxu0 %v3768
  %v3845 = vpop.f32.mrb[0].mxu0
  %v3846 = vadd.f32 0.0, %v3845
  %v3847 = vpop.f32.mrb[0].mxu0
  %v3848 = vadd.f32 0.0, %v3847
  %3849 = vmatprep.mubr.f32.mxu0 0.0
  %3850 = vmatmul.mubr.f32.gmra.mrb[0].mxu0 %v3771
  %v3851 = vpop.f32.mrb[0].mxu0
  %v3852 = vadd.f32 0.0, %v3851
  %v3853 = vpop.f32.mrb[0].mxu0
  %v3854 = vadd.f32 0.0, %v3853
  %3855 = vmatprep.mubr.f32.mxu0 0.0
  %3856 = vmatmul.mubr.f32.gmra.mrb[0].mxu0 %v3774
  %v3857 = vpop.f32.mrb[0].mxu0
  %v3858 = vadd.f32 0.0, %v3857
  %v3859 = vpop.f32.mrb[0].mxu0
  %v3860 = vadd.f32 0.0, %v3859
  %3861 = vmatprep.mubr.f32.mxu0 0.0
  %3862 = vmatmul.mubr.f32.gmra.mrb[0].mxu0 %v3777
  %v3863 = vpop.f32.mrb[0].mxu0
  %v3864 = vadd.f32 0.0, %v3863
  %v3865 = vpop.f32.mrb[0].mxu0
  %v3866 = vadd.f32 0.0, %v3865
  %3867 = vdwg.mxu0
  %3868 = vmatprep.subr.mxu0 %v3762
  %3869 = vmatpush1.msra.mxu0 %v3761
  %3870 = vmatprep.subr.mxu0 %v3766
  %3871 = vmatpush1.msra.mxu0 %v3765
  %3872 = vmatprep.subr.mxu0 0.0
  %3873 = vmatpush1.msra.mxu0 0.0
  %3874 = vmatprep.subr.mxu0 0.0
  %3875 = vmatpush1.msra.mxu0 0.0
  %3876 = vmatprep.subr.mxu0 0.0
  %3877 = vmatpush1.msra.mxu0 0.0
  %3878 = vmatprep.subr.mxu0 0.0
  %3879 = vmatpush1.msra.mxu0 0.0
  %3880 = vmatprep.subr.mxu0 0.0
  %3881 = vmatpush1.msra.mxu0 0.0
  %3882 = vmatprep.subr.mxu0 0.0
  %3883 = vmatpush1.msra.mxu0 0.0
  %3884 = vmatprep.subr.mxu0 0.0
  %3885 = vmatpush1.msra.mxu0 0.0
  %3886 = vmatprep.subr.mxu0 0.0
  %3887 = vmatpush1.msra.mxu0 0.0
  %3888 = vmatprep.subr.mxu0 0.0
  %3889 = vmatpush1.msra.mxu0 0.0
  %3890 = vmatprep.subr.mxu0 0.0
  %3891 = vmatpush1.msra.mxu0 0.0
  %3892 = vmatprep.subr.mxu0 0.0
  %3893 = vmatpush1.msra.mxu0 0.0
  %3894 = vmatprep.subr.mxu0 0.0
  %3895 = vmatpush1.msra.mxu0 0.0
  %3896 = vmatprep.subr.mxu0 0.0
  %3897 = vmatpush1.msra.mxu0 0.0
  %3898 = vmatprep.subr.mxu0 0.0
  %3899 = vmatpush1.msra.mxu0 0.0
  %3900 = vmatprep.subr.mxu0 0.0
  %3901 = vmatpush1.msra.mxu0 0.0
  %3902 = vmatprep.subr.mxu0 0.0
  %3903 = vmatpush1.msra.mxu0 0.0
  %3904 = vmatprep.subr.mxu0 0.0
  %3905 = vmatpush1.msra.mxu0 0.0
  %3906 = vmatprep.subr.mxu0 0.0
  %3907 = vmatpush1.msra.mxu0 0.0
  %3908 = vmatprep.subr.mxu0 0.0
  %3909 = vmatpush1.msra.mxu0 0.0
  %3910 = vmatprep.subr.mxu0 0.0
  %3911 = vmatpush1.msra.mxu0 0.0
  %3912 = vmatprep.subr.mxu0 0.0
  %3913 = vmatpush1.msra.mxu0 0.0
  %3914 = vmatprep.subr.mxu0 0.0
  %3915 = vmatpush1.msra.mxu0 0.0
  %3916 = vmatprep.subr.mxu0 0.0
  %3917 = vmatpush1.msra.mxu0 0.0
  %3918 = vmatprep.subr.mxu0 0.0
  %3919 = vmatpush1.msra.mxu0 0.0
  %3920 = vmatprep.subr.mxu0 0.0
  %3921 = vmatpush1.msra.mxu0 0.0
  %3922 = vmatprep.subr.mxu0 0.0
  %3923 = vmatpush1.msra.mxu0 0.0
  %3924 = vmatprep.subr.mxu0 0.0
  %3925 = vmatpush1.msra.mxu0 0.0
  %3926 = vmatprep.subr.mxu0 0.0
  %3927 = vmatpush1.msra.mxu0 0.0
  %3928 = vmatprep.subr.mxu0 0.0
  %3929 = vmatpush1.msra.mxu0 0.0
  %3930 = vmatprep.subr.mxu0 0.0
  %3931 = vmatpush1.msra.mxu0 0.0
  %3932 = vmatprep.mubr.f32.mxu0 0.0
  %3933 = vmatmul.mubr.f32.gmra.mrb[0].mxu0 %v3768
  %v3934 = vpop.f32.mrb[0].mxu0
  %v3935 = vadd.f32 0.0, %v3934
  %v3936 = vpop.f32.mrb[0].mxu0
  %v3937 = vadd.f32 0.0, %v3936
  %3938 = vmatprep.mubr.f32.mxu0 0.0
  %3939 = vmatmul.mubr.f32.gmra.mrb[0].mxu0 %v3771
  %v3940 = vpop.f32.mrb[0].mxu0
  %v3941 = vadd.f32 0.0, %v3940
  %v3942 = vpop.f32.mrb[0].mxu0
  %v3943 = vadd.f32 0.0, %v3942
  %3944 = vmatprep.mubr.f32.mxu0 0.0
  %3945 = vmatmul.mubr.f32.gmra.mrb[0].mxu0 %v3774
  %v3946 = vpop.f32.mrb[0].mxu0
  %v3947 = vadd.f32 0.0, %v3946
  %v3948 = vpop.f32.mrb[0].mxu0
  %v3949 = vadd.f32 0.0, %v3948
  %3950 = vmatprep.mubr.f32.mxu0 0.0
  %3951 = vmatmul.mubr.f32.gmra.mrb[0].mxu0 %v3777
  %v3952 = vpop.f32.mrb[0].mxu0
  %v3953 = vadd.f32 0.0, %v3952
  %v3954 = vpop.f32.mrb[0].mxu0
  %v3955 = vadd.f32 0.0, %v3954
  %3956 = vdwg.mxu0
  %v3957 = vmul.f32 %v2375, %v3846
  %v3958 = vmul.f32 %v2376, %v3848
  %v3959 = vmul.f32 %v2377, %v3935
  %v3960 = vmul.f32 %v2378, %v3937
  %v3961 = vmul.f32 %v2379, %v3852
  %v3962 = vmul.f32 %v2380, %v3854
  %v3963 = vmul.f32 %v2381, %v3941
  %v3964 = vmul.f32 %v2382, %v3943
  %v3965 = vmul.f32 %v2383, %v3858
  %v3966 = vmul.f32 %v2384, %v3860
  %v3967 = vmul.f32 %v2385, %v3947
  %v3968 = vmul.f32 %v2386, %v3949
  %v3969 = vmul.f32 %v2387, %v3864
  %v3970 = vmul.f32 %v2388, %v3866
  %v3971 = vmul.f32 %v2389, %v3953
  %v3972 = vmul.f32 %v2390, %v3955
  %3973 = vst [vmem:[%s14] sm:$0xff] %v3957
  %3974 = vst [vmem:[%s14 + $0x8] sm:$0xff] %v3958
  %3975 = vst [vmem:[%s14 + $0x10] sm:$0xff] %v3959
  %3976 = vst [vmem:[%s14 + $0x18] sm:$0xff] %v3960
  %3977 = vst [vmem:[%s14 + $0x20] sm:$0xff] %v3961
  %3978 = vst [vmem:[%s14 + $0x28] sm:$0xff] %v3962
  %3979 = vst [vmem:[%s14 + $0x30] sm:$0xff] %v3963
  %3980 = vst [vmem:[%s14 + $0x38] sm:$0xff] %v3964
  %3981 = vst [vmem:[%s14 + $0x40] sm:$0xff] %v3965
  %3982 = vst [vmem:[%s14 + $0x48] sm:$0xff] %v3966
  %3983 = vst [vmem:[%s14 + $0x50] sm:$0xff] %v3967
  %3984 = vst [vmem:[%s14 + $0x58] sm:$0xff] %v3968
  %3985 = vst [vmem:[%s14 + $0x60] sm:$0xff] %v3969
  %3986 = vst [vmem:[%s14 + $0x68] sm:$0xff] %v3970
  %3987 = vst [vmem:[%s14 + $0x70] sm:$0xff] %v3971
  %3988 = vst [vmem:[%s14 + $0x78] sm:$0xff] %v3972
  // Predicated region
  $region58: #{conv_block_with_se_atten.1} parent=0 // pred_check
    _
  $region59: #{conv_block_with_se_atten.1} parent=0 // pred_check_branch
    %3990 = sbr.rel (0) target = $region61
  $region60: #{conv_block_with_se_atten.1} parent=0 // pred_region
    _
  $region61: #{conv_block_with_se_atten.1} parent=0 // pred_fallthru
    _
  // Predicated region
  $region62: #{conv_block_with_se_atten.1} parent=0 // pred_check
    _
  $region63: #{conv_block_with_se_atten.1} parent=0 // pred_check_branch
    %3992 = sbr.rel (0) target = $region65
  $region64: #{conv_block_with_se_atten.1} parent=0 // pred_region
    _
  $region65: #{conv_block_with_se_atten.1} parent=0 // pred_fallthru
    _

</llo_original>
